<compile_context>
chip_gen: v7x
topology: tpu7x:2x2x1
jax: 0.10.0
libtpu: 0.0.40
codegen_flags: <defaults>
</compile_context>

<pallas_src>
import functools

import jax
import jax.numpy as jnp
from jax import lax
from jax.experimental import pallas as pl
from jax.experimental.pallas import tpu as pltpu

# ----------------------------- hyperparameters -------------------------------
NUM_TOKENS = 16
WORD_EMB = 8
HIDDEN = 32
NUM_FILTERS = 3
KERNEL_SIZE = 1
STRIDE = 7
IMG_C = 1024        # fixed by the module (conv in_channels=1024)
IMG_HW = 14         # fixed by the module (fc sized for 14x14 feature maps)
H_OUT = (IMG_HW + 2 * 0 - 1 * (KERNEL_SIZE - 1)) // STRIDE   # = 2 (matches real conv output)
N_POS = H_OUT * H_OUT                                        # = 4 conv output positions
B = 2
T = 8

VMEM_SPEC = pl.BlockSpec(memory_space=pltpu.MemorySpace.VMEM)
SMEM_SPEC = pl.BlockSpec(memory_space=pltpu.MemorySpace.SMEM)
ANY_SPEC = pl.BlockSpec(memory_space=pl.ANY)


# -------------------------------- fused kernel --------------------------------
def fused_act_kernel(tokens_ref, lens_ref, img_ref,
                     gx_tab_ref, whh_ref, wcb_ref, bcb_ref,
                     wimg_ref, wfc_h_ref, b_fc_ref,
                     probs_ref, value_ref,
                     xs_scr, dma_sems,
                     *, seq_len, batch, hidden, num_tokens, img_c, taps):
    """Embedding lookup + LSTM + pointwise conv + fc + softmax, all in one kernel.

    tokens_ref: (B, T)        int32 SMEM   padded token ids (padding_value=0)
    lens_ref:   (B,)          int32 SMEM   true sequence lengths
    img_ref:    (B, 14,14,C)  f32   HBM    NHWC image features (producer-side layout)
    gx_tab_ref: (NT, 1, 4H)   f32   VMEM   embedding @ W_ih.T + b_ih + b_hh (folded, one-time)
    whh_ref:    (H, 4H)       bf16  VMEM
    wcb_ref:    (P*C, P*F)    bf16  VMEM   block-diagonal k=1 conv weight
    bcb_ref:    (1, P*F)      f32   VMEM   conv bias tiled per position
    wimg_ref:   (P*F, NT+1)   bf16  VMEM   fc rows for image features, position-major
    wfc_h_ref:  (H, NT+1)     bf16  VMEM   fc rows for the hidden-state features
    b_fc_ref:   (1, NT+1)     f32   VMEM
    outputs:    probs (B, NT) f32, value (B, 1) f32
    xs_scr:     (B, P*C)      f32   VMEM scratch (DMA'd conv taps)
    dma_sems:   (B*P,)        DMA semaphores
    """
    f32, bf16 = jnp.float32, jnp.bfloat16
    Bz, H = batch, hidden
    n_pos = len(taps)

    # ---- (1) kick off the 8 image-tap DMAs; they complete behind the LSTM recurrence ----
    copies = []
    for b in range(Bz):
        for p, (hh, ww) in enumerate(taps):
            cp = pltpu.make_async_copy(
                img_ref.at[b, hh, pl.ds(ww, 1), :],                    # (1, C) contiguous HBM row
                xs_scr.at[pl.ds(b, 1), pl.ds(p * img_c, img_c)],       # (1, C) VMEM slot
                dma_sems.at[b * n_pos + p])
            cp.start()
            copies.append(cp)

    # ---- (2) in-kernel embedding gather: 16 static row lookups into the folded gx table ----
    # (the table already contains x @ W_ih.T + b_ih + b_hh, so no input-projection matmul)
    gx_steps = []
    for t in range(seq_len):
        rows = [gx_tab_ref[tokens_ref[b, t]] for b in range(Bz)]       # each (1, 4H) f32
        gx_steps.append(jnp.concatenate(rows, axis=0))                 # (B, 4H)

    # per-batch length column for the packed-sequence mask (built once from SMEM scalars)
    lens_col = jnp.concatenate(
        [jnp.full((1, 1), lens_ref[b], jnp.int32) for b in range(Bz)], axis=0)   # (B, 1)

    # ---- (3) LSTM recurrence: only h @ W_hh + gate math remains on the serial path ----
    whh = whh_ref[...]                                                 # (H, 4H) bf16
    h = jnp.zeros((Bz, H), f32)
    c = jnp.zeros((Bz, H), f32)
    for t in range(seq_len):
        gates = gx_steps[t] + jnp.dot(h.astype(bf16), whh,
                                      preferred_element_type=f32)      # (B, 4H)
        # 2 EUP passes over the full (B,4H) vreg instead of 5 per-slice passes.
        sig = jax.nn.sigmoid(gates)
        tnh = jnp.tanh(gates)
        i_g = sig[:, 0 * H:1 * H]        # PyTorch gate order: i, f, g, o
        f_g = sig[:, 1 * H:2 * H]
        o_g = sig[:, 3 * H:4 * H]
        g_g = tnh[:, 2 * H:3 * H]
        c_new = f_g * c + i_g * g_g
        h_new = o_g * jnp.tanh(c_new)
        valid = t < lens_col                                           # (B, 1) bool
        h = jnp.where(valid, h_new, h)                                 # NaN-safe select
        c = jnp.where(valid, c_new, c)

    # ---- (4) fc head: hidden-state contribution + bias ----
    out = (jnp.dot(h.astype(bf16), wfc_h_ref[...], preferred_element_type=f32)
           + b_fc_ref[...])                                            # (B, NT+1)

    # ---- (5) k=1 strided conv as ONE block-diag channel matmul + ReLU, then ONE fc matmul ----
    for cp in copies:
        cp.wait()
    xs = xs_scr[...].astype(bf16)                                      # (B, P*C)
    conv = jnp.maximum(jnp.dot(xs, wcb_ref[...], preferred_element_type=f32)
                       + bcb_ref[...], 0.0)                            # (B, P*F)
    out = out + jnp.dot(conv.astype(bf16), wimg_ref[...], preferred_element_type=f32)

    # ---- (6) split (logits, value), softmax (reciprocal on the EUP) ----
    logits = out[:, :num_tokens]
    value_ref[...] = out[:, num_tokens:num_tokens + 1]
    mx = jnp.max(logits, axis=-1, keepdims=True)
    e = jnp.exp(logits - mx)
    probs_ref[...] = e * pl.reciprocal(jnp.sum(e, axis=-1, keepdims=True), approx=True)


# ------------------------ one-time parameter preparation -----------------------
def prepare_params(params):
    """Fold / permute / cast every weight once; nothing here runs per act() call."""
    bf16, f32 = jnp.bfloat16, jnp.float32
    # embedding lookup + LSTM input projection folded into one (NT, 1, 4H) table
    gx_table = (params["embedding"] @ params["w_ih"].T
                + params["b_ih"] + params["b_hh"]).astype(f32)[:, None, :]
    whh = params["w_hh"].T.astype(bf16)                                 # (H, 4H)

    # block-diagonal k=1 conv weight: (P*C, P*F), block p = conv weight (C, F)
    wc = params["conv_w"].reshape(NUM_FILTERS, IMG_C).T                 # (C, F)
    wcb = jnp.kron(jnp.eye(N_POS, dtype=wc.dtype), wc).astype(bf16)     # (P*C, P*F)
    bcb = jnp.tile(params["conv_b"], N_POS)[None, :].astype(f32)        # (1, P*F)

    # fc weight split; image rows permuted to position-major (row p*F+f <- PyTorch row f*P+p)
    wfc = params["fc_w"].T                                              # (F*P + H, NT+1)
    wimg = wfc[:NUM_FILTERS * N_POS, :].reshape(NUM_FILTERS, N_POS, NUM_TOKENS + 1)
    wimg = jnp.transpose(wimg, (1, 0, 2)).reshape(N_POS * NUM_FILTERS,
                                                  NUM_TOKENS + 1).astype(bf16)
    wfc_h = wfc[NUM_FILTERS * N_POS:, :].astype(bf16)                   # (H, NT+1)
    b_fc = params["fc_b"][None, :].astype(f32)                          # (1, NT+1)
    return dict(gx_table=gx_table, whh=whh, wcb=wcb, bcb=bcb,
                wimg=wimg, wfc_h=wfc_h, b_fc=b_fc)


# -------------------------------- wrapper -------------------------------------
def policy_lstm_batch_act(prepared, tokens, lens, img_nhwc):
    """Per-call path: exactly one pallas_call, no per-call weight/data preprocessing."""
    Bsz, Tlen = tokens.shape
    taps = tuple((oh * STRIDE, ow * STRIDE) for oh in range(H_OUT) for ow in range(H_OUT))
    kernel = functools.partial(
        fused_act_kernel, seq_len=Tlen, batch=Bsz, hidden=HIDDEN,
        num_tokens=NUM_TOKENS, img_c=IMG_C, taps=taps)

    probs, value = pl.pallas_call(
        kernel,
        out_shape=(jax.ShapeDtypeStruct((Bsz, NUM_TOKENS), jnp.float32),
                   jax.ShapeDtypeStruct((Bsz, 1), jnp.float32)),
        in_specs=[
            SMEM_SPEC,          # tokens (B, T) int32
            SMEM_SPEC,          # lens   (B,)   int32
            ANY_SPEC,           # img NHWC in HBM; only 8 tap rows are DMA'd in-kernel
            VMEM_SPEC, VMEM_SPEC, VMEM_SPEC, VMEM_SPEC, VMEM_SPEC, VMEM_SPEC, VMEM_SPEC,
        ],
        out_specs=(VMEM_SPEC, VMEM_SPEC),
        scratch_shapes=[pltpu.VMEM((Bsz, N_POS * IMG_C), jnp.float32),
                        pltpu.SemaphoreType.DMA((Bsz * N_POS,))],
    )(tokens, lens, img_nhwc,
      prepared["gx_table"], prepared["whh"], prepared["wcb"], prepared["bcb"],
      prepared["wimg"], prepared["wfc_h"], prepared["b_fc"])

    # Categorical(probs) just wraps the (already normalized) probs; return probs + value.
    # TODO(synk): torch.distributions.Categorical object itself has no Pallas equivalent.
    return probs, value[:, 0]


# ------------------------------ pure-JAX reference ----------------------------
def reference_act(params, tokens, lens, img):
    emb = params["embedding"][tokens]                      # (B, T, E)
    h = jnp.zeros((tokens.shape[0], HIDDEN), jnp.float32)
    c = jnp.zeros_like(h)
    for t in range(tokens.shape[1]):
        gates = (emb[:, t, :] @ params["w_ih"].T + h @ params["w_hh"].T
                 + params["b_ih"] + params["b_hh"])
        i_g = jax.nn.sigmoid(gates[:, :HIDDEN])
        f_g = jax.nn.sigmoid(gates[:, HIDDEN:2 * HIDDEN])
        g_g = jnp.tanh(gates[:, 2 * HIDDEN:3 * HIDDEN])
        o_g = jax.nn.sigmoid(gates[:, 3 * HIDDEN:])
        c_new = f_g * c + i_g * g_g
        h_new = o_g * jnp.tanh(c_new)
        valid = (t < lens)[:, None]
        h = jnp.where(valid, h_new, h)
        c = jnp.where(valid, c_new, c)
    conv = lax.conv_general_dilated(img, params["conv_w"], (STRIDE, STRIDE), "VALID",
                                    dimension_numbers=("NCHW", "OIHW", "NCHW"))
    conv = jax.nn.relu(conv + params["conv_b"][None, :, None, None])
    img_flat = conv.reshape(img.shape[0], -1)
    feat = jnp.concatenate([img_flat, h], axis=1)
    out = feat @ params["fc_w"].T + params["fc_b"]
    return jax.nn.softmax(out[:, :NUM_TOKENS], axis=1), out[:, NUM_TOKENS]


# ---------------------------------- main ---------------------------------------
if __name__ == "__main__":
    key = jax.random.PRNGKey(0)
    keys = jax.random.split(key, 12)

    fc_in = NUM_FILTERS * H_OUT ** 2 + HIDDEN
    params = {
        "embedding": 0.1 * jax.random.normal(keys[0], (NUM_TOKENS, WORD_EMB), jnp.float32),
        "w_ih": 0.1 * jax.random.normal(keys[1], (4 * HIDDEN, WORD_EMB), jnp.float32),
        "w_hh": 0.1 * jax.random.normal(keys[2], (4 * HIDDEN, HIDDEN), jnp.float32),
        "b_ih": 0.1 * jax.random.normal(keys[3], (4 * HIDDEN,), jnp.float32),
        "b_hh": 0.1 * jax.random.normal(keys[4], (4 * HIDDEN,), jnp.float32),
        "conv_w": 0.05 * jax.random.normal(keys[5], (NUM_FILTERS, IMG_C, KERNEL_SIZE, KERNEL_SIZE),
                                           jnp.float32),
        "conv_b": 0.1 * jax.random.normal(keys[6], (NUM_FILTERS,), jnp.float32),
        "fc_w": 0.1 * jax.random.normal(keys[7], (NUM_TOKENS + 1, fc_in), jnp.float32),
        "fc_b": 0.1 * jax.random.normal(keys[8], (NUM_TOKENS + 1,), jnp.float32),
    }

    # One-time weight preparation (hoisted out of the per-call act path per the perf review).
    prepared = jax.block_until_ready(prepare_params(params))

    # synthetic batch of states: padded token sequences + img features
    lens = jnp.array([T, 5], dtype=jnp.int32)                            # true lengths per state
    tokens = jax.random.randint(keys[9], (B, T), 0, NUM_TOKENS, jnp.int32)
    pad_mask = jnp.arange(T)[None, :] < lens[:, None]
    tokens = jnp.where(pad_mask, tokens, 0)                              # pad_sequence(padding=0)
    img = jax.random.normal(keys[10], (B, IMG_C, IMG_HW, IMG_HW), jnp.float32)
    # Producer-side storage is NHWC (perf review): the 4 conv taps become contiguous rows
    # that the kernel DMAs directly from HBM. (Transpose here is one-time / upstream.)
    img_nhwc = jax.block_until_ready(jnp.transpose(img, (0, 2, 3, 1)))   # (B, 14, 14, C)

    probs, value = policy_lstm_batch_act(prepared, tokens, lens, img_nhwc)
    probs, value = jax.block_until_ready((probs, value))

    probs_ref, value_ref = reference_act(params, tokens, lens, img)
    assert probs.shape == (B, NUM_TOKENS) and value.shape == (B,)
    # bf16-operand / f32-accumulate matmuls vs the f32 reference: keep tolerances accordingly.
    assert jnp.allclose(probs, probs_ref, atol=5e-3), "probs mismatch"
    assert jnp.allclose(value, value_ref, atol=2e-2), "value mismatch"

    print("KERNEL_OK")
</pallas_src>

<mosaic_0001>
module attributes {stable_mosaic.version = 11 : i64} {
  func.func @fused_act_kernel(%arg0: memref<2x8xi32, #tpu.memory_space<smem>>, %arg1: memref<2xi32, #tpu.memory_space<smem>>, %arg2: memref<2x14x14x1024xf32, #tpu.memory_space<any>>, %arg3: memref<16x1x128xf32, #tpu.memory_space<vmem>>, %arg4: memref<32x128xbf16, #tpu.memory_space<vmem>>, %arg5: memref<4096x12xbf16, #tpu.memory_space<vmem>>, %arg6: memref<1x12xf32, #tpu.memory_space<vmem>>, %arg7: memref<12x17xbf16, #tpu.memory_space<vmem>>, %arg8: memref<32x17xbf16, #tpu.memory_space<vmem>>, %arg9: memref<1x17xf32, #tpu.memory_space<vmem>>, %arg10: memref<2x16xf32, #tpu.memory_space<vmem>>, %arg11: memref<2x1xf32, #tpu.memory_space<vmem>>, %arg12: memref<2x4096xf32, #tpu.memory_space<vmem>>, %arg13: memref<8x!tpu.dma_semaphore, #tpu.memory_space<semaphore_mem>>) attributes {dimension_semantics = [], scalar_prefetch = 0 : i64, scratch_operands = 2 : i64, tpu.core_type = #tpu.core_type<tc>} {
    %c0_i32 = arith.constant 0 : i32
    %c0_i32_0 = arith.constant 0 : i32
    %c0_i32_1 = arith.constant 0 : i32
    %c0_i32_2 = arith.constant 0 : i32
    %c0_i32_3 = arith.constant 0 : i32
    %0 = tpu.memref_slice %arg2[%c0_i32, %c0_i32_0, %c0_i32_2, %c0_i32_3] : memref<2x14x14x1024xf32, #tpu.memory_space<any>> -> memref<1x1x1x1024xf32, #tpu.memory_space<any>>
    %1 = tpu.memref_squeeze %0 : memref<1x1x1x1024xf32, #tpu.memory_space<any>> -> memref<1x1024xf32, #tpu.memory_space<any>>
    %c0_i32_4 = arith.constant 0 : i32
    %c0_i32_5 = arith.constant 0 : i32
    %2 = tpu.memref_slice %arg12[%c0_i32_4, %c0_i32_5] : memref<2x4096xf32, #tpu.memory_space<vmem>> -> memref<1x1024xf32, #tpu.memory_space<vmem>>
    %3 = tpu.memref_slice %arg13[%c0_i32_1] : memref<8x!tpu.dma_semaphore, #tpu.memory_space<semaphore_mem>> -> memref<1x!tpu.dma_semaphore, #tpu.memory_space<semaphore_mem>>
    %4 = tpu.memref_squeeze %3 : memref<1x!tpu.dma_semaphore, #tpu.memory_space<semaphore_mem>> -> memref<!tpu.dma_semaphore, #tpu.memory_space<semaphore_mem>>
    tpu.enqueue_dma source(%1 : memref<1x1024xf32, #tpu.memory_space<any>>) target(%2 : memref<1x1024xf32, #tpu.memory_space<vmem>>) target_semaphore(%4 : memref<!tpu.dma_semaphore, #tpu.memory_space<semaphore_mem>>)
    %c0_i32_6 = arith.constant 0 : i32
    %c0_i32_7 = arith.constant 0 : i32
    %c1_i32 = arith.constant 1 : i32
    %c7_i32 = arith.constant 7 : i32
    %c0_i32_8 = arith.constant 0 : i32
    %5 = tpu.memref_slice %arg2[%c0_i32_6, %c0_i32_7, %c7_i32, %c0_i32_8] : memref<2x14x14x1024xf32, #tpu.memory_space<any>> -> memref<1x1x1x1024xf32, #tpu.memory_space<any>>
    %6 = tpu.memref_squeeze %5 : memref<1x1x1x1024xf32, #tpu.memory_space<any>> -> memref<1x1024xf32, #tpu.memory_space<any>>
    %c0_i32_9 = arith.constant 0 : i32
    %c1024_i32 = arith.constant 1024 : i32
    %7 = tpu.memref_slice %arg12[%c0_i32_9, %c1024_i32] : memref<2x4096xf32, #tpu.memory_space<vmem>> -> memref<1x1024xf32, #tpu.memory_space<vmem>>
    %8 = tpu.memref_slice %arg13[%c1_i32] : memref<8x!tpu.dma_semaphore, #tpu.memory_space<semaphore_mem>> -> memref<1x!tpu.dma_semaphore, #tpu.memory_space<semaphore_mem>>
    %9 = tpu.memref_squeeze %8 : memref<1x!tpu.dma_semaphore, #tpu.memory_space<semaphore_mem>> -> memref<!tpu.dma_semaphore, #tpu.memory_space<semaphore_mem>>
    tpu.enqueue_dma source(%6 : memref<1x1024xf32, #tpu.memory_space<any>>) target(%7 : memref<1x1024xf32, #tpu.memory_space<vmem>>) target_semaphore(%9 : memref<!tpu.dma_semaphore, #tpu.memory_space<semaphore_mem>>)
    %c0_i32_10 = arith.constant 0 : i32
    %c7_i32_11 = arith.constant 7 : i32
    %c2_i32 = arith.constant 2 : i32
    %c0_i32_12 = arith.constant 0 : i32
    %c0_i32_13 = arith.constant 0 : i32
    %10 = tpu.memref_slice %arg2[%c0_i32_10, %c7_i32_11, %c0_i32_12, %c0_i32_13] : memref<2x14x14x1024xf32, #tpu.memory_space<any>> -> memref<1x1x1x1024xf32, #tpu.memory_space<any>>
    %11 = tpu.memref_squeeze %10 : memref<1x1x1x1024xf32, #tpu.memory_space<any>> -> memref<1x1024xf32, #tpu.memory_space<any>>
    %c0_i32_14 = arith.constant 0 : i32
    %c2048_i32 = arith.constant 2048 : i32
    %12 = tpu.memref_slice %arg12[%c0_i32_14, %c2048_i32] : memref<2x4096xf32, #tpu.memory_space<vmem>> -> memref<1x1024xf32, #tpu.memory_space<vmem>>
    %13 = tpu.memref_slice %arg13[%c2_i32] : memref<8x!tpu.dma_semaphore, #tpu.memory_space<semaphore_mem>> -> memref<1x!tpu.dma_semaphore, #tpu.memory_space<semaphore_mem>>
    %14 = tpu.memref_squeeze %13 : memref<1x!tpu.dma_semaphore, #tpu.memory_space<semaphore_mem>> -> memref<!tpu.dma_semaphore, #tpu.memory_space<semaphore_mem>>
    tpu.enqueue_dma source(%11 : memref<1x1024xf32, #tpu.memory_space<any>>) target(%12 : memref<1x1024xf32, #tpu.memory_space<vmem>>) target_semaphore(%14 : memref<!tpu.dma_semaphore, #tpu.memory_space<semaphore_mem>>)
    %c0_i32_15 = arith.constant 0 : i32
    %c7_i32_16 = arith.constant 7 : i32
    %c3_i32 = arith.constant 3 : i32
    %c7_i32_17 = arith.constant 7 : i32
    %c0_i32_18 = arith.constant 0 : i32
    %15 = tpu.memref_slice %arg2[%c0_i32_15, %c7_i32_16, %c7_i32_17, %c0_i32_18] : memref<2x14x14x1024xf32, #tpu.memory_space<any>> -> memref<1x1x1x1024xf32, #tpu.memory_space<any>>
    %16 = tpu.memref_squeeze %15 : memref<1x1x1x1024xf32, #tpu.memory_space<any>> -> memref<1x1024xf32, #tpu.memory_space<any>>
    %c0_i32_19 = arith.constant 0 : i32
    %c3072_i32 = arith.constant 3072 : i32
    %17 = tpu.memref_slice %arg12[%c0_i32_19, %c3072_i32] : memref<2x4096xf32, #tpu.memory_space<vmem>> -> memref<1x1024xf32, #tpu.memory_space<vmem>>
    %18 = tpu.memref_slice %arg13[%c3_i32] : memref<8x!tpu.dma_semaphore, #tpu.memory_space<semaphore_mem>> -> memref<1x!tpu.dma_semaphore, #tpu.memory_space<semaphore_mem>>
    %19 = tpu.memref_squeeze %18 : memref<1x!tpu.dma_semaphore, #tpu.memory_space<semaphore_mem>> -> memref<!tpu.dma_semaphore, #tpu.memory_space<semaphore_mem>>
    tpu.enqueue_dma source(%16 : memref<1x1024xf32, #tpu.memory_space<any>>) target(%17 : memref<1x1024xf32, #tpu.memory_space<vmem>>) target_semaphore(%19 : memref<!tpu.dma_semaphore, #tpu.memory_space<semaphore_mem>>)
    %c1_i32_20 = arith.constant 1 : i32
    %c0_i32_21 = arith.constant 0 : i32
    %c4_i32 = arith.constant 4 : i32
    %c0_i32_22 = arith.constant 0 : i32
    %c0_i32_23 = arith.constant 0 : i32
    %20 = tpu.memref_slice %arg2[%c1_i32_20, %c0_i32_21, %c0_i32_22, %c0_i32_23] : memref<2x14x14x1024xf32, #tpu.memory_space<any>> -> memref<1x1x1x1024xf32, #tpu.memory_space<any>>
    %21 = tpu.memref_squeeze %20 : memref<1x1x1x1024xf32, #tpu.memory_space<any>> -> memref<1x1024xf32, #tpu.memory_space<any>>
    %c1_i32_24 = arith.constant 1 : i32
    %c0_i32_25 = arith.constant 0 : i32
    %22 = tpu.memref_slice %arg12[%c1_i32_24, %c0_i32_25] : memref<2x4096xf32, #tpu.memory_space<vmem>> -> memref<1x1024xf32, #tpu.memory_space<vmem>>
    %23 = tpu.memref_slice %arg13[%c4_i32] : memref<8x!tpu.dma_semaphore, #tpu.memory_space<semaphore_mem>> -> memref<1x!tpu.dma_semaphore, #tpu.memory_space<semaphore_mem>>
    %24 = tpu.memref_squeeze %23 : memref<1x!tpu.dma_semaphore, #tpu.memory_space<semaphore_mem>> -> memref<!tpu.dma_semaphore, #tpu.memory_space<semaphore_mem>>
    tpu.enqueue_dma source(%21 : memref<1x1024xf32, #tpu.memory_space<any>>) target(%22 : memref<1x1024xf32, #tpu.memory_space<vmem>>) target_semaphore(%24 : memref<!tpu.dma_semaphore, #tpu.memory_space<semaphore_mem>>)
    %c1_i32_26 = arith.constant 1 : i32
    %c0_i32_27 = arith.constant 0 : i32
    %c5_i32 = arith.constant 5 : i32
    %c7_i32_28 = arith.constant 7 : i32
    %c0_i32_29 = arith.constant 0 : i32
    %25 = tpu.memref_slice %arg2[%c1_i32_26, %c0_i32_27, %c7_i32_28, %c0_i32_29] : memref<2x14x14x1024xf32, #tpu.memory_space<any>> -> memref<1x1x1x1024xf32, #tpu.memory_space<any>>
    %26 = tpu.memref_squeeze %25 : memref<1x1x1x1024xf32, #tpu.memory_space<any>> -> memref<1x1024xf32, #tpu.memory_space<any>>
    %c1_i32_30 = arith.constant 1 : i32
    %c1024_i32_31 = arith.constant 1024 : i32
    %27 = tpu.memref_slice %arg12[%c1_i32_30, %c1024_i32_31] : memref<2x4096xf32, #tpu.memory_space<vmem>> -> memref<1x1024xf32, #tpu.memory_space<vmem>>
    %28 = tpu.memref_slice %arg13[%c5_i32] : memref<8x!tpu.dma_semaphore, #tpu.memory_space<semaphore_mem>> -> memref<1x!tpu.dma_semaphore, #tpu.memory_space<semaphore_mem>>
    %29 = tpu.memref_squeeze %28 : memref<1x!tpu.dma_semaphore, #tpu.memory_space<semaphore_mem>> -> memref<!tpu.dma_semaphore, #tpu.memory_space<semaphore_mem>>
    tpu.enqueue_dma source(%26 : memref<1x1024xf32, #tpu.memory_space<any>>) target(%27 : memref<1x1024xf32, #tpu.memory_space<vmem>>) target_semaphore(%29 : memref<!tpu.dma_semaphore, #tpu.memory_space<semaphore_mem>>)
    %c1_i32_32 = arith.constant 1 : i32
    %c7_i32_33 = arith.constant 7 : i32
    %c6_i32 = arith.constant 6 : i32
    %c0_i32_34 = arith.constant 0 : i32
    %c0_i32_35 = arith.constant 0 : i32
    %30 = tpu.memref_slice %arg2[%c1_i32_32, %c7_i32_33, %c0_i32_34, %c0_i32_35] : memref<2x14x14x1024xf32, #tpu.memory_space<any>> -> memref<1x1x1x1024xf32, #tpu.memory_space<any>>
    %31 = tpu.memref_squeeze %30 : memref<1x1x1x1024xf32, #tpu.memory_space<any>> -> memref<1x1024xf32, #tpu.memory_space<any>>
    %c1_i32_36 = arith.constant 1 : i32
    %c2048_i32_37 = arith.constant 2048 : i32
    %32 = tpu.memref_slice %arg12[%c1_i32_36, %c2048_i32_37] : memref<2x4096xf32, #tpu.memory_space<vmem>> -> memref<1x1024xf32, #tpu.memory_space<vmem>>
    %33 = tpu.memref_slice %arg13[%c6_i32] : memref<8x!tpu.dma_semaphore, #tpu.memory_space<semaphore_mem>> -> memref<1x!tpu.dma_semaphore, #tpu.memory_space<semaphore_mem>>
    %34 = tpu.memref_squeeze %33 : memref<1x!tpu.dma_semaphore, #tpu.memory_space<semaphore_mem>> -> memref<!tpu.dma_semaphore, #tpu.memory_space<semaphore_mem>>
    tpu.enqueue_dma source(%31 : memref<1x1024xf32, #tpu.memory_space<any>>) target(%32 : memref<1x1024xf32, #tpu.memory_space<vmem>>) target_semaphore(%34 : memref<!tpu.dma_semaphore, #tpu.memory_space<semaphore_mem>>)
    %c1_i32_38 = arith.constant 1 : i32
    %c7_i32_39 = arith.constant 7 : i32
    %c7_i32_40 = arith.constant 7 : i32
    %c7_i32_41 = arith.constant 7 : i32
    %c0_i32_42 = arith.constant 0 : i32
    %35 = tpu.memref_slice %arg2[%c1_i32_38, %c7_i32_39, %c7_i32_41, %c0_i32_42] : memref<2x14x14x1024xf32, #tpu.memory_space<any>> -> memref<1x1x1x1024xf32, #tpu.memory_space<any>>
    %36 = tpu.memref_squeeze %35 : memref<1x1x1x1024xf32, #tpu.memory_space<any>> -> memref<1x1024xf32, #tpu.memory_space<any>>
    %c1_i32_43 = arith.constant 1 : i32
    %c3072_i32_44 = arith.constant 3072 : i32
    %37 = tpu.memref_slice %arg12[%c1_i32_43, %c3072_i32_44] : memref<2x4096xf32, #tpu.memory_space<vmem>> -> memref<1x1024xf32, #tpu.memory_space<vmem>>
    %38 = tpu.memref_slice %arg13[%c7_i32_40] : memref<8x!tpu.dma_semaphore, #tpu.memory_space<semaphore_mem>> -> memref<1x!tpu.dma_semaphore, #tpu.memory_space<semaphore_mem>>
    %39 = tpu.memref_squeeze %38 : memref<1x!tpu.dma_semaphore, #tpu.memory_space<semaphore_mem>> -> memref<!tpu.dma_semaphore, #tpu.memory_space<semaphore_mem>>
    tpu.enqueue_dma source(%36 : memref<1x1024xf32, #tpu.memory_space<any>>) target(%37 : memref<1x1024xf32, #tpu.memory_space<vmem>>) target_semaphore(%39 : memref<!tpu.dma_semaphore, #tpu.memory_space<semaphore_mem>>)
    %c0 = arith.constant 0 : index
    %c0_45 = arith.constant 0 : index
    %40 = memref.load %arg0[%c0, %c0_45] : memref<2x8xi32, #tpu.memory_space<smem>>
    %41 = arith.index_cast %40 : i32 to index
    %c0_46 = arith.constant 0 : index
    %c0_47 = arith.constant 0 : index
    %42 = vector.load %arg3[%41, %c0_46, %c0_47] : memref<16x1x128xf32, #tpu.memory_space<vmem>>, vector<1x1x128xf32>
    %43 = vector.shape_cast %42 : vector<1x1x128xf32> to vector<1x128xf32>
    %c1 = arith.constant 1 : index
    %c0_48 = arith.constant 0 : index
    %44 = memref.load %arg0[%c1, %c0_48] : memref<2x8xi32, #tpu.memory_space<smem>>
    %45 = arith.index_cast %44 : i32 to index
    %c0_49 = arith.constant 0 : index
    %c0_50 = arith.constant 0 : index
    %46 = vector.load %arg3[%45, %c0_49, %c0_50] : memref<16x1x128xf32, #tpu.memory_space<vmem>>, vector<1x1x128xf32>
    %47 = vector.shape_cast %46 : vector<1x1x128xf32> to vector<1x128xf32>
    %48 = tpu.concatenate %43, %47 in 0 : vector<1x128xf32>, vector<1x128xf32> -> vector<2x128xf32>
    %c0_51 = arith.constant 0 : index
    %c1_52 = arith.constant 1 : index
    %49 = memref.load %arg0[%c0_51, %c1_52] : memref<2x8xi32, #tpu.memory_space<smem>>
    %50 = arith.index_cast %49 : i32 to index
    %c0_53 = arith.constant 0 : index
    %c0_54 = arith.constant 0 : index
    %51 = vector.load %arg3[%50, %c0_53, %c0_54] : memref<16x1x128xf32, #tpu.memory_space<vmem>>, vector<1x1x128xf32>
    %52 = vector.shape_cast %51 : vector<1x1x128xf32> to vector<1x128xf32>
    %c1_55 = arith.constant 1 : index
    %c1_56 = arith.constant 1 : index
    %53 = memref.load %arg0[%c1_55, %c1_56] : memref<2x8xi32, #tpu.memory_space<smem>>
    %54 = arith.index_cast %53 : i32 to index
    %c0_57 = arith.constant 0 : index
    %c0_58 = arith.constant 0 : index
    %55 = vector.load %arg3[%54, %c0_57, %c0_58] : memref<16x1x128xf32, #tpu.memory_space<vmem>>, vector<1x1x128xf32>
    %56 = vector.shape_cast %55 : vector<1x1x128xf32> to vector<1x128xf32>
    %57 = tpu.concatenate %52, %56 in 0 : vector<1x128xf32>, vector<1x128xf32> -> vector<2x128xf32>
    %c0_59 = arith.constant 0 : index
    %c2 = arith.constant 2 : index
    %58 = memref.load %arg0[%c0_59, %c2] : memref<2x8xi32, #tpu.memory_space<smem>>
    %59 = arith.index_cast %58 : i32 to index
    %c0_60 = arith.constant 0 : index
    %c0_61 = arith.constant 0 : index
    %60 = vector.load %arg3[%59, %c0_60, %c0_61] : memref<16x1x128xf32, #tpu.memory_space<vmem>>, vector<1x1x128xf32>
    %61 = vector.shape_cast %60 : vector<1x1x128xf32> to vector<1x128xf32>
    %c1_62 = arith.constant 1 : index
    %c2_63 = arith.constant 2 : index
    %62 = memref.load %arg0[%c1_62, %c2_63] : memref<2x8xi32, #tpu.memory_space<smem>>
    %63 = arith.index_cast %62 : i32 to index
    %c0_64 = arith.constant 0 : index
    %c0_65 = arith.constant 0 : index
    %64 = vector.load %arg3[%63, %c0_64, %c0_65] : memref<16x1x128xf32, #tpu.memory_space<vmem>>, vector<1x1x128xf32>
    %65 = vector.shape_cast %64 : vector<1x1x128xf32> to vector<1x128xf32>
    %66 = tpu.concatenate %61, %65 in 0 : vector<1x128xf32>, vector<1x128xf32> -> vector<2x128xf32>
    %c0_66 = arith.constant 0 : index
    %c3 = arith.constant 3 : index
    %67 = memref.load %arg0[%c0_66, %c3] : memref<2x8xi32, #tpu.memory_space<smem>>
    %68 = arith.index_cast %67 : i32 to index
    %c0_67 = arith.constant 0 : index
    %c0_68 = arith.constant 0 : index
    %69 = vector.load %arg3[%68, %c0_67, %c0_68] : memref<16x1x128xf32, #tpu.memory_space<vmem>>, vector<1x1x128xf32>
    %70 = vector.shape_cast %69 : vector<1x1x128xf32> to vector<1x128xf32>
    %c1_69 = arith.constant 1 : index
    %c3_70 = arith.constant 3 : index
    %71 = memref.load %arg0[%c1_69, %c3_70] : memref<2x8xi32, #tpu.memory_space<smem>>
    %72 = arith.index_cast %71 : i32 to index
    %c0_71 = arith.constant 0 : index
    %c0_72 = arith.constant 0 : index
    %73 = vector.load %arg3[%72, %c0_71, %c0_72] : memref<16x1x128xf32, #tpu.memory_space<vmem>>, vector<1x1x128xf32>
    %74 = vector.shape_cast %73 : vector<1x1x128xf32> to vector<1x128xf32>
    %75 = tpu.concatenate %70, %74 in 0 : vector<1x128xf32>, vector<1x128xf32> -> vector<2x128xf32>
    %c0_73 = arith.constant 0 : index
    %c4 = arith.constant 4 : index
    %76 = memref.load %arg0[%c0_73, %c4] : memref<2x8xi32, #tpu.memory_space<smem>>
    %77 = arith.index_cast %76 : i32 to index
    %c0_74 = arith.constant 0 : index
    %c0_75 = arith.constant 0 : index
    %78 = vector.load %arg3[%77, %c0_74, %c0_75] : memref<16x1x128xf32, #tpu.memory_space<vmem>>, vector<1x1x128xf32>
    %79 = vector.shape_cast %78 : vector<1x1x128xf32> to vector<1x128xf32>
    %c1_76 = arith.constant 1 : index
    %c4_77 = arith.constant 4 : index
    %80 = memref.load %arg0[%c1_76, %c4_77] : memref<2x8xi32, #tpu.memory_space<smem>>
    %81 = arith.index_cast %80 : i32 to index
    %c0_78 = arith.constant 0 : index
    %c0_79 = arith.constant 0 : index
    %82 = vector.load %arg3[%81, %c0_78, %c0_79] : memref<16x1x128xf32, #tpu.memory_space<vmem>>, vector<1x1x128xf32>
    %83 = vector.shape_cast %82 : vector<1x1x128xf32> to vector<1x128xf32>
    %84 = tpu.concatenate %79, %83 in 0 : vector<1x128xf32>, vector<1x128xf32> -> vector<2x128xf32>
    %c0_80 = arith.constant 0 : index
    %c5 = arith.constant 5 : index
    %85 = memref.load %arg0[%c0_80, %c5] : memref<2x8xi32, #tpu.memory_space<smem>>
    %86 = arith.index_cast %85 : i32 to index
    %c0_81 = arith.constant 0 : index
    %c0_82 = arith.constant 0 : index
    %87 = vector.load %arg3[%86, %c0_81, %c0_82] : memref<16x1x128xf32, #tpu.memory_space<vmem>>, vector<1x1x128xf32>
    %88 = vector.shape_cast %87 : vector<1x1x128xf32> to vector<1x128xf32>
    %c1_83 = arith.constant 1 : index
    %c5_84 = arith.constant 5 : index
    %89 = memref.load %arg0[%c1_83, %c5_84] : memref<2x8xi32, #tpu.memory_space<smem>>
    %90 = arith.index_cast %89 : i32 to index
    %c0_85 = arith.constant 0 : index
    %c0_86 = arith.constant 0 : index
    %91 = vector.load %arg3[%90, %c0_85, %c0_86] : memref<16x1x128xf32, #tpu.memory_space<vmem>>, vector<1x1x128xf32>
    %92 = vector.shape_cast %91 : vector<1x1x128xf32> to vector<1x128xf32>
    %93 = tpu.concatenate %88, %92 in 0 : vector<1x128xf32>, vector<1x128xf32> -> vector<2x128xf32>
    %c0_87 = arith.constant 0 : index
    %c6 = arith.constant 6 : index
    %94 = memref.load %arg0[%c0_87, %c6] : memref<2x8xi32, #tpu.memory_space<smem>>
    %95 = arith.index_cast %94 : i32 to index
    %c0_88 = arith.constant 0 : index
    %c0_89 = arith.constant 0 : index
    %96 = vector.load %arg3[%95, %c0_88, %c0_89] : memref<16x1x128xf32, #tpu.memory_space<vmem>>, vector<1x1x128xf32>
    %97 = vector.shape_cast %96 : vector<1x1x128xf32> to vector<1x128xf32>
    %c1_90 = arith.constant 1 : index
    %c6_91 = arith.constant 6 : index
    %98 = memref.load %arg0[%c1_90, %c6_91] : memref<2x8xi32, #tpu.memory_space<smem>>
    %99 = arith.index_cast %98 : i32 to index
    %c0_92 = arith.constant 0 : index
    %c0_93 = arith.constant 0 : index
    %100 = vector.load %arg3[%99, %c0_92, %c0_93] : memref<16x1x128xf32, #tpu.memory_space<vmem>>, vector<1x1x128xf32>
    %101 = vector.shape_cast %100 : vector<1x1x128xf32> to vector<1x128xf32>
    %102 = tpu.concatenate %97, %101 in 0 : vector<1x128xf32>, vector<1x128xf32> -> vector<2x128xf32>
    %c0_94 = arith.constant 0 : index
    %c7 = arith.constant 7 : index
    %103 = memref.load %arg0[%c0_94, %c7] : memref<2x8xi32, #tpu.memory_space<smem>>
    %104 = arith.index_cast %103 : i32 to index
    %c0_95 = arith.constant 0 : index
    %c0_96 = arith.constant 0 : index
    %105 = vector.load %arg3[%104, %c0_95, %c0_96] : memref<16x1x128xf32, #tpu.memory_space<vmem>>, vector<1x1x128xf32>
    %106 = vector.shape_cast %105 : vector<1x1x128xf32> to vector<1x128xf32>
    %c1_97 = arith.constant 1 : index
    %c7_98 = arith.constant 7 : index
    %107 = memref.load %arg0[%c1_97, %c7_98] : memref<2x8xi32, #tpu.memory_space<smem>>
    %108 = arith.index_cast %107 : i32 to index
    %c0_99 = arith.constant 0 : index
    %c0_100 = arith.constant 0 : index
    %109 = vector.load %arg3[%108, %c0_99, %c0_100] : memref<16x1x128xf32, #tpu.memory_space<vmem>>, vector<1x1x128xf32>
    %110 = vector.shape_cast %109 : vector<1x1x128xf32> to vector<1x128xf32>
    %111 = tpu.concatenate %106, %110 in 0 : vector<1x128xf32>, vector<1x128xf32> -> vector<2x128xf32>
    %c0_101 = arith.constant 0 : index
    %112 = memref.load %arg1[%c0_101] : memref<2xi32, #tpu.memory_space<smem>>
    %113 = vector.broadcast %112 : i32 to vector<1x1xi32>
    %c1_102 = arith.constant 1 : index
    %114 = memref.load %arg1[%c1_102] : memref<2xi32, #tpu.memory_space<smem>>
    %115 = vector.broadcast %114 : i32 to vector<1x1xi32>
    %116 = tpu.concatenate %113, %115 in 0 : vector<1x1xi32>, vector<1x1xi32> -> vector<2x1xi32>
    %c0_103 = arith.constant 0 : index
    %c0_104 = arith.constant 0 : index
    %117 = vector.load %arg4[%c0_103, %c0_104] : memref<32x128xbf16, #tpu.memory_space<vmem>>, vector<32x128xbf16>
    %cst = arith.constant 0.000000e+00 : f32
    %118 = vector.broadcast %cst : f32 to vector<2x32xf32>
    %cst_105 = arith.constant 0.000000e+00 : f32
    %119 = vector.broadcast %cst_105 : f32 to vector<2x32xf32>
    %120 = arith.truncf %118 : vector<2x32xf32> to vector<2x32xbf16>
    %cst_106 = arith.constant dense<0.000000e+00> : vector<2x128xf32>
    %121 = tpu.matmul %120, %117, %cst_106 {dimension_numbers = #tpu.dot_dimension_numbers<[1], [0], [0], [1], [0, 0, 1, 1], [], []>} : vector<2x32xbf16>, vector<32x128xbf16>, vector<2x128xf32> -> vector<2x128xf32>
    %122 = arith.addf %48, %121 : vector<2x128xf32>
    %123 = arith.negf %122 : vector<2x128xf32>
    %124 = math.exp %123 : vector<2x128xf32>
    %cst_107 = arith.constant 1.000000e+00 : f32
    %125 = vector.broadcast %cst_107 : f32 to vector<2x128xf32>
    %126 = arith.addf %125, %124 : vector<2x128xf32>
    %127 = arith.divf %125, %126 : vector<2x128xf32>
    %128 = math.tanh %122 : vector<2x128xf32>
    %129 = vector.extract_strided_slice %127 {offsets = [0, 0], sizes = [2, 32], strides = [1, 1]} : vector<2x128xf32> to vector<2x32xf32>
    %130 = vector.extract_strided_slice %127 {offsets = [0, 32], sizes = [2, 32], strides = [1, 1]} : vector<2x128xf32> to vector<2x32xf32>
    %131 = vector.extract_strided_slice %127 {offsets = [0, 96], sizes = [2, 32], strides = [1, 1]} : vector<2x128xf32> to vector<2x32xf32>
    %132 = vector.extract_strided_slice %128 {offsets = [0, 64], sizes = [2, 32], strides = [1, 1]} : vector<2x128xf32> to vector<2x32xf32>
    %133 = arith.mulf %130, %119 : vector<2x32xf32>
    %134 = arith.mulf %129, %132 : vector<2x32xf32>
    %135 = arith.addf %133, %134 : vector<2x32xf32>
    %136 = math.tanh %135 : vector<2x32xf32>
    %137 = arith.mulf %131, %136 : vector<2x32xf32>
    %c0_i32_108 = arith.constant 0 : i32
    %138 = vector.broadcast %c0_i32_108 : i32 to vector<2x1xi32>
    %139 = arith.cmpi sgt, %116, %138 : vector<2x1xi32>
    %140 = vector.shape_cast %139 : vector<2x1xi1> to vector<2x1xi1>
    %141 = vector.broadcast %140 : vector<2x1xi1> to vector<2x32xi1>
    %142 = arith.select %141, %137, %118 : vector<2x32xi1>, vector<2x32xf32>
    %143 = vector.shape_cast %139 : vector<2x1xi1> to vector<2x1xi1>
    %144 = vector.broadcast %143 : vector<2x1xi1> to vector<2x32xi1>
    %145 = arith.select %144, %135, %119 : vector<2x32xi1>, vector<2x32xf32>
    %146 = arith.truncf %142 : vector<2x32xf32> to vector<2x32xbf16>
    %cst_109 = arith.constant dense<0.000000e+00> : vector<2x128xf32>
    %147 = tpu.matmul %146, %117, %cst_109 {dimension_numbers = #tpu.dot_dimension_numbers<[1], [0], [0], [1], [0, 0, 1, 1], [], []>} : vector<2x32xbf16>, vector<32x128xbf16>, vector<2x128xf32> -> vector<2x128xf32>
    %148 = arith.addf %57, %147 : vector<2x128xf32>
    %149 = arith.negf %148 : vector<2x128xf32>
    %150 = math.exp %149 : vector<2x128xf32>
    %cst_110 = arith.constant 1.000000e+00 : f32
    %151 = vector.broadcast %cst_110 : f32 to vector<2x128xf32>
    %152 = arith.addf %151, %150 : vector<2x128xf32>
    %153 = arith.divf %151, %152 : vector<2x128xf32>
    %154 = math.tanh %148 : vector<2x128xf32>
    %155 = vector.extract_strided_slice %153 {offsets = [0, 0], sizes = [2, 32], strides = [1, 1]} : vector<2x128xf32> to vector<2x32xf32>
    %156 = vector.extract_strided_slice %153 {offsets = [0, 32], sizes = [2, 32], strides = [1, 1]} : vector<2x128xf32> to vector<2x32xf32>
    %157 = vector.extract_strided_slice %153 {offsets = [0, 96], sizes = [2, 32], strides = [1, 1]} : vector<2x128xf32> to vector<2x32xf32>
    %158 = vector.extract_strided_slice %154 {offsets = [0, 64], sizes = [2, 32], strides = [1, 1]} : vector<2x128xf32> to vector<2x32xf32>
    %159 = arith.mulf %156, %145 : vector<2x32xf32>
    %160 = arith.mulf %155, %158 : vector<2x32xf32>
    %161 = arith.addf %159, %160 : vector<2x32xf32>
    %162 = math.tanh %161 : vector<2x32xf32>
    %163 = arith.mulf %157, %162 : vector<2x32xf32>
    %c1_i32_111 = arith.constant 1 : i32
    %164 = vector.broadcast %c1_i32_111 : i32 to vector<2x1xi32>
    %165 = arith.cmpi sgt, %116, %164 : vector<2x1xi32>
    %166 = vector.shape_cast %165 : vector<2x1xi1> to vector<2x1xi1>
    %167 = vector.broadcast %166 : vector<2x1xi1> to vector<2x32xi1>
    %168 = arith.select %167, %163, %142 : vector<2x32xi1>, vector<2x32xf32>
    %169 = vector.shape_cast %165 : vector<2x1xi1> to vector<2x1xi1>
    %170 = vector.broadcast %169 : vector<2x1xi1> to vector<2x32xi1>
    %171 = arith.select %170, %161, %145 : vector<2x32xi1>, vector<2x32xf32>
    %172 = arith.truncf %168 : vector<2x32xf32> to vector<2x32xbf16>
    %cst_112 = arith.constant dense<0.000000e+00> : vector<2x128xf32>
    %173 = tpu.matmul %172, %117, %cst_112 {dimension_numbers = #tpu.dot_dimension_numbers<[1], [0], [0], [1], [0, 0, 1, 1], [], []>} : vector<2x32xbf16>, vector<32x128xbf16>, vector<2x128xf32> -> vector<2x128xf32>
    %174 = arith.addf %66, %173 : vector<2x128xf32>
    %175 = arith.negf %174 : vector<2x128xf32>
    %176 = math.exp %175 : vector<2x128xf32>
    %cst_113 = arith.constant 1.000000e+00 : f32
    %177 = vector.broadcast %cst_113 : f32 to vector<2x128xf32>
    %178 = arith.addf %177, %176 : vector<2x128xf32>
    %179 = arith.divf %177, %178 : vector<2x128xf32>
    %180 = math.tanh %174 : vector<2x128xf32>
    %181 = vector.extract_strided_slice %179 {offsets = [0, 0], sizes = [2, 32], strides = [1, 1]} : vector<2x128xf32> to vector<2x32xf32>
    %182 = vector.extract_strided_slice %179 {offsets = [0, 32], sizes = [2, 32], strides = [1, 1]} : vector<2x128xf32> to vector<2x32xf32>
    %183 = vector.extract_strided_slice %179 {offsets = [0, 96], sizes = [2, 32], strides = [1, 1]} : vector<2x128xf32> to vector<2x32xf32>
    %184 = vector.extract_strided_slice %180 {offsets = [0, 64], sizes = [2, 32], strides = [1, 1]} : vector<2x128xf32> to vector<2x32xf32>
    %185 = arith.mulf %182, %171 : vector<2x32xf32>
    %186 = arith.mulf %181, %184 : vector<2x32xf32>
    %187 = arith.addf %185, %186 : vector<2x32xf32>
    %188 = math.tanh %187 : vector<2x32xf32>
    %189 = arith.mulf %183, %188 : vector<2x32xf32>
    %c2_i32_114 = arith.constant 2 : i32
    %190 = vector.broadcast %c2_i32_114 : i32 to vector<2x1xi32>
    %191 = arith.cmpi sgt, %116, %190 : vector<2x1xi32>
    %192 = vector.shape_cast %191 : vector<2x1xi1> to vector<2x1xi1>
    %193 = vector.broadcast %192 : vector<2x1xi1> to vector<2x32xi1>
    %194 = arith.select %193, %189, %168 : vector<2x32xi1>, vector<2x32xf32>
    %195 = vector.shape_cast %191 : vector<2x1xi1> to vector<2x1xi1>
    %196 = vector.broadcast %195 : vector<2x1xi1> to vector<2x32xi1>
    %197 = arith.select %196, %187, %171 : vector<2x32xi1>, vector<2x32xf32>
    %198 = arith.truncf %194 : vector<2x32xf32> to vector<2x32xbf16>
    %cst_115 = arith.constant dense<0.000000e+00> : vector<2x128xf32>
    %199 = tpu.matmul %198, %117, %cst_115 {dimension_numbers = #tpu.dot_dimension_numbers<[1], [0], [0], [1], [0, 0, 1, 1], [], []>} : vector<2x32xbf16>, vector<32x128xbf16>, vector<2x128xf32> -> vector<2x128xf32>
    %200 = arith.addf %75, %199 : vector<2x128xf32>
    %201 = arith.negf %200 : vector<2x128xf32>
    %202 = math.exp %201 : vector<2x128xf32>
    %cst_116 = arith.constant 1.000000e+00 : f32
    %203 = vector.broadcast %cst_116 : f32 to vector<2x128xf32>
    %204 = arith.addf %203, %202 : vector<2x128xf32>
    %205 = arith.divf %203, %204 : vector<2x128xf32>
    %206 = math.tanh %200 : vector<2x128xf32>
    %207 = vector.extract_strided_slice %205 {offsets = [0, 0], sizes = [2, 32], strides = [1, 1]} : vector<2x128xf32> to vector<2x32xf32>
    %208 = vector.extract_strided_slice %205 {offsets = [0, 32], sizes = [2, 32], strides = [1, 1]} : vector<2x128xf32> to vector<2x32xf32>
    %209 = vector.extract_strided_slice %205 {offsets = [0, 96], sizes = [2, 32], strides = [1, 1]} : vector<2x128xf32> to vector<2x32xf32>
    %210 = vector.extract_strided_slice %206 {offsets = [0, 64], sizes = [2, 32], strides = [1, 1]} : vector<2x128xf32> to vector<2x32xf32>
    %211 = arith.mulf %208, %197 : vector<2x32xf32>
    %212 = arith.mulf %207, %210 : vector<2x32xf32>
    %213 = arith.addf %211, %212 : vector<2x32xf32>
    %214 = math.tanh %213 : vector<2x32xf32>
    %215 = arith.mulf %209, %214 : vector<2x32xf32>
    %c3_i32_117 = arith.constant 3 : i32
    %216 = vector.broadcast %c3_i32_117 : i32 to vector<2x1xi32>
    %217 = arith.cmpi sgt, %116, %216 : vector<2x1xi32>
    %218 = vector.shape_cast %217 : vector<2x1xi1> to vector<2x1xi1>
    %219 = vector.broadcast %218 : vector<2x1xi1> to vector<2x32xi1>
    %220 = arith.select %219, %215, %194 : vector<2x32xi1>, vector<2x32xf32>
    %221 = vector.shape_cast %217 : vector<2x1xi1> to vector<2x1xi1>
    %222 = vector.broadcast %221 : vector<2x1xi1> to vector<2x32xi1>
    %223 = arith.select %222, %213, %197 : vector<2x32xi1>, vector<2x32xf32>
    %224 = arith.truncf %220 : vector<2x32xf32> to vector<2x32xbf16>
    %cst_118 = arith.constant dense<0.000000e+00> : vector<2x128xf32>
    %225 = tpu.matmul %224, %117, %cst_118 {dimension_numbers = #tpu.dot_dimension_numbers<[1], [0], [0], [1], [0, 0, 1, 1], [], []>} : vector<2x32xbf16>, vector<32x128xbf16>, vector<2x128xf32> -> vector<2x128xf32>
    %226 = arith.addf %84, %225 : vector<2x128xf32>
    %227 = arith.negf %226 : vector<2x128xf32>
    %228 = math.exp %227 : vector<2x128xf32>
    %cst_119 = arith.constant 1.000000e+00 : f32
    %229 = vector.broadcast %cst_119 : f32 to vector<2x128xf32>
    %230 = arith.addf %229, %228 : vector<2x128xf32>
    %231 = arith.divf %229, %230 : vector<2x128xf32>
    %232 = math.tanh %226 : vector<2x128xf32>
    %233 = vector.extract_strided_slice %231 {offsets = [0, 0], sizes = [2, 32], strides = [1, 1]} : vector<2x128xf32> to vector<2x32xf32>
    %234 = vector.extract_strided_slice %231 {offsets = [0, 32], sizes = [2, 32], strides = [1, 1]} : vector<2x128xf32> to vector<2x32xf32>
    %235 = vector.extract_strided_slice %231 {offsets = [0, 96], sizes = [2, 32], strides = [1, 1]} : vector<2x128xf32> to vector<2x32xf32>
    %236 = vector.extract_strided_slice %232 {offsets = [0, 64], sizes = [2, 32], strides = [1, 1]} : vector<2x128xf32> to vector<2x32xf32>
    %237 = arith.mulf %234, %223 : vector<2x32xf32>
    %238 = arith.mulf %233, %236 : vector<2x32xf32>
    %239 = arith.addf %237, %238 : vector<2x32xf32>
    %240 = math.tanh %239 : vector<2x32xf32>
    %241 = arith.mulf %235, %240 : vector<2x32xf32>
    %c4_i32_120 = arith.constant 4 : i32
    %242 = vector.broadcast %c4_i32_120 : i32 to vector<2x1xi32>
    %243 = arith.cmpi sgt, %116, %242 : vector<2x1xi32>
    %244 = vector.shape_cast %243 : vector<2x1xi1> to vector<2x1xi1>
    %245 = vector.broadcast %244 : vector<2x1xi1> to vector<2x32xi1>
    %246 = arith.select %245, %241, %220 : vector<2x32xi1>, vector<2x32xf32>
    %247 = vector.shape_cast %243 : vector<2x1xi1> to vector<2x1xi1>
    %248 = vector.broadcast %247 : vector<2x1xi1> to vector<2x32xi1>
    %249 = arith.select %248, %239, %223 : vector<2x32xi1>, vector<2x32xf32>
    %250 = arith.truncf %246 : vector<2x32xf32> to vector<2x32xbf16>
    %cst_121 = arith.constant dense<0.000000e+00> : vector<2x128xf32>
    %251 = tpu.matmul %250, %117, %cst_121 {dimension_numbers = #tpu.dot_dimension_numbers<[1], [0], [0], [1], [0, 0, 1, 1], [], []>} : vector<2x32xbf16>, vector<32x128xbf16>, vector<2x128xf32> -> vector<2x128xf32>
    %252 = arith.addf %93, %251 : vector<2x128xf32>
    %253 = arith.negf %252 : vector<2x128xf32>
    %254 = math.exp %253 : vector<2x128xf32>
    %cst_122 = arith.constant 1.000000e+00 : f32
    %255 = vector.broadcast %cst_122 : f32 to vector<2x128xf32>
    %256 = arith.addf %255, %254 : vector<2x128xf32>
    %257 = arith.divf %255, %256 : vector<2x128xf32>
    %258 = math.tanh %252 : vector<2x128xf32>
    %259 = vector.extract_strided_slice %257 {offsets = [0, 0], sizes = [2, 32], strides = [1, 1]} : vector<2x128xf32> to vector<2x32xf32>
    %260 = vector.extract_strided_slice %257 {offsets = [0, 32], sizes = [2, 32], strides = [1, 1]} : vector<2x128xf32> to vector<2x32xf32>
    %261 = vector.extract_strided_slice %257 {offsets = [0, 96], sizes = [2, 32], strides = [1, 1]} : vector<2x128xf32> to vector<2x32xf32>
    %262 = vector.extract_strided_slice %258 {offsets = [0, 64], sizes = [2, 32], strides = [1, 1]} : vector<2x128xf32> to vector<2x32xf32>
    %263 = arith.mulf %260, %249 : vector<2x32xf32>
    %264 = arith.mulf %259, %262 : vector<2x32xf32>
    %265 = arith.addf %263, %264 : vector<2x32xf32>
    %266 = math.tanh %265 : vector<2x32xf32>
    %267 = arith.mulf %261, %266 : vector<2x32xf32>
    %c5_i32_123 = arith.constant 5 : i32
    %268 = vector.broadcast %c5_i32_123 : i32 to vector<2x1xi32>
    %269 = arith.cmpi sgt, %116, %268 : vector<2x1xi32>
    %270 = vector.shape_cast %269 : vector<2x1xi1> to vector<2x1xi1>
    %271 = vector.broadcast %270 : vector<2x1xi1> to vector<2x32xi1>
    %272 = arith.select %271, %267, %246 : vector<2x32xi1>, vector<2x32xf32>
    %273 = vector.shape_cast %269 : vector<2x1xi1> to vector<2x1xi1>
    %274 = vector.broadcast %273 : vector<2x1xi1> to vector<2x32xi1>
    %275 = arith.select %274, %265, %249 : vector<2x32xi1>, vector<2x32xf32>
    %276 = arith.truncf %272 : vector<2x32xf32> to vector<2x32xbf16>
    %cst_124 = arith.constant dense<0.000000e+00> : vector<2x128xf32>
    %277 = tpu.matmul %276, %117, %cst_124 {dimension_numbers = #tpu.dot_dimension_numbers<[1], [0], [0], [1], [0, 0, 1, 1], [], []>} : vector<2x32xbf16>, vector<32x128xbf16>, vector<2x128xf32> -> vector<2x128xf32>
    %278 = arith.addf %102, %277 : vector<2x128xf32>
    %279 = arith.negf %278 : vector<2x128xf32>
    %280 = math.exp %279 : vector<2x128xf32>
    %cst_125 = arith.constant 1.000000e+00 : f32
    %281 = vector.broadcast %cst_125 : f32 to vector<2x128xf32>
    %282 = arith.addf %281, %280 : vector<2x128xf32>
    %283 = arith.divf %281, %282 : vector<2x128xf32>
    %284 = math.tanh %278 : vector<2x128xf32>
    %285 = vector.extract_strided_slice %283 {offsets = [0, 0], sizes = [2, 32], strides = [1, 1]} : vector<2x128xf32> to vector<2x32xf32>
    %286 = vector.extract_strided_slice %283 {offsets = [0, 32], sizes = [2, 32], strides = [1, 1]} : vector<2x128xf32> to vector<2x32xf32>
    %287 = vector.extract_strided_slice %283 {offsets = [0, 96], sizes = [2, 32], strides = [1, 1]} : vector<2x128xf32> to vector<2x32xf32>
    %288 = vector.extract_strided_slice %284 {offsets = [0, 64], sizes = [2, 32], strides = [1, 1]} : vector<2x128xf32> to vector<2x32xf32>
    %289 = arith.mulf %286, %275 : vector<2x32xf32>
    %290 = arith.mulf %285, %288 : vector<2x32xf32>
    %291 = arith.addf %289, %290 : vector<2x32xf32>
    %292 = math.tanh %291 : vector<2x32xf32>
    %293 = arith.mulf %287, %292 : vector<2x32xf32>
    %c6_i32_126 = arith.constant 6 : i32
    %294 = vector.broadcast %c6_i32_126 : i32 to vector<2x1xi32>
    %295 = arith.cmpi sgt, %116, %294 : vector<2x1xi32>
    %296 = vector.shape_cast %295 : vector<2x1xi1> to vector<2x1xi1>
    %297 = vector.broadcast %296 : vector<2x1xi1> to vector<2x32xi1>
    %298 = arith.select %297, %293, %272 : vector<2x32xi1>, vector<2x32xf32>
    %299 = vector.shape_cast %295 : vector<2x1xi1> to vector<2x1xi1>
    %300 = vector.broadcast %299 : vector<2x1xi1> to vector<2x32xi1>
    %301 = arith.select %300, %291, %275 : vector<2x32xi1>, vector<2x32xf32>
    %302 = arith.truncf %298 : vector<2x32xf32> to vector<2x32xbf16>
    %cst_127 = arith.constant dense<0.000000e+00> : vector<2x128xf32>
    %303 = tpu.matmul %302, %117, %cst_127 {dimension_numbers = #tpu.dot_dimension_numbers<[1], [0], [0], [1], [0, 0, 1, 1], [], []>} : vector<2x32xbf16>, vector<32x128xbf16>, vector<2x128xf32> -> vector<2x128xf32>
    %304 = arith.addf %111, %303 : vector<2x128xf32>
    %305 = arith.negf %304 : vector<2x128xf32>
    %306 = math.exp %305 : vector<2x128xf32>
    %cst_128 = arith.constant 1.000000e+00 : f32
    %307 = vector.broadcast %cst_128 : f32 to vector<2x128xf32>
    %308 = arith.addf %307, %306 : vector<2x128xf32>
    %309 = arith.divf %307, %308 : vector<2x128xf32>
    %310 = math.tanh %304 : vector<2x128xf32>
    %311 = vector.extract_strided_slice %309 {offsets = [0, 0], sizes = [2, 32], strides = [1, 1]} : vector<2x128xf32> to vector<2x32xf32>
    %312 = vector.extract_strided_slice %309 {offsets = [0, 32], sizes = [2, 32], strides = [1, 1]} : vector<2x128xf32> to vector<2x32xf32>
    %313 = vector.extract_strided_slice %309 {offsets = [0, 96], sizes = [2, 32], strides = [1, 1]} : vector<2x128xf32> to vector<2x32xf32>
    %314 = vector.extract_strided_slice %310 {offsets = [0, 64], sizes = [2, 32], strides = [1, 1]} : vector<2x128xf32> to vector<2x32xf32>
    %315 = arith.mulf %312, %301 : vector<2x32xf32>
    %316 = arith.mulf %311, %314 : vector<2x32xf32>
    %317 = arith.addf %315, %316 : vector<2x32xf32>
    %318 = math.tanh %317 : vector<2x32xf32>
    %319 = arith.mulf %313, %318 : vector<2x32xf32>
    %c7_i32_129 = arith.constant 7 : i32
    %320 = vector.broadcast %c7_i32_129 : i32 to vector<2x1xi32>
    %321 = arith.cmpi sgt, %116, %320 : vector<2x1xi32>
    %322 = vector.shape_cast %321 : vector<2x1xi1> to vector<2x1xi1>
    %323 = vector.broadcast %322 : vector<2x1xi1> to vector<2x32xi1>
    %324 = arith.select %323, %319, %298 : vector<2x32xi1>, vector<2x32xf32>
    %325 = arith.truncf %324 : vector<2x32xf32> to vector<2x32xbf16>
    %c0_130 = arith.constant 0 : index
    %c0_131 = arith.constant 0 : index
    %326 = vector.load %arg8[%c0_130, %c0_131] : memref<32x17xbf16, #tpu.memory_space<vmem>>, vector<32x17xbf16>
    %cst_132 = arith.constant dense<0.000000e+00> : vector<2x17xf32>
    %327 = tpu.matmul %325, %326, %cst_132 {dimension_numbers = #tpu.dot_dimension_numbers<[1], [0], [0], [1], [0, 0, 1, 1], [], []>} : vector<2x32xbf16>, vector<32x17xbf16>, vector<2x17xf32> -> vector<2x17xf32>
    %c0_133 = arith.constant 0 : index
    %c0_134 = arith.constant 0 : index
    %328 = vector.load %arg9[%c0_133, %c0_134] : memref<1x17xf32, #tpu.memory_space<vmem>>, vector<1x17xf32>
    %329 = vector.broadcast %328 : vector<1x17xf32> to vector<2x17xf32>
    %330 = arith.addf %327, %329 : vector<2x17xf32>
    %c0_i32_135 = arith.constant 0 : i32
    %c0_i32_136 = arith.constant 0 : i32
    %c0_i32_137 = arith.constant 0 : i32
    %c0_i32_138 = arith.constant 0 : i32
    %c0_i32_139 = arith.constant 0 : i32
    %331 = tpu.memref_slice %arg2[%c0_i32_135, %c0_i32_136, %c0_i32_138, %c0_i32_139] : memref<2x14x14x1024xf32, #tpu.memory_space<any>> -> memref<1x1x1x1024xf32, #tpu.memory_space<any>>
    %332 = tpu.memref_squeeze %331 : memref<1x1x1x1024xf32, #tpu.memory_space<any>> -> memref<1x1024xf32, #tpu.memory_space<any>>
    %c0_i32_140 = arith.constant 0 : i32
    %c0_i32_141 = arith.constant 0 : i32
    %333 = tpu.memref_slice %arg12[%c0_i32_140, %c0_i32_141] : memref<2x4096xf32, #tpu.memory_space<vmem>> -> memref<1x1024xf32, #tpu.memory_space<vmem>>
    %334 = tpu.memref_slice %arg13[%c0_i32_137] : memref<8x!tpu.dma_semaphore, #tpu.memory_space<semaphore_mem>> -> memref<1x!tpu.dma_semaphore, #tpu.memory_space<semaphore_mem>>
    %335 = tpu.memref_squeeze %334 : memref<1x!tpu.dma_semaphore, #tpu.memory_space<semaphore_mem>> -> memref<!tpu.dma_semaphore, #tpu.memory_space<semaphore_mem>>
    tpu.wait_dma2 semaphore(%335 : memref<!tpu.dma_semaphore, #tpu.memory_space<semaphore_mem>>) src(%332 : memref<1x1024xf32, #tpu.memory_space<any>>) dst(%333 : memref<1x1024xf32, #tpu.memory_space<vmem>>)
    %c0_i32_142 = arith.constant 0 : i32
    %c0_i32_143 = arith.constant 0 : i32
    %c1_i32_144 = arith.constant 1 : i32
    %c7_i32_145 = arith.constant 7 : i32
    %c0_i32_146 = arith.constant 0 : i32
    %336 = tpu.memref_slice %arg2[%c0_i32_142, %c0_i32_143, %c7_i32_145, %c0_i32_146] : memref<2x14x14x1024xf32, #tpu.memory_space<any>> -> memref<1x1x1x1024xf32, #tpu.memory_space<any>>
    %337 = tpu.memref_squeeze %336 : memref<1x1x1x1024xf32, #tpu.memory_space<any>> -> memref<1x1024xf32, #tpu.memory_space<any>>
    %c0_i32_147 = arith.constant 0 : i32
    %c1024_i32_148 = arith.constant 1024 : i32
    %338 = tpu.memref_slice %arg12[%c0_i32_147, %c1024_i32_148] : memref<2x4096xf32, #tpu.memory_space<vmem>> -> memref<1x1024xf32, #tpu.memory_space<vmem>>
    %339 = tpu.memref_slice %arg13[%c1_i32_144] : memref<8x!tpu.dma_semaphore, #tpu.memory_space<semaphore_mem>> -> memref<1x!tpu.dma_semaphore, #tpu.memory_space<semaphore_mem>>
    %340 = tpu.memref_squeeze %339 : memref<1x!tpu.dma_semaphore, #tpu.memory_space<semaphore_mem>> -> memref<!tpu.dma_semaphore, #tpu.memory_space<semaphore_mem>>
    tpu.wait_dma2 semaphore(%340 : memref<!tpu.dma_semaphore, #tpu.memory_space<semaphore_mem>>) src(%337 : memref<1x1024xf32, #tpu.memory_space<any>>) dst(%338 : memref<1x1024xf32, #tpu.memory_space<vmem>>)
    %c0_i32_149 = arith.constant 0 : i32
    %c7_i32_150 = arith.constant 7 : i32
    %c2_i32_151 = arith.constant 2 : i32
    %c0_i32_152 = arith.constant 0 : i32
    %c0_i32_153 = arith.constant 0 : i32
    %341 = tpu.memref_slice %arg2[%c0_i32_149, %c7_i32_150, %c0_i32_152, %c0_i32_153] : memref<2x14x14x1024xf32, #tpu.memory_space<any>> -> memref<1x1x1x1024xf32, #tpu.memory_space<any>>
    %342 = tpu.memref_squeeze %341 : memref<1x1x1x1024xf32, #tpu.memory_space<any>> -> memref<1x1024xf32, #tpu.memory_space<any>>
    %c0_i32_154 = arith.constant 0 : i32
    %c2048_i32_155 = arith.constant 2048 : i32
    %343 = tpu.memref_slice %arg12[%c0_i32_154, %c2048_i32_155] : memref<2x4096xf32, #tpu.memory_space<vmem>> -> memref<1x1024xf32, #tpu.memory_space<vmem>>
    %344 = tpu.memref_slice %arg13[%c2_i32_151] : memref<8x!tpu.dma_semaphore, #tpu.memory_space<semaphore_mem>> -> memref<1x!tpu.dma_semaphore, #tpu.memory_space<semaphore_mem>>
    %345 = tpu.memref_squeeze %344 : memref<1x!tpu.dma_semaphore, #tpu.memory_space<semaphore_mem>> -> memref<!tpu.dma_semaphore, #tpu.memory_space<semaphore_mem>>
    tpu.wait_dma2 semaphore(%345 : memref<!tpu.dma_semaphore, #tpu.memory_space<semaphore_mem>>) src(%342 : memref<1x1024xf32, #tpu.memory_space<any>>) dst(%343 : memref<1x1024xf32, #tpu.memory_space<vmem>>)
    %c0_i32_156 = arith.constant 0 : i32
    %c7_i32_157 = arith.constant 7 : i32
    %c3_i32_158 = arith.constant 3 : i32
    %c7_i32_159 = arith.constant 7 : i32
    %c0_i32_160 = arith.constant 0 : i32
    %346 = tpu.memref_slice %arg2[%c0_i32_156, %c7_i32_157, %c7_i32_159, %c0_i32_160] : memref<2x14x14x1024xf32, #tpu.memory_space<any>> -> memref<1x1x1x1024xf32, #tpu.memory_space<any>>
    %347 = tpu.memref_squeeze %346 : memref<1x1x1x1024xf32, #tpu.memory_space<any>> -> memref<1x1024xf32, #tpu.memory_space<any>>
    %c0_i32_161 = arith.constant 0 : i32
    %c3072_i32_162 = arith.constant 3072 : i32
    %348 = tpu.memref_slice %arg12[%c0_i32_161, %c3072_i32_162] : memref<2x4096xf32, #tpu.memory_space<vmem>> -> memref<1x1024xf32, #tpu.memory_space<vmem>>
    %349 = tpu.memref_slice %arg13[%c3_i32_158] : memref<8x!tpu.dma_semaphore, #tpu.memory_space<semaphore_mem>> -> memref<1x!tpu.dma_semaphore, #tpu.memory_space<semaphore_mem>>
    %350 = tpu.memref_squeeze %349 : memref<1x!tpu.dma_semaphore, #tpu.memory_space<semaphore_mem>> -> memref<!tpu.dma_semaphore, #tpu.memory_space<semaphore_mem>>
    tpu.wait_dma2 semaphore(%350 : memref<!tpu.dma_semaphore, #tpu.memory_space<semaphore_mem>>) src(%347 : memref<1x1024xf32, #tpu.memory_space<any>>) dst(%348 : memref<1x1024xf32, #tpu.memory_space<vmem>>)
    %c1_i32_163 = arith.constant 1 : i32
    %c0_i32_164 = arith.constant 0 : i32
    %c4_i32_165 = arith.constant 4 : i32
    %c0_i32_166 = arith.constant 0 : i32
    %c0_i32_167 = arith.constant 0 : i32
    %351 = tpu.memref_slice %arg2[%c1_i32_163, %c0_i32_164, %c0_i32_166, %c0_i32_167] : memref<2x14x14x1024xf32, #tpu.memory_space<any>> -> memref<1x1x1x1024xf32, #tpu.memory_space<any>>
    %352 = tpu.memref_squeeze %351 : memref<1x1x1x1024xf32, #tpu.memory_space<any>> -> memref<1x1024xf32, #tpu.memory_space<any>>
    %c1_i32_168 = arith.constant 1 : i32
    %c0_i32_169 = arith.constant 0 : i32
    %353 = tpu.memref_slice %arg12[%c1_i32_168, %c0_i32_169] : memref<2x4096xf32, #tpu.memory_space<vmem>> -> memref<1x1024xf32, #tpu.memory_space<vmem>>
    %354 = tpu.memref_slice %arg13[%c4_i32_165] : memref<8x!tpu.dma_semaphore, #tpu.memory_space<semaphore_mem>> -> memref<1x!tpu.dma_semaphore, #tpu.memory_space<semaphore_mem>>
    %355 = tpu.memref_squeeze %354 : memref<1x!tpu.dma_semaphore, #tpu.memory_space<semaphore_mem>> -> memref<!tpu.dma_semaphore, #tpu.memory_space<semaphore_mem>>
    tpu.wait_dma2 semaphore(%355 : memref<!tpu.dma_semaphore, #tpu.memory_space<semaphore_mem>>) src(%352 : memref<1x1024xf32, #tpu.memory_space<any>>) dst(%353 : memref<1x1024xf32, #tpu.memory_space<vmem>>)
    %c1_i32_170 = arith.constant 1 : i32
    %c0_i32_171 = arith.constant 0 : i32
    %c5_i32_172 = arith.constant 5 : i32
    %c7_i32_173 = arith.constant 7 : i32
    %c0_i32_174 = arith.constant 0 : i32
    %356 = tpu.memref_slice %arg2[%c1_i32_170, %c0_i32_171, %c7_i32_173, %c0_i32_174] : memref<2x14x14x1024xf32, #tpu.memory_space<any>> -> memref<1x1x1x1024xf32, #tpu.memory_space<any>>
    %357 = tpu.memref_squeeze %356 : memref<1x1x1x1024xf32, #tpu.memory_space<any>> -> memref<1x1024xf32, #tpu.memory_space<any>>
    %c1_i32_175 = arith.constant 1 : i32
    %c1024_i32_176 = arith.constant 1024 : i32
    %358 = tpu.memref_slice %arg12[%c1_i32_175, %c1024_i32_176] : memref<2x4096xf32, #tpu.memory_space<vmem>> -> memref<1x1024xf32, #tpu.memory_space<vmem>>
    %359 = tpu.memref_slice %arg13[%c5_i32_172] : memref<8x!tpu.dma_semaphore, #tpu.memory_space<semaphore_mem>> -> memref<1x!tpu.dma_semaphore, #tpu.memory_space<semaphore_mem>>
    %360 = tpu.memref_squeeze %359 : memref<1x!tpu.dma_semaphore, #tpu.memory_space<semaphore_mem>> -> memref<!tpu.dma_semaphore, #tpu.memory_space<semaphore_mem>>
    tpu.wait_dma2 semaphore(%360 : memref<!tpu.dma_semaphore, #tpu.memory_space<semaphore_mem>>) src(%357 : memref<1x1024xf32, #tpu.memory_space<any>>) dst(%358 : memref<1x1024xf32, #tpu.memory_space<vmem>>)
    %c1_i32_177 = arith.constant 1 : i32
    %c7_i32_178 = arith.constant 7 : i32
    %c6_i32_179 = arith.constant 6 : i32
    %c0_i32_180 = arith.constant 0 : i32
    %c0_i32_181 = arith.constant 0 : i32
    %361 = tpu.memref_slice %arg2[%c1_i32_177, %c7_i32_178, %c0_i32_180, %c0_i32_181] : memref<2x14x14x1024xf32, #tpu.memory_space<any>> -> memref<1x1x1x1024xf32, #tpu.memory_space<any>>
    %362 = tpu.memref_squeeze %361 : memref<1x1x1x1024xf32, #tpu.memory_space<any>> -> memref<1x1024xf32, #tpu.memory_space<any>>
    %c1_i32_182 = arith.constant 1 : i32
    %c2048_i32_183 = arith.constant 2048 : i32
    %363 = tpu.memref_slice %arg12[%c1_i32_182, %c2048_i32_183] : memref<2x4096xf32, #tpu.memory_space<vmem>> -> memref<1x1024xf32, #tpu.memory_space<vmem>>
    %364 = tpu.memref_slice %arg13[%c6_i32_179] : memref<8x!tpu.dma_semaphore, #tpu.memory_space<semaphore_mem>> -> memref<1x!tpu.dma_semaphore, #tpu.memory_space<semaphore_mem>>
    %365 = tpu.memref_squeeze %364 : memref<1x!tpu.dma_semaphore, #tpu.memory_space<semaphore_mem>> -> memref<!tpu.dma_semaphore, #tpu.memory_space<semaphore_mem>>
    tpu.wait_dma2 semaphore(%365 : memref<!tpu.dma_semaphore, #tpu.memory_space<semaphore_mem>>) src(%362 : memref<1x1024xf32, #tpu.memory_space<any>>) dst(%363 : memref<1x1024xf32, #tpu.memory_space<vmem>>)
    %c1_i32_184 = arith.constant 1 : i32
    %c7_i32_185 = arith.constant 7 : i32
    %c7_i32_186 = arith.constant 7 : i32
    %c7_i32_187 = arith.constant 7 : i32
    %c0_i32_188 = arith.constant 0 : i32
    %366 = tpu.memref_slice %arg2[%c1_i32_184, %c7_i32_185, %c7_i32_187, %c0_i32_188] : memref<2x14x14x1024xf32, #tpu.memory_space<any>> -> memref<1x1x1x1024xf32, #tpu.memory_space<any>>
    %367 = tpu.memref_squeeze %366 : memref<1x1x1x1024xf32, #tpu.memory_space<any>> -> memref<1x1024xf32, #tpu.memory_space<any>>
    %c1_i32_189 = arith.constant 1 : i32
    %c3072_i32_190 = arith.constant 3072 : i32
    %368 = tpu.memref_slice %arg12[%c1_i32_189, %c3072_i32_190] : memref<2x4096xf32, #tpu.memory_space<vmem>> -> memref<1x1024xf32, #tpu.memory_space<vmem>>
    %369 = tpu.memref_slice %arg13[%c7_i32_186] : memref<8x!tpu.dma_semaphore, #tpu.memory_space<semaphore_mem>> -> memref<1x!tpu.dma_semaphore, #tpu.memory_space<semaphore_mem>>
    %370 = tpu.memref_squeeze %369 : memref<1x!tpu.dma_semaphore, #tpu.memory_space<semaphore_mem>> -> memref<!tpu.dma_semaphore, #tpu.memory_space<semaphore_mem>>
    tpu.wait_dma2 semaphore(%370 : memref<!tpu.dma_semaphore, #tpu.memory_space<semaphore_mem>>) src(%367 : memref<1x1024xf32, #tpu.memory_space<any>>) dst(%368 : memref<1x1024xf32, #tpu.memory_space<vmem>>)
    %c0_191 = arith.constant 0 : index
    %c0_192 = arith.constant 0 : index
    %371 = vector.load %arg12[%c0_191, %c0_192] : memref<2x4096xf32, #tpu.memory_space<vmem>>, vector<2x4096xf32>
    %372 = arith.truncf %371 : vector<2x4096xf32> to vector<2x4096xbf16>
    %c0_193 = arith.constant 0 : index
    %c0_194 = arith.constant 0 : index
    %373 = vector.load %arg5[%c0_193, %c0_194] : memref<4096x12xbf16, #tpu.memory_space<vmem>>, vector<4096x12xbf16>
    %cst_195 = arith.constant dense<0.000000e+00> : vector<2x12xf32>
    %374 = tpu.matmul %372, %373, %cst_195 {dimension_numbers = #tpu.dot_dimension_numbers<[1], [0], [0], [1], [0, 0, 1, 1], [], []>} : vector<2x4096xbf16>, vector<4096x12xbf16>, vector<2x12xf32> -> vector<2x12xf32>
    %c0_196 = arith.constant 0 : index
    %c0_197 = arith.constant 0 : index
    %375 = vector.load %arg6[%c0_196, %c0_197] : memref<1x12xf32, #tpu.memory_space<vmem>>, vector<1x12xf32>
    %376 = vector.broadcast %375 : vector<1x12xf32> to vector<2x12xf32>
    %377 = arith.addf %374, %376 : vector<2x12xf32>
    %cst_198 = arith.constant 0.000000e+00 : f32
    %378 = vector.broadcast %cst_198 : f32 to vector<2x12xf32>
    %379 = arith.maximumf %377, %378 : vector<2x12xf32>
    %380 = arith.truncf %379 : vector<2x12xf32> to vector<2x12xbf16>
    %c0_199 = arith.constant 0 : index
    %c0_200 = arith.constant 0 : index
    %381 = vector.load %arg7[%c0_199, %c0_200] : memref<12x17xbf16, #tpu.memory_space<vmem>>, vector<12x17xbf16>
    %cst_201 = arith.constant dense<0.000000e+00> : vector<2x17xf32>
    %382 = tpu.matmul %380, %381, %cst_201 {dimension_numbers = #tpu.dot_dimension_numbers<[1], [0], [0], [1], [0, 0, 1, 1], [], []>} : vector<2x12xbf16>, vector<12x17xbf16>, vector<2x17xf32> -> vector<2x17xf32>
    %383 = arith.addf %330, %382 : vector<2x17xf32>
    %384 = vector.extract_strided_slice %383 {offsets = [0, 0], sizes = [2, 16], strides = [1, 1]} : vector<2x17xf32> to vector<2x16xf32>
    %385 = vector.extract_strided_slice %383 {offsets = [0, 16], sizes = [2, 1], strides = [1, 1]} : vector<2x17xf32> to vector<2x1xf32>
    %c0_202 = arith.constant 0 : index
    %c0_203 = arith.constant 0 : index
    %386 = vector.load %arg11[%c0_202, %c0_203] : memref<2x1xf32, #tpu.memory_space<vmem>>, vector<2x1xf32>
    tpu.vector_store %arg11[%c0_202, %c0_203], %385 {strides = array<i32>} : memref<2x1xf32, #tpu.memory_space<vmem>>, vector<2x1xf32>,
    %cst_204 = arith.constant dense<0xFF800000> : vector<2xf32>
    %387 = vector.multi_reduction <maximumf>, %384, %cst_204 [1] : vector<2x16xf32> to vector<2xf32>
    %388 = vector.shape_cast %387 : vector<2xf32> to vector<2x1xf32>
    %389 = vector.broadcast %388 : vector<2x1xf32> to vector<2x16xf32>
    %390 = arith.subf %384, %389 : vector<2x16xf32>
    %391 = math.exp %390 : vector<2x16xf32>
    %cst_205 = arith.constant dense<0.000000e+00> : vector<2xf32>
    %392 = vector.multi_reduction <add>, %391, %cst_205 [1] : vector<2x16xf32> to vector<2xf32>
    %393 = vector.shape_cast %392 : vector<2xf32> to vector<2x1xf32>
    %394 = tpu.reciprocal %393 {approx = true} : vector<2x1xf32> -> vector<2x1xf32>
    %395 = vector.broadcast %394 : vector<2x1xf32> to vector<2x16xf32>
    %396 = arith.mulf %391, %395 : vector<2x16xf32>
    %c0_206 = arith.constant 0 : index
    %c0_207 = arith.constant 0 : index
    %397 = vector.load %arg10[%c0_206, %c0_207] : memref<2x16xf32, #tpu.memory_space<vmem>>, vector<2x16xf32>
    tpu.vector_store %arg10[%c0_206, %c0_207], %396 {strides = array<i32>} : memref<2x16xf32, #tpu.memory_space<vmem>>, vector<2x16xf32>,
    return
  }
}

</mosaic_0001>

<llo_original>
// kernel: tpu_custom_call.1
$region0: #{tpu_custom_call.1}
  #allocation0 [shape = 'u32[]', space=smem, size = 0x4, offset = 0x4, fixed_abs, tag = 'smem constant byte address 0x4 - core index']
  #allocation1 [shape = 'u32[144,128]{1,0:T(1,128)}', space=vmem, size = 0x12000, scoped, tag = 'internal scratch']
  #allocation2 [shape = 'f32[2,4096]{1,0:T(2,128)}', space=vmem, size = 0x8000, scoped, tag = 'scratch operand']
  #allocation3 [shape = 's32[8]{0}', space=sflag, size = 0x20, scoped, tag = 'scratch operand']
  #allocation10 [shape = 's32[]', space=sflag, size = 0x4, offset = 0, fixed_abs, tag = 'sflag constant byte address 0x0 - dummy sync flag']
  #allocation11 [shape = 's32[]', space=sflag, size = 0x4, offset = 0, fixed_abs, tag = 'sflag constant byte address 0x0 - dummy sync flag']
  #allocation12 [shape = 's32[]', space=sflag, size = 0x4, offset = 0, fixed_abs, tag = 'sflag constant byte address 0x0 - dummy sync flag']
  #allocation13 [shape = 's32[]', space=sflag, size = 0x4, offset = 0, fixed_abs, tag = 'sflag constant byte address 0x0 - dummy sync flag']
  #allocation14 [shape = 's32[]', space=sflag, size = 0x4, offset = 0, fixed_abs, tag = 'sflag constant byte address 0x0 - dummy sync flag']
  #allocation15 [shape = 's32[]', space=sflag, size = 0x4, offset = 0, fixed_abs, tag = 'sflag constant byte address 0x0 - dummy sync flag']
  #allocation16 [shape = 's32[]', space=sflag, size = 0x4, offset = 0, fixed_abs, tag = 'sflag constant byte address 0x0 - dummy sync flag']
  #allocation17 [shape = 's32[]', space=sflag, size = 0x4, offset = 0, fixed_abs, tag = 'sflag constant byte address 0x0 - dummy sync flag']
  %s0 = inlined_call_operand.vmem [shape: s32[2,8], index: 0, kind: input, shape index: {}]
  %s1 = inlined_call_operand.vmem [shape: s32[2], index: 1, kind: input, shape index: {}]
  %s2 = inlined_call_operand.vmem [shape: f32[2,14,14,1024], index: 2, kind: input, shape index: {}]
  %s3 = inlined_call_operand.vmem [shape: f32[16,1,128], index: 3, kind: input, shape index: {}]
  %s4 = inlined_call_operand.vmem [shape: bf16[32,128], index: 4, kind: input, shape index: {}]
  %s5 = inlined_call_operand.vmem [shape: bf16[4096,12], index: 5, kind: input, shape index: {}]
  %s6 = inlined_call_operand.vmem [shape: f32[1,12], index: 6, kind: input, shape index: {}]
  %s7 = inlined_call_operand.vmem [shape: bf16[12,17], index: 7, kind: input, shape index: {}]
  %s8 = inlined_call_operand.vmem [shape: bf16[32,17], index: 8, kind: input, shape index: {}]
  %s9 = inlined_call_operand.vmem [shape: f32[1,17], index: 9, kind: input, shape index: {}]
  %s10 = inlined_call_operand.hbm [shape: f32[2,16], index: 10, kind: output, shape index: {0}]
  %s11 = inlined_call_operand.vmem [shape: f32[2,1], index: 11, kind: output, shape index: {1}]
  %12 = xla_tuple %s10, %s11
  %s13 = sld [smem:[#allocation0]]
  $region358: #{tpu_custom_call.1} parent=0
    _
  %s15 = ssub.s32 1, %s13
  %s16 = scalar_select 0, %s15, %s13
  $region1: #{tpu_custom_call.1} parent=0
    #allocation4 [shape = 'u8[1024]{0}', space=smem, size = 0x400, scoped, tag = 'input window, operand 0, single buffered']
    #allocation5 [shape = 's32[1]{0}', space=sflag, size = 0x4, scoped, tag = 'scoped memory for tpu_custom_call.1']
    #allocation6 [shape = 's32[1]{0}', space=sflag, size = 0x4, scoped, tag = 'scoped memory for tpu_custom_call.1']
    #allocation7 [shape = 'u8[512]{0}', space=smem, size = 0x200, scoped, tag = 'input window, operand 1, single buffered']
    #allocation8 [shape = 's32[1]{0}', space=sflag, size = 0x4, scoped, tag = 'scoped memory for tpu_custom_call.1']
    #allocation9 [shape = 'u8[1024]{0}', space=vmem, size = 0x400, scoped, tag = 'output window, operand 0, single buffered']
    %17 = vsyncpa [#allocation6], 0
    %18 = vsyncpa [#allocation8], 0
    %19 = vsyncpa [#allocation5], 0
    // Predicated region
    $region2: #{tpu_custom_call.1} parent=1 // pred_check
      _
    $region3: #{tpu_custom_call.1} parent=1 // pred_check_branch
      %21 = sbr.rel (0) target = $region5
    $region4: #{tpu_custom_call.1} parent=1 // pred_region
      %s23 = ssub.s32 32, 32
      %24 = vsyncadd [#allocation6], %s23
      %s26 = sshll.u32 %s0, 4
      %s27 = int_to_ptr.vmem [resolvable:$true] %s26
      %29 = dma.vmem_to_smem %s27, 32, [#allocation4], [#allocation6]
    $region5: #{tpu_custom_call.1} parent=1 // pred_fallthru
      _
    // Predicated region
    $region6: #{tpu_custom_call.1} parent=1 // pred_check
      _
    $region7: #{tpu_custom_call.1} parent=1 // pred_check_branch
      %31 = sbr.rel (0) target = $region9
    $region8: #{tpu_custom_call.1} parent=1 // pred_region
      %s33 = ssub.s32 16, 16
      %34 = vsyncadd [#allocation8], %s33
      %s36 = sshll.u32 %s1, 4
      %s37 = int_to_ptr.vmem [resolvable:$true] %s36
      %39 = dma.vmem_to_smem %s37, 16, [#allocation7], [#allocation8]
    $region9: #{tpu_custom_call.1} parent=1 // pred_fallthru
      _
    // Predicated region
    $region10: #{tpu_custom_call.1} parent=1 // pred_check
      _
    $region11: #{tpu_custom_call.1} parent=1 // pred_check_branch
      %41 = sbr.rel (0) target = $region13
    $region12: #{tpu_custom_call.1} parent=1 // pred_region
      _
    $region13: #{tpu_custom_call.1} parent=1 // pred_fallthru
      _
    // Predicated region
    $region14: #{tpu_custom_call.1} parent=1 // pred_check
      _
    $region15: #{tpu_custom_call.1} parent=1 // pred_check_branch
      %43 = sbr.rel (0) target = $region17
    $region16: #{tpu_custom_call.1} parent=1 // pred_region
      _
    $region17: #{tpu_custom_call.1} parent=1 // pred_fallthru
      _
    // Predicated region
    $region18: #{tpu_custom_call.1} parent=1 // pred_check
      _
    $region19: #{tpu_custom_call.1} parent=1 // pred_check_branch
      %45 = sbr.rel (0) target = $region21
    $region20: #{tpu_custom_call.1} parent=1 // pred_region
      _
    $region21: #{tpu_custom_call.1} parent=1 // pred_fallthru
      _
    // Predicated region
    $region22: #{tpu_custom_call.1} parent=1 // pred_check
      _
    $region23: #{tpu_custom_call.1} parent=1 // pred_check_branch
      %47 = sbr.rel (0) target = $region25
    $region24: #{tpu_custom_call.1} parent=1 // pred_region
      _
    $region25: #{tpu_custom_call.1} parent=1 // pred_fallthru
      _
    // Predicated region
    $region26: #{tpu_custom_call.1} parent=1 // pred_check
      _
    $region27: #{tpu_custom_call.1} parent=1 // pred_check_branch
      %49 = sbr.rel (0) target = $region29
    $region28: #{tpu_custom_call.1} parent=1 // pred_region
      _
    $region29: #{tpu_custom_call.1} parent=1 // pred_fallthru
      _
    // Predicated region
    $region30: #{tpu_custom_call.1} parent=1 // pred_check
      _
    $region31: #{tpu_custom_call.1} parent=1 // pred_check_branch
      %51 = sbr.rel (0) target = $region33
    $region32: #{tpu_custom_call.1} parent=1 // pred_region
      _
    $region33: #{tpu_custom_call.1} parent=1 // pred_fallthru
      _
    // Predicated region
    $region34: #{tpu_custom_call.1} parent=1 // pred_check
      _
    $region35: #{tpu_custom_call.1} parent=1 // pred_check_branch
      %53 = sbr.rel (0) target = $region37
    $region36: #{tpu_custom_call.1} parent=1 // pred_region
      _
    $region37: #{tpu_custom_call.1} parent=1 // pred_fallthru
      _
    // Predicated region
    $region38: #{tpu_custom_call.1} parent=1 // pred_check
      _
    $region39: #{tpu_custom_call.1} parent=1 // pred_check_branch
      %55 = sbr.rel (0) target = $region41
    $region40: #{tpu_custom_call.1} parent=1 // pred_region
      %56 = dma.done [#allocation6], 32
    $region41: #{tpu_custom_call.1} parent=1 // pred_fallthru
      _
    // Predicated region
    $region42: #{tpu_custom_call.1} parent=1 // pred_check
      _
    $region43: #{tpu_custom_call.1} parent=1 // pred_check_branch
      %58 = sbr.rel (0) target = $region45
    $region44: #{tpu_custom_call.1} parent=1 // pred_region
      %59 = dma.done [#allocation8], 16
    $region45: #{tpu_custom_call.1} parent=1 // pred_fallthru
      _
    %60 = sfence
    %p63 = scmp.lt.u32.totalorder 1, 8
    %p64 = pneg %p63
    // Predicated region
    $region46: #{tpu_custom_call.1} parent=1 // pred_check
      _
    $region47: #{tpu_custom_call.1} parent=1 // pred_check_branch
      %66 = sbr.rel (%p63) target = $region49
    $region48: #{tpu_custom_call.1} parent=1 // pred_region
      %s95 = sand.u32 1, 7
      %p96 = scmp.eq.s32.totalorder %s95, 0
      %p97 = pneg %p96
      // Predicated region
      $region61: #{tpu_custom_call.1} parent=48 // pred_check
        _
      $region62: #{tpu_custom_call.1} parent=48 // pred_check_branch
        %99 = sbr.rel (%p96) target = $region64
      $region63: #{tpu_custom_call.1} parent=48 // pred_region
        %s100 = sand.u32 1, 7
        %s101 = ssub.s32 1, %s100
        %s102 = scalar_lea.vmem %s2, %s101
        %s103 = ssub.s32 1, %s100
        %s104 = scalar_lea.vmem [#allocation2], %s103
        loop: start=0, step=1, limit=1
        $region65: #{tpu_custom_call.1} parent=63 // loop_pre_header
          _
        $region66: #{tpu_custom_call.1} parent=63 // loop_header
          %s106 = sphi 0, %s110
          %p107 = scmp.ge.s32.totalorder %s106, 1
          %s111 = sphi %s2, %s2
          %s112 = sphi [#allocation2], [#allocation2]
        $region67: #{tpu_custom_call.1} parent=63 // loop_header_branch
          %109 = sbr.rel (%p107) target = $region71
        $region68: #{tpu_custom_call.1} parent=63 // loop_body
          _
        $region69: #{tpu_custom_call.1} parent=63 // loop_footer
          %s110 = sadd.s32 1, %s106
        $region70: #{tpu_custom_call.1} parent=63 // loop_footer_branch
          %105 = sbr.rel target = $region66
        $region71: #{tpu_custom_call.1} parent=63 // loop_exit
          _
        %s113 = sshllo.u32 0, %s100
        loop: start=0, step=1, limit=1
        $region72: #{tpu_custom_call.1} parent=63 // loop_pre_header
          _
        $region73: #{tpu_custom_call.1} parent=63 // loop_header
          %s115 = sphi 0, %s119
          %p116 = scmp.ge.s32.totalorder %s115, 1
          %s120 = sphi %s102, %s102
          %s121 = sphi %s104, %s104
        $region74: #{tpu_custom_call.1} parent=63 // loop_header_branch
          %118 = sbr.rel (%p116) target = $region78
        $region75: #{tpu_custom_call.1} parent=63 // loop_body
          %v122 = vld [vmem:[%s120] sm:%s113]
          %123 = vst [vmem:[%s121] sm:%s113] %v122
          %v124 = vld [vmem:[%s120 + $0x8] sm:%s113]
          %125 = vst [vmem:[%s121 + $0x2] sm:%s113] %v124
          %v126 = vld [vmem:[%s120 + $0x10] sm:%s113]
          %127 = vst [vmem:[%s121 + $0x4] sm:%s113] %v126
          %v128 = vld [vmem:[%s120 + $0x18] sm:%s113]
          %129 = vst [vmem:[%s121 + $0x6] sm:%s113] %v128
          %v130 = vld [vmem:[%s120 + $0x20] sm:%s113]
          %131 = vst [vmem:[%s121 + $0x8] sm:%s113] %v130
          %v132 = vld [vmem:[%s120 + $0x28] sm:%s113]
          %133 = vst [vmem:[%s121 + $0xa] sm:%s113] %v132
          %v134 = vld [vmem:[%s120 + $0x30] sm:%s113]
          %135 = vst [vmem:[%s121 + $0xc] sm:%s113] %v134
          %v136 = vld [vmem:[%s120 + $0x38] sm:%s113]
          %137 = vst [vmem:[%s121 + $0xe] sm:%s113] %v136
        $region76: #{tpu_custom_call.1} parent=63 // loop_footer
          %s119 = sadd.s32 1, %s115
        $region77: #{tpu_custom_call.1} parent=63 // loop_footer_branch
          %114 = sbr.rel target = $region73
        $region78: #{tpu_custom_call.1} parent=63 // loop_exit
          _
      $region64: #{tpu_custom_call.1} parent=48 // pred_fallthru
        _
    $region49: #{tpu_custom_call.1} parent=1 // pred_fallthru
      _
    // Predicated region
    $region50: #{tpu_custom_call.1} parent=1 // pred_check
      %p67 = pneg %p63
    $region51: #{tpu_custom_call.1} parent=1 // pred_check_branch
      %69 = sbr.rel (%p67) target = $region53
    $region52: #{tpu_custom_call.1} parent=1 // pred_region
      %s70 = sshllo.u32 0, 1
      loop: start=0, step=1, limit=1
      $region54: #{tpu_custom_call.1} parent=52 // loop_pre_header
        _
      $region55: #{tpu_custom_call.1} parent=52 // loop_header
        %s72 = sphi 0, %s76
        %p73 = scmp.ge.s32.totalorder %s72, 1
        %s77 = sphi %s2, %s2
        %s78 = sphi [#allocation2], [#allocation2]
      $region56: #{tpu_custom_call.1} parent=52 // loop_header_branch
        %75 = sbr.rel (%p73) target = $region60
      $region57: #{tpu_custom_call.1} parent=52 // loop_body
        %v79 = vld [vmem:[%s77] sm:%s70]
        %80 = vst [vmem:[%s78] sm:%s70] %v79
        %v81 = vld [vmem:[%s77 + $0x8] sm:%s70]
        %82 = vst [vmem:[%s78 + $0x2] sm:%s70] %v81
        %v83 = vld [vmem:[%s77 + $0x10] sm:%s70]
        %84 = vst [vmem:[%s78 + $0x4] sm:%s70] %v83
        %v85 = vld [vmem:[%s77 + $0x18] sm:%s70]
        %86 = vst [vmem:[%s78 + $0x6] sm:%s70] %v85
        %v87 = vld [vmem:[%s77 + $0x20] sm:%s70]
        %88 = vst [vmem:[%s78 + $0x8] sm:%s70] %v87
        %v89 = vld [vmem:[%s77 + $0x28] sm:%s70]
        %90 = vst [vmem:[%s78 + $0xa] sm:%s70] %v89
        %v91 = vld [vmem:[%s77 + $0x30] sm:%s70]
        %92 = vst [vmem:[%s78 + $0xc] sm:%s70] %v91
        %v93 = vld [vmem:[%s77 + $0x38] sm:%s70]
        %94 = vst [vmem:[%s78 + $0xe] sm:%s70] %v93
      $region58: #{tpu_custom_call.1} parent=52 // loop_footer
        %s76 = sadd.s32 1, %s72
      $region59: #{tpu_custom_call.1} parent=52 // loop_footer_branch
        %71 = sbr.rel target = $region55
      $region60: #{tpu_custom_call.1} parent=52 // loop_exit
        _
    $region53: #{tpu_custom_call.1} parent=1 // pred_fallthru
      _
    // Predicated region
    $region79: #{tpu_custom_call.1} parent=1 // pred_check
      _
    $region80: #{tpu_custom_call.1} parent=1 // pred_check_branch
      %140 = sbr.rel (0) target = $region82
    $region81: #{tpu_custom_call.1} parent=1 // pred_region
      %141 = vsyncadd [#allocation3], 128
    $region82: #{tpu_custom_call.1} parent=1 // pred_fallthru
      _
    %s142 = scalar_lea.vmem %s2, 7
    %s143 = scalar_lea.vmem [#allocation2], 16
    %s144 = scalar_lea.sflag [#allocation3], 1
    %p146 = scmp.lt.u32.totalorder 1, 8
    %p147 = pneg %p146
    // Predicated region
    $region83: #{tpu_custom_call.1} parent=1 // pred_check
      _
    $region84: #{tpu_custom_call.1} parent=1 // pred_check_branch
      %149 = sbr.rel (%p146) target = $region86
    $region85: #{tpu_custom_call.1} parent=1 // pred_region
      %s178 = sand.u32 1, 7
      %p179 = scmp.eq.s32.totalorder %s178, 0
      %p180 = pneg %p179
      // Predicated region
      $region98: #{tpu_custom_call.1} parent=85 // pred_check
        _
      $region99: #{tpu_custom_call.1} parent=85 // pred_check_branch
        %182 = sbr.rel (%p179) target = $region101
      $region100: #{tpu_custom_call.1} parent=85 // pred_region
        %s183 = sand.u32 1, 7
        %s184 = ssub.s32 1, %s183
        %s185 = scalar_lea.vmem %s142, %s184
        %s186 = ssub.s32 1, %s183
        %s187 = scalar_lea.vmem %s143, %s186 [#allocation2]
        loop: start=0, step=1, limit=1
        $region102: #{tpu_custom_call.1} parent=100 // loop_pre_header
          _
        $region103: #{tpu_custom_call.1} parent=100 // loop_header
          %s189 = sphi 0, %s193
          %p190 = scmp.ge.s32.totalorder %s189, 1
          %s194 = sphi %s142, %s142
          %s195 = sphi %s143, %s143
        $region104: #{tpu_custom_call.1} parent=100 // loop_header_branch
          %192 = sbr.rel (%p190) target = $region108
        $region105: #{tpu_custom_call.1} parent=100 // loop_body
          _
        $region106: #{tpu_custom_call.1} parent=100 // loop_footer
          %s193 = sadd.s32 1, %s189
        $region107: #{tpu_custom_call.1} parent=100 // loop_footer_branch
          %188 = sbr.rel target = $region103
        $region108: #{tpu_custom_call.1} parent=100 // loop_exit
          _
        %s196 = sshllo.u32 0, %s183
        loop: start=0, step=1, limit=1
        $region109: #{tpu_custom_call.1} parent=100 // loop_pre_header
          _
        $region110: #{tpu_custom_call.1} parent=100 // loop_header
          %s198 = sphi 0, %s202
          %p199 = scmp.ge.s32.totalorder %s198, 1
          %s203 = sphi %s185, %s185
          %s204 = sphi %s187, %s187
        $region111: #{tpu_custom_call.1} parent=100 // loop_header_branch
          %201 = sbr.rel (%p199) target = $region115
        $region112: #{tpu_custom_call.1} parent=100 // loop_body
          %v205 = vld [vmem:[%s203] sm:%s196]
          %206 = vst [vmem:[%s204] sm:%s196] %v205
          %v207 = vld [vmem:[%s203 + $0x8] sm:%s196]
          %208 = vst [vmem:[%s204 + $0x2] sm:%s196] %v207
          %v209 = vld [vmem:[%s203 + $0x10] sm:%s196]
          %210 = vst [vmem:[%s204 + $0x4] sm:%s196] %v209
          %v211 = vld [vmem:[%s203 + $0x18] sm:%s196]
          %212 = vst [vmem:[%s204 + $0x6] sm:%s196] %v211
          %v213 = vld [vmem:[%s203 + $0x20] sm:%s196]
          %214 = vst [vmem:[%s204 + $0x8] sm:%s196] %v213
          %v215 = vld [vmem:[%s203 + $0x28] sm:%s196]
          %216 = vst [vmem:[%s204 + $0xa] sm:%s196] %v215
          %v217 = vld [vmem:[%s203 + $0x30] sm:%s196]
          %218 = vst [vmem:[%s204 + $0xc] sm:%s196] %v217
          %v219 = vld [vmem:[%s203 + $0x38] sm:%s196]
          %220 = vst [vmem:[%s204 + $0xe] sm:%s196] %v219
        $region113: #{tpu_custom_call.1} parent=100 // loop_footer
          %s202 = sadd.s32 1, %s198
        $region114: #{tpu_custom_call.1} parent=100 // loop_footer_branch
          %197 = sbr.rel target = $region110
        $region115: #{tpu_custom_call.1} parent=100 // loop_exit
          _
      $region101: #{tpu_custom_call.1} parent=85 // pred_fallthru
        _
    $region86: #{tpu_custom_call.1} parent=1 // pred_fallthru
      _
    // Predicated region
    $region87: #{tpu_custom_call.1} parent=1 // pred_check
      %p150 = pneg %p146
    $region88: #{tpu_custom_call.1} parent=1 // pred_check_branch
      %152 = sbr.rel (%p150) target = $region90
    $region89: #{tpu_custom_call.1} parent=1 // pred_region
      %s153 = sshllo.u32 0, 1
      loop: start=0, step=1, limit=1
      $region91: #{tpu_custom_call.1} parent=89 // loop_pre_header
        _
      $region92: #{tpu_custom_call.1} parent=89 // loop_header
        %s155 = sphi 0, %s159
        %p156 = scmp.ge.s32.totalorder %s155, 1
        %s160 = sphi %s142, %s142
        %s161 = sphi %s143, %s143
      $region93: #{tpu_custom_call.1} parent=89 // loop_header_branch
        %158 = sbr.rel (%p156) target = $region97
      $region94: #{tpu_custom_call.1} parent=89 // loop_body
        %v162 = vld [vmem:[%s160] sm:%s153]
        %163 = vst [vmem:[%s161] sm:%s153] %v162
        %v164 = vld [vmem:[%s160 + $0x8] sm:%s153]
        %165 = vst [vmem:[%s161 + $0x2] sm:%s153] %v164
        %v166 = vld [vmem:[%s160 + $0x10] sm:%s153]
        %167 = vst [vmem:[%s161 + $0x4] sm:%s153] %v166
        %v168 = vld [vmem:[%s160 + $0x18] sm:%s153]
        %169 = vst [vmem:[%s161 + $0x6] sm:%s153] %v168
        %v170 = vld [vmem:[%s160 + $0x20] sm:%s153]
        %171 = vst [vmem:[%s161 + $0x8] sm:%s153] %v170
        %v172 = vld [vmem:[%s160 + $0x28] sm:%s153]
        %173 = vst [vmem:[%s161 + $0xa] sm:%s153] %v172
        %v174 = vld [vmem:[%s160 + $0x30] sm:%s153]
        %175 = vst [vmem:[%s161 + $0xc] sm:%s153] %v174
        %v176 = vld [vmem:[%s160 + $0x38] sm:%s153]
        %177 = vst [vmem:[%s161 + $0xe] sm:%s153] %v176
      $region95: #{tpu_custom_call.1} parent=89 // loop_footer
        %s159 = sadd.s32 1, %s155
      $region96: #{tpu_custom_call.1} parent=89 // loop_footer_branch
        %154 = sbr.rel target = $region92
      $region97: #{tpu_custom_call.1} parent=89 // loop_exit
        _
    $region90: #{tpu_custom_call.1} parent=1 // pred_fallthru
      _
    // Predicated region
    $region116: #{tpu_custom_call.1} parent=1 // pred_check
      _
    $region117: #{tpu_custom_call.1} parent=1 // pred_check_branch
      %223 = sbr.rel (0) target = $region119
    $region118: #{tpu_custom_call.1} parent=1 // pred_region
      %224 = vsyncadd %s144, 128
    $region119: #{tpu_custom_call.1} parent=1 // pred_fallthru
      _
    %s225 = scalar_lea.vmem %s2, 896
    %s226 = scalar_lea.vmem [#allocation2], 32
    %s227 = scalar_lea.sflag [#allocation3], 2
    %p229 = scmp.lt.u32.totalorder 1, 8
    %p230 = pneg %p229
    // Predicated region
    $region120: #{tpu_custom_call.1} parent=1 // pred_check
      _
    $region121: #{tpu_custom_call.1} parent=1 // pred_check_branch
      %232 = sbr.rel (%p229) target = $region123
    $region122: #{tpu_custom_call.1} parent=1 // pred_region
      %s261 = sand.u32 1, 7
      %p262 = scmp.eq.s32.totalorder %s261, 0
      %p263 = pneg %p262
      // Predicated region
      $region135: #{tpu_custom_call.1} parent=122 // pred_check
        _
      $region136: #{tpu_custom_call.1} parent=122 // pred_check_branch
        %265 = sbr.rel (%p262) target = $region138
      $region137: #{tpu_custom_call.1} parent=122 // pred_region
        %s266 = sand.u32 1, 7
        %s267 = ssub.s32 1, %s266
        %s268 = scalar_lea.vmem %s225, %s267
        %s269 = ssub.s32 1, %s266
        %s270 = scalar_lea.vmem %s226, %s269 [#allocation2]
        loop: start=0, step=1, limit=1
        $region139: #{tpu_custom_call.1} parent=137 // loop_pre_header
          _
        $region140: #{tpu_custom_call.1} parent=137 // loop_header
          %s272 = sphi 0, %s276
          %p273 = scmp.ge.s32.totalorder %s272, 1
          %s277 = sphi %s225, %s225
          %s278 = sphi %s226, %s226
        $region141: #{tpu_custom_call.1} parent=137 // loop_header_branch
          %275 = sbr.rel (%p273) target = $region145
        $region142: #{tpu_custom_call.1} parent=137 // loop_body
          _
        $region143: #{tpu_custom_call.1} parent=137 // loop_footer
          %s276 = sadd.s32 1, %s272
        $region144: #{tpu_custom_call.1} parent=137 // loop_footer_branch
          %271 = sbr.rel target = $region140
        $region145: #{tpu_custom_call.1} parent=137 // loop_exit
          _
        %s279 = sshllo.u32 0, %s266
        loop: start=0, step=1, limit=1
        $region146: #{tpu_custom_call.1} parent=137 // loop_pre_header
          _
        $region147: #{tpu_custom_call.1} parent=137 // loop_header
          %s281 = sphi 0, %s285
          %p282 = scmp.ge.s32.totalorder %s281, 1
          %s286 = sphi %s268, %s268
          %s287 = sphi %s270, %s270
        $region148: #{tpu_custom_call.1} parent=137 // loop_header_branch
          %284 = sbr.rel (%p282) target = $region152
        $region149: #{tpu_custom_call.1} parent=137 // loop_body
          %v288 = vld [vmem:[%s286] sm:%s279]
          %289 = vst [vmem:[%s287] sm:%s279] %v288
          %v290 = vld [vmem:[%s286 + $0x8] sm:%s279]
          %291 = vst [vmem:[%s287 + $0x2] sm:%s279] %v290
          %v292 = vld [vmem:[%s286 + $0x10] sm:%s279]
          %293 = vst [vmem:[%s287 + $0x4] sm:%s279] %v292
          %v294 = vld [vmem:[%s286 + $0x18] sm:%s279]
          %295 = vst [vmem:[%s287 + $0x6] sm:%s279] %v294
          %v296 = vld [vmem:[%s286 + $0x20] sm:%s279]
          %297 = vst [vmem:[%s287 + $0x8] sm:%s279] %v296
          %v298 = vld [vmem:[%s286 + $0x28] sm:%s279]
          %299 = vst [vmem:[%s287 + $0xa] sm:%s279] %v298
          %v300 = vld [vmem:[%s286 + $0x30] sm:%s279]
          %301 = vst [vmem:[%s287 + $0xc] sm:%s279] %v300
          %v302 = vld [vmem:[%s286 + $0x38] sm:%s279]
          %303 = vst [vmem:[%s287 + $0xe] sm:%s279] %v302
        $region150: #{tpu_custom_call.1} parent=137 // loop_footer
          %s285 = sadd.s32 1, %s281
        $region151: #{tpu_custom_call.1} parent=137 // loop_footer_branch
          %280 = sbr.rel target = $region147
        $region152: #{tpu_custom_call.1} parent=137 // loop_exit
          _
      $region138: #{tpu_custom_call.1} parent=122 // pred_fallthru
        _
    $region123: #{tpu_custom_call.1} parent=1 // pred_fallthru
      _
    // Predicated region
    $region124: #{tpu_custom_call.1} parent=1 // pred_check
      %p233 = pneg %p229
    $region125: #{tpu_custom_call.1} parent=1 // pred_check_branch
      %235 = sbr.rel (%p233) target = $region127
    $region126: #{tpu_custom_call.1} parent=1 // pred_region
      %s236 = sshllo.u32 0, 1
      loop: start=0, step=1, limit=1
      $region128: #{tpu_custom_call.1} parent=126 // loop_pre_header
        _
      $region129: #{tpu_custom_call.1} parent=126 // loop_header
        %s238 = sphi 0, %s242
        %p239 = scmp.ge.s32.totalorder %s238, 1
        %s243 = sphi %s225, %s225
        %s244 = sphi %s226, %s226
      $region130: #{tpu_custom_call.1} parent=126 // loop_header_branch
        %241 = sbr.rel (%p239) target = $region134
      $region131: #{tpu_custom_call.1} parent=126 // loop_body
        %v245 = vld [vmem:[%s243] sm:%s236]
        %246 = vst [vmem:[%s244] sm:%s236] %v245
        %v247 = vld [vmem:[%s243 + $0x8] sm:%s236]
        %248 = vst [vmem:[%s244 + $0x2] sm:%s236] %v247
        %v249 = vld [vmem:[%s243 + $0x10] sm:%s236]
        %250 = vst [vmem:[%s244 + $0x4] sm:%s236] %v249
        %v251 = vld [vmem:[%s243 + $0x18] sm:%s236]
        %252 = vst [vmem:[%s244 + $0x6] sm:%s236] %v251
        %v253 = vld [vmem:[%s243 + $0x20] sm:%s236]
        %254 = vst [vmem:[%s244 + $0x8] sm:%s236] %v253
        %v255 = vld [vmem:[%s243 + $0x28] sm:%s236]
        %256 = vst [vmem:[%s244 + $0xa] sm:%s236] %v255
        %v257 = vld [vmem:[%s243 + $0x30] sm:%s236]
        %258 = vst [vmem:[%s244 + $0xc] sm:%s236] %v257
        %v259 = vld [vmem:[%s243 + $0x38] sm:%s236]
        %260 = vst [vmem:[%s244 + $0xe] sm:%s236] %v259
      $region132: #{tpu_custom_call.1} parent=126 // loop_footer
        %s242 = sadd.s32 1, %s238
      $region133: #{tpu_custom_call.1} parent=126 // loop_footer_branch
        %237 = sbr.rel target = $region129
      $region134: #{tpu_custom_call.1} parent=126 // loop_exit
        _
    $region127: #{tpu_custom_call.1} parent=1 // pred_fallthru
      _
    // Predicated region
    $region153: #{tpu_custom_call.1} parent=1 // pred_check
      _
    $region154: #{tpu_custom_call.1} parent=1 // pred_check_branch
      %306 = sbr.rel (0) target = $region156
    $region155: #{tpu_custom_call.1} parent=1 // pred_region
      %307 = vsyncadd %s227, 128
    $region156: #{tpu_custom_call.1} parent=1 // pred_fallthru
      _
    %s308 = scalar_lea.vmem %s2, 903
    %s309 = scalar_lea.vmem [#allocation2], 48
    %s310 = scalar_lea.sflag [#allocation3], 3
    %p312 = scmp.lt.u32.totalorder 1, 8
    %p313 = pneg %p312
    // Predicated region
    $region157: #{tpu_custom_call.1} parent=1 // pred_check
      _
    $region158: #{tpu_custom_call.1} parent=1 // pred_check_branch
      %315 = sbr.rel (%p312) target = $region160
    $region159: #{tpu_custom_call.1} parent=1 // pred_region
      %s344 = sand.u32 1, 7
      %p345 = scmp.eq.s32.totalorder %s344, 0
      %p346 = pneg %p345
      // Predicated region
      $region172: #{tpu_custom_call.1} parent=159 // pred_check
        _
      $region173: #{tpu_custom_call.1} parent=159 // pred_check_branch
        %348 = sbr.rel (%p345) target = $region175
      $region174: #{tpu_custom_call.1} parent=159 // pred_region
        %s349 = sand.u32 1, 7
        %s350 = ssub.s32 1, %s349
        %s351 = scalar_lea.vmem %s308, %s350
        %s352 = ssub.s32 1, %s349
        %s353 = scalar_lea.vmem %s309, %s352 [#allocation2]
        loop: start=0, step=1, limit=1
        $region176: #{tpu_custom_call.1} parent=174 // loop_pre_header
          _
        $region177: #{tpu_custom_call.1} parent=174 // loop_header
          %s355 = sphi 0, %s359
          %p356 = scmp.ge.s32.totalorder %s355, 1
          %s360 = sphi %s308, %s308
          %s361 = sphi %s309, %s309
        $region178: #{tpu_custom_call.1} parent=174 // loop_header_branch
          %358 = sbr.rel (%p356) target = $region182
        $region179: #{tpu_custom_call.1} parent=174 // loop_body
          _
        $region180: #{tpu_custom_call.1} parent=174 // loop_footer
          %s359 = sadd.s32 1, %s355
        $region181: #{tpu_custom_call.1} parent=174 // loop_footer_branch
          %354 = sbr.rel target = $region177
        $region182: #{tpu_custom_call.1} parent=174 // loop_exit
          _
        %s362 = sshllo.u32 0, %s349
        loop: start=0, step=1, limit=1
        $region183: #{tpu_custom_call.1} parent=174 // loop_pre_header
          _
        $region184: #{tpu_custom_call.1} parent=174 // loop_header
          %s364 = sphi 0, %s368
          %p365 = scmp.ge.s32.totalorder %s364, 1
          %s369 = sphi %s351, %s351
          %s370 = sphi %s353, %s353
        $region185: #{tpu_custom_call.1} parent=174 // loop_header_branch
          %367 = sbr.rel (%p365) target = $region189
        $region186: #{tpu_custom_call.1} parent=174 // loop_body
          %v371 = vld [vmem:[%s369] sm:%s362]
          %372 = vst [vmem:[%s370] sm:%s362] %v371
          %v373 = vld [vmem:[%s369 + $0x8] sm:%s362]
          %374 = vst [vmem:[%s370 + $0x2] sm:%s362] %v373
          %v375 = vld [vmem:[%s369 + $0x10] sm:%s362]
          %376 = vst [vmem:[%s370 + $0x4] sm:%s362] %v375
          %v377 = vld [vmem:[%s369 + $0x18] sm:%s362]
          %378 = vst [vmem:[%s370 + $0x6] sm:%s362] %v377
          %v379 = vld [vmem:[%s369 + $0x20] sm:%s362]
          %380 = vst [vmem:[%s370 + $0x8] sm:%s362] %v379
          %v381 = vld [vmem:[%s369 + $0x28] sm:%s362]
          %382 = vst [vmem:[%s370 + $0xa] sm:%s362] %v381
          %v383 = vld [vmem:[%s369 + $0x30] sm:%s362]
          %384 = vst [vmem:[%s370 + $0xc] sm:%s362] %v383
          %v385 = vld [vmem:[%s369 + $0x38] sm:%s362]
          %386 = vst [vmem:[%s370 + $0xe] sm:%s362] %v385
        $region187: #{tpu_custom_call.1} parent=174 // loop_footer
          %s368 = sadd.s32 1, %s364
        $region188: #{tpu_custom_call.1} parent=174 // loop_footer_branch
          %363 = sbr.rel target = $region184
        $region189: #{tpu_custom_call.1} parent=174 // loop_exit
          _
      $region175: #{tpu_custom_call.1} parent=159 // pred_fallthru
        _
    $region160: #{tpu_custom_call.1} parent=1 // pred_fallthru
      _
    // Predicated region
    $region161: #{tpu_custom_call.1} parent=1 // pred_check
      %p316 = pneg %p312
    $region162: #{tpu_custom_call.1} parent=1 // pred_check_branch
      %318 = sbr.rel (%p316) target = $region164
    $region163: #{tpu_custom_call.1} parent=1 // pred_region
      %s319 = sshllo.u32 0, 1
      loop: start=0, step=1, limit=1
      $region165: #{tpu_custom_call.1} parent=163 // loop_pre_header
        _
      $region166: #{tpu_custom_call.1} parent=163 // loop_header
        %s321 = sphi 0, %s325
        %p322 = scmp.ge.s32.totalorder %s321, 1
        %s326 = sphi %s308, %s308
        %s327 = sphi %s309, %s309
      $region167: #{tpu_custom_call.1} parent=163 // loop_header_branch
        %324 = sbr.rel (%p322) target = $region171
      $region168: #{tpu_custom_call.1} parent=163 // loop_body
        %v328 = vld [vmem:[%s326] sm:%s319]
        %329 = vst [vmem:[%s327] sm:%s319] %v328
        %v330 = vld [vmem:[%s326 + $0x8] sm:%s319]
        %331 = vst [vmem:[%s327 + $0x2] sm:%s319] %v330
        %v332 = vld [vmem:[%s326 + $0x10] sm:%s319]
        %333 = vst [vmem:[%s327 + $0x4] sm:%s319] %v332
        %v334 = vld [vmem:[%s326 + $0x18] sm:%s319]
        %335 = vst [vmem:[%s327 + $0x6] sm:%s319] %v334
        %v336 = vld [vmem:[%s326 + $0x20] sm:%s319]
        %337 = vst [vmem:[%s327 + $0x8] sm:%s319] %v336
        %v338 = vld [vmem:[%s326 + $0x28] sm:%s319]
        %339 = vst [vmem:[%s327 + $0xa] sm:%s319] %v338
        %v340 = vld [vmem:[%s326 + $0x30] sm:%s319]
        %341 = vst [vmem:[%s327 + $0xc] sm:%s319] %v340
        %v342 = vld [vmem:[%s326 + $0x38] sm:%s319]
        %343 = vst [vmem:[%s327 + $0xe] sm:%s319] %v342
      $region169: #{tpu_custom_call.1} parent=163 // loop_footer
        %s325 = sadd.s32 1, %s321
      $region170: #{tpu_custom_call.1} parent=163 // loop_footer_branch
        %320 = sbr.rel target = $region166
      $region171: #{tpu_custom_call.1} parent=163 // loop_exit
        _
    $region164: #{tpu_custom_call.1} parent=1 // pred_fallthru
      _
    // Predicated region
    $region190: #{tpu_custom_call.1} parent=1 // pred_check
      _
    $region191: #{tpu_custom_call.1} parent=1 // pred_check_branch
      %389 = sbr.rel (0) target = $region193
    $region192: #{tpu_custom_call.1} parent=1 // pred_region
      %390 = vsyncadd %s310, 128
    $region193: #{tpu_custom_call.1} parent=1 // pred_fallthru
      _
    %s391 = scalar_lea.vmem %s2, 1792
    %s392 = scalar_lea.vmem [#allocation2], 1
    %s393 = scalar_lea.sflag [#allocation3], 4
    %p395 = scmp.lt.u32.totalorder 1, 8
    %p396 = pneg %p395
    // Predicated region
    $region194: #{tpu_custom_call.1} parent=1 // pred_check
      _
    $region195: #{tpu_custom_call.1} parent=1 // pred_check_branch
      %398 = sbr.rel (%p395) target = $region197
    $region196: #{tpu_custom_call.1} parent=1 // pred_region
      %s427 = sand.u32 1, 7
      %p428 = scmp.eq.s32.totalorder %s427, 0
      %p429 = pneg %p428
      // Predicated region
      $region209: #{tpu_custom_call.1} parent=196 // pred_check
        _
      $region210: #{tpu_custom_call.1} parent=196 // pred_check_branch
        %431 = sbr.rel (%p428) target = $region212
      $region211: #{tpu_custom_call.1} parent=196 // pred_region
        %s432 = sand.u32 1, 7
        %s433 = ssub.s32 1, %s432
        %s434 = scalar_lea.vmem %s391, %s433
        %s435 = ssub.s32 1, %s432
        %s436 = scalar_lea.vmem %s392, %s435 [#allocation2]
        loop: start=0, step=1, limit=1
        $region213: #{tpu_custom_call.1} parent=211 // loop_pre_header
          _
        $region214: #{tpu_custom_call.1} parent=211 // loop_header
          %s438 = sphi 0, %s442
          %p439 = scmp.ge.s32.totalorder %s438, 1
          %s443 = sphi %s391, %s391
          %s444 = sphi %s392, %s392
        $region215: #{tpu_custom_call.1} parent=211 // loop_header_branch
          %441 = sbr.rel (%p439) target = $region219
        $region216: #{tpu_custom_call.1} parent=211 // loop_body
          _
        $region217: #{tpu_custom_call.1} parent=211 // loop_footer
          %s442 = sadd.s32 1, %s438
        $region218: #{tpu_custom_call.1} parent=211 // loop_footer_branch
          %437 = sbr.rel target = $region214
        $region219: #{tpu_custom_call.1} parent=211 // loop_exit
          _
        %s445 = sshllo.u32 0, %s432
        loop: start=0, step=1, limit=1
        $region220: #{tpu_custom_call.1} parent=211 // loop_pre_header
          _
        $region221: #{tpu_custom_call.1} parent=211 // loop_header
          %s447 = sphi 0, %s451
          %p448 = scmp.ge.s32.totalorder %s447, 1
          %s452 = sphi %s434, %s434
          %s453 = sphi %s436, %s436
        $region222: #{tpu_custom_call.1} parent=211 // loop_header_branch
          %450 = sbr.rel (%p448) target = $region226
        $region223: #{tpu_custom_call.1} parent=211 // loop_body
          %v454 = vld [vmem:[%s452] sm:%s445]
          %455 = vst [vmem:[%s453] sm:%s445] %v454
          %v456 = vld [vmem:[%s452 + $0x8] sm:%s445]
          %457 = vst [vmem:[%s453 + $0x2] sm:%s445] %v456
          %v458 = vld [vmem:[%s452 + $0x10] sm:%s445]
          %459 = vst [vmem:[%s453 + $0x4] sm:%s445] %v458
          %v460 = vld [vmem:[%s452 + $0x18] sm:%s445]
          %461 = vst [vmem:[%s453 + $0x6] sm:%s445] %v460
          %v462 = vld [vmem:[%s452 + $0x20] sm:%s445]
          %463 = vst [vmem:[%s453 + $0x8] sm:%s445] %v462
          %v464 = vld [vmem:[%s452 + $0x28] sm:%s445]
          %465 = vst [vmem:[%s453 + $0xa] sm:%s445] %v464
          %v466 = vld [vmem:[%s452 + $0x30] sm:%s445]
          %467 = vst [vmem:[%s453 + $0xc] sm:%s445] %v466
          %v468 = vld [vmem:[%s452 + $0x38] sm:%s445]
          %469 = vst [vmem:[%s453 + $0xe] sm:%s445] %v468
        $region224: #{tpu_custom_call.1} parent=211 // loop_footer
          %s451 = sadd.s32 1, %s447
        $region225: #{tpu_custom_call.1} parent=211 // loop_footer_branch
          %446 = sbr.rel target = $region221
        $region226: #{tpu_custom_call.1} parent=211 // loop_exit
          _
      $region212: #{tpu_custom_call.1} parent=196 // pred_fallthru
        _
    $region197: #{tpu_custom_call.1} parent=1 // pred_fallthru
      _
    // Predicated region
    $region198: #{tpu_custom_call.1} parent=1 // pred_check
      %p399 = pneg %p395
    $region199: #{tpu_custom_call.1} parent=1 // pred_check_branch
      %401 = sbr.rel (%p399) target = $region201
    $region200: #{tpu_custom_call.1} parent=1 // pred_region
      %s402 = sshllo.u32 0, 1
      loop: start=0, step=1, limit=1
      $region202: #{tpu_custom_call.1} parent=200 // loop_pre_header
        _
      $region203: #{tpu_custom_call.1} parent=200 // loop_header
        %s404 = sphi 0, %s408
        %p405 = scmp.ge.s32.totalorder %s404, 1
        %s409 = sphi %s391, %s391
        %s410 = sphi %s392, %s392
      $region204: #{tpu_custom_call.1} parent=200 // loop_header_branch
        %407 = sbr.rel (%p405) target = $region208
      $region205: #{tpu_custom_call.1} parent=200 // loop_body
        %v411 = vld [vmem:[%s409] sm:%s402]
        %412 = vst [vmem:[%s410] sm:%s402] %v411
        %v413 = vld [vmem:[%s409 + $0x8] sm:%s402]
        %414 = vst [vmem:[%s410 + $0x2] sm:%s402] %v413
        %v415 = vld [vmem:[%s409 + $0x10] sm:%s402]
        %416 = vst [vmem:[%s410 + $0x4] sm:%s402] %v415
        %v417 = vld [vmem:[%s409 + $0x18] sm:%s402]
        %418 = vst [vmem:[%s410 + $0x6] sm:%s402] %v417
        %v419 = vld [vmem:[%s409 + $0x20] sm:%s402]
        %420 = vst [vmem:[%s410 + $0x8] sm:%s402] %v419
        %v421 = vld [vmem:[%s409 + $0x28] sm:%s402]
        %422 = vst [vmem:[%s410 + $0xa] sm:%s402] %v421
        %v423 = vld [vmem:[%s409 + $0x30] sm:%s402]
        %424 = vst [vmem:[%s410 + $0xc] sm:%s402] %v423
        %v425 = vld [vmem:[%s409 + $0x38] sm:%s402]
        %426 = vst [vmem:[%s410 + $0xe] sm:%s402] %v425
      $region206: #{tpu_custom_call.1} parent=200 // loop_footer
        %s408 = sadd.s32 1, %s404
      $region207: #{tpu_custom_call.1} parent=200 // loop_footer_branch
        %403 = sbr.rel target = $region203
      $region208: #{tpu_custom_call.1} parent=200 // loop_exit
        _
    $region201: #{tpu_custom_call.1} parent=1 // pred_fallthru
      _
    // Predicated region
    $region227: #{tpu_custom_call.1} parent=1 // pred_check
      _
    $region228: #{tpu_custom_call.1} parent=1 // pred_check_branch
      %472 = sbr.rel (0) target = $region230
    $region229: #{tpu_custom_call.1} parent=1 // pred_region
      %473 = vsyncadd %s393, 128
    $region230: #{tpu_custom_call.1} parent=1 // pred_fallthru
      _
    %s474 = scalar_lea.vmem %s2, 1799
    %s475 = scalar_lea.vmem [#allocation2], 17
    %s476 = scalar_lea.sflag [#allocation3], 5
    %p478 = scmp.lt.u32.totalorder 1, 8
    %p479 = pneg %p478
    // Predicated region
    $region231: #{tpu_custom_call.1} parent=1 // pred_check
      _
    $region232: #{tpu_custom_call.1} parent=1 // pred_check_branch
      %481 = sbr.rel (%p478) target = $region234
    $region233: #{tpu_custom_call.1} parent=1 // pred_region
      %s510 = sand.u32 1, 7
      %p511 = scmp.eq.s32.totalorder %s510, 0
      %p512 = pneg %p511
      // Predicated region
      $region246: #{tpu_custom_call.1} parent=233 // pred_check
        _
      $region247: #{tpu_custom_call.1} parent=233 // pred_check_branch
        %514 = sbr.rel (%p511) target = $region249
      $region248: #{tpu_custom_call.1} parent=233 // pred_region
        %s515 = sand.u32 1, 7
        %s516 = ssub.s32 1, %s515
        %s517 = scalar_lea.vmem %s474, %s516
        %s518 = ssub.s32 1, %s515
        %s519 = scalar_lea.vmem %s475, %s518 [#allocation2]
        loop: start=0, step=1, limit=1
        $region250: #{tpu_custom_call.1} parent=248 // loop_pre_header
          _
        $region251: #{tpu_custom_call.1} parent=248 // loop_header
          %s521 = sphi 0, %s525
          %p522 = scmp.ge.s32.totalorder %s521, 1
          %s526 = sphi %s474, %s474
          %s527 = sphi %s475, %s475
        $region252: #{tpu_custom_call.1} parent=248 // loop_header_branch
          %524 = sbr.rel (%p522) target = $region256
        $region253: #{tpu_custom_call.1} parent=248 // loop_body
          _
        $region254: #{tpu_custom_call.1} parent=248 // loop_footer
          %s525 = sadd.s32 1, %s521
        $region255: #{tpu_custom_call.1} parent=248 // loop_footer_branch
          %520 = sbr.rel target = $region251
        $region256: #{tpu_custom_call.1} parent=248 // loop_exit
          _
        %s528 = sshllo.u32 0, %s515
        loop: start=0, step=1, limit=1
        $region257: #{tpu_custom_call.1} parent=248 // loop_pre_header
          _
        $region258: #{tpu_custom_call.1} parent=248 // loop_header
          %s530 = sphi 0, %s534
          %p531 = scmp.ge.s32.totalorder %s530, 1
          %s535 = sphi %s517, %s517
          %s536 = sphi %s519, %s519
        $region259: #{tpu_custom_call.1} parent=248 // loop_header_branch
          %533 = sbr.rel (%p531) target = $region263
        $region260: #{tpu_custom_call.1} parent=248 // loop_body
          %v537 = vld [vmem:[%s535] sm:%s528]
          %538 = vst [vmem:[%s536] sm:%s528] %v537
          %v539 = vld [vmem:[%s535 + $0x8] sm:%s528]
          %540 = vst [vmem:[%s536 + $0x2] sm:%s528] %v539
          %v541 = vld [vmem:[%s535 + $0x10] sm:%s528]
          %542 = vst [vmem:[%s536 + $0x4] sm:%s528] %v541
          %v543 = vld [vmem:[%s535 + $0x18] sm:%s528]
          %544 = vst [vmem:[%s536 + $0x6] sm:%s528] %v543
          %v545 = vld [vmem:[%s535 + $0x20] sm:%s528]
          %546 = vst [vmem:[%s536 + $0x8] sm:%s528] %v545
          %v547 = vld [vmem:[%s535 + $0x28] sm:%s528]
          %548 = vst [vmem:[%s536 + $0xa] sm:%s528] %v547
          %v549 = vld [vmem:[%s535 + $0x30] sm:%s528]
          %550 = vst [vmem:[%s536 + $0xc] sm:%s528] %v549
          %v551 = vld [vmem:[%s535 + $0x38] sm:%s528]
          %552 = vst [vmem:[%s536 + $0xe] sm:%s528] %v551
        $region261: #{tpu_custom_call.1} parent=248 // loop_footer
          %s534 = sadd.s32 1, %s530
        $region262: #{tpu_custom_call.1} parent=248 // loop_footer_branch
          %529 = sbr.rel target = $region258
        $region263: #{tpu_custom_call.1} parent=248 // loop_exit
          _
      $region249: #{tpu_custom_call.1} parent=233 // pred_fallthru
        _
    $region234: #{tpu_custom_call.1} parent=1 // pred_fallthru
      _
    // Predicated region
    $region235: #{tpu_custom_call.1} parent=1 // pred_check
      %p482 = pneg %p478
    $region236: #{tpu_custom_call.1} parent=1 // pred_check_branch
      %484 = sbr.rel (%p482) target = $region238
    $region237: #{tpu_custom_call.1} parent=1 // pred_region
      %s485 = sshllo.u32 0, 1
      loop: start=0, step=1, limit=1
      $region239: #{tpu_custom_call.1} parent=237 // loop_pre_header
        _
      $region240: #{tpu_custom_call.1} parent=237 // loop_header
        %s487 = sphi 0, %s491
        %p488 = scmp.ge.s32.totalorder %s487, 1
        %s492 = sphi %s474, %s474
        %s493 = sphi %s475, %s475
      $region241: #{tpu_custom_call.1} parent=237 // loop_header_branch
        %490 = sbr.rel (%p488) target = $region245
      $region242: #{tpu_custom_call.1} parent=237 // loop_body
        %v494 = vld [vmem:[%s492] sm:%s485]
        %495 = vst [vmem:[%s493] sm:%s485] %v494
        %v496 = vld [vmem:[%s492 + $0x8] sm:%s485]
        %497 = vst [vmem:[%s493 + $0x2] sm:%s485] %v496
        %v498 = vld [vmem:[%s492 + $0x10] sm:%s485]
        %499 = vst [vmem:[%s493 + $0x4] sm:%s485] %v498
        %v500 = vld [vmem:[%s492 + $0x18] sm:%s485]
        %501 = vst [vmem:[%s493 + $0x6] sm:%s485] %v500
        %v502 = vld [vmem:[%s492 + $0x20] sm:%s485]
        %503 = vst [vmem:[%s493 + $0x8] sm:%s485] %v502
        %v504 = vld [vmem:[%s492 + $0x28] sm:%s485]
        %505 = vst [vmem:[%s493 + $0xa] sm:%s485] %v504
        %v506 = vld [vmem:[%s492 + $0x30] sm:%s485]
        %507 = vst [vmem:[%s493 + $0xc] sm:%s485] %v506
        %v508 = vld [vmem:[%s492 + $0x38] sm:%s485]
        %509 = vst [vmem:[%s493 + $0xe] sm:%s485] %v508
      $region243: #{tpu_custom_call.1} parent=237 // loop_footer
        %s491 = sadd.s32 1, %s487
      $region244: #{tpu_custom_call.1} parent=237 // loop_footer_branch
        %486 = sbr.rel target = $region240
      $region245: #{tpu_custom_call.1} parent=237 // loop_exit
        _
    $region238: #{tpu_custom_call.1} parent=1 // pred_fallthru
      _
    // Predicated region
    $region264: #{tpu_custom_call.1} parent=1 // pred_check
      _
    $region265: #{tpu_custom_call.1} parent=1 // pred_check_branch
      %555 = sbr.rel (0) target = $region267
    $region266: #{tpu_custom_call.1} parent=1 // pred_region
      %556 = vsyncadd %s476, 128
    $region267: #{tpu_custom_call.1} parent=1 // pred_fallthru
      _
    %s557 = scalar_lea.vmem %s2, 2688
    %s558 = scalar_lea.vmem [#allocation2], 33
    %s559 = scalar_lea.sflag [#allocation3], 6
    %p561 = scmp.lt.u32.totalorder 1, 8
    %p562 = pneg %p561
    // Predicated region
    $region268: #{tpu_custom_call.1} parent=1 // pred_check
      _
    $region269: #{tpu_custom_call.1} parent=1 // pred_check_branch
      %564 = sbr.rel (%p561) target = $region271
    $region270: #{tpu_custom_call.1} parent=1 // pred_region
      %s593 = sand.u32 1, 7
      %p594 = scmp.eq.s32.totalorder %s593, 0
      %p595 = pneg %p594
      // Predicated region
      $region283: #{tpu_custom_call.1} parent=270 // pred_check
        _
      $region284: #{tpu_custom_call.1} parent=270 // pred_check_branch
        %597 = sbr.rel (%p594) target = $region286
      $region285: #{tpu_custom_call.1} parent=270 // pred_region
        %s598 = sand.u32 1, 7
        %s599 = ssub.s32 1, %s598
        %s600 = scalar_lea.vmem %s557, %s599
        %s601 = ssub.s32 1, %s598
        %s602 = scalar_lea.vmem %s558, %s601 [#allocation2]
        loop: start=0, step=1, limit=1
        $region287: #{tpu_custom_call.1} parent=285 // loop_pre_header
          _
        $region288: #{tpu_custom_call.1} parent=285 // loop_header
          %s604 = sphi 0, %s608
          %p605 = scmp.ge.s32.totalorder %s604, 1
          %s609 = sphi %s557, %s557
          %s610 = sphi %s558, %s558
        $region289: #{tpu_custom_call.1} parent=285 // loop_header_branch
          %607 = sbr.rel (%p605) target = $region293
        $region290: #{tpu_custom_call.1} parent=285 // loop_body
          _
        $region291: #{tpu_custom_call.1} parent=285 // loop_footer
          %s608 = sadd.s32 1, %s604
        $region292: #{tpu_custom_call.1} parent=285 // loop_footer_branch
          %603 = sbr.rel target = $region288
        $region293: #{tpu_custom_call.1} parent=285 // loop_exit
          _
        %s611 = sshllo.u32 0, %s598
        loop: start=0, step=1, limit=1
        $region294: #{tpu_custom_call.1} parent=285 // loop_pre_header
          _
        $region295: #{tpu_custom_call.1} parent=285 // loop_header
          %s613 = sphi 0, %s617
          %p614 = scmp.ge.s32.totalorder %s613, 1
          %s618 = sphi %s600, %s600
          %s619 = sphi %s602, %s602
        $region296: #{tpu_custom_call.1} parent=285 // loop_header_branch
          %616 = sbr.rel (%p614) target = $region300
        $region297: #{tpu_custom_call.1} parent=285 // loop_body
          %v620 = vld [vmem:[%s618] sm:%s611]
          %621 = vst [vmem:[%s619] sm:%s611] %v620
          %v622 = vld [vmem:[%s618 + $0x8] sm:%s611]
          %623 = vst [vmem:[%s619 + $0x2] sm:%s611] %v622
          %v624 = vld [vmem:[%s618 + $0x10] sm:%s611]
          %625 = vst [vmem:[%s619 + $0x4] sm:%s611] %v624
          %v626 = vld [vmem:[%s618 + $0x18] sm:%s611]
          %627 = vst [vmem:[%s619 + $0x6] sm:%s611] %v626
          %v628 = vld [vmem:[%s618 + $0x20] sm:%s611]
          %629 = vst [vmem:[%s619 + $0x8] sm:%s611] %v628
          %v630 = vld [vmem:[%s618 + $0x28] sm:%s611]
          %631 = vst [vmem:[%s619 + $0xa] sm:%s611] %v630
          %v632 = vld [vmem:[%s618 + $0x30] sm:%s611]
          %633 = vst [vmem:[%s619 + $0xc] sm:%s611] %v632
          %v634 = vld [vmem:[%s618 + $0x38] sm:%s611]
          %635 = vst [vmem:[%s619 + $0xe] sm:%s611] %v634
        $region298: #{tpu_custom_call.1} parent=285 // loop_footer
          %s617 = sadd.s32 1, %s613
        $region299: #{tpu_custom_call.1} parent=285 // loop_footer_branch
          %612 = sbr.rel target = $region295
        $region300: #{tpu_custom_call.1} parent=285 // loop_exit
          _
      $region286: #{tpu_custom_call.1} parent=270 // pred_fallthru
        _
    $region271: #{tpu_custom_call.1} parent=1 // pred_fallthru
      _
    // Predicated region
    $region272: #{tpu_custom_call.1} parent=1 // pred_check
      %p565 = pneg %p561
    $region273: #{tpu_custom_call.1} parent=1 // pred_check_branch
      %567 = sbr.rel (%p565) target = $region275
    $region274: #{tpu_custom_call.1} parent=1 // pred_region
      %s568 = sshllo.u32 0, 1
      loop: start=0, step=1, limit=1
      $region276: #{tpu_custom_call.1} parent=274 // loop_pre_header
        _
      $region277: #{tpu_custom_call.1} parent=274 // loop_header
        %s570 = sphi 0, %s574
        %p571 = scmp.ge.s32.totalorder %s570, 1
        %s575 = sphi %s557, %s557
        %s576 = sphi %s558, %s558
      $region278: #{tpu_custom_call.1} parent=274 // loop_header_branch
        %573 = sbr.rel (%p571) target = $region282
      $region279: #{tpu_custom_call.1} parent=274 // loop_body
        %v577 = vld [vmem:[%s575] sm:%s568]
        %578 = vst [vmem:[%s576] sm:%s568] %v577
        %v579 = vld [vmem:[%s575 + $0x8] sm:%s568]
        %580 = vst [vmem:[%s576 + $0x2] sm:%s568] %v579
        %v581 = vld [vmem:[%s575 + $0x10] sm:%s568]
        %582 = vst [vmem:[%s576 + $0x4] sm:%s568] %v581
        %v583 = vld [vmem:[%s575 + $0x18] sm:%s568]
        %584 = vst [vmem:[%s576 + $0x6] sm:%s568] %v583
        %v585 = vld [vmem:[%s575 + $0x20] sm:%s568]
        %586 = vst [vmem:[%s576 + $0x8] sm:%s568] %v585
        %v587 = vld [vmem:[%s575 + $0x28] sm:%s568]
        %588 = vst [vmem:[%s576 + $0xa] sm:%s568] %v587
        %v589 = vld [vmem:[%s575 + $0x30] sm:%s568]
        %590 = vst [vmem:[%s576 + $0xc] sm:%s568] %v589
        %v591 = vld [vmem:[%s575 + $0x38] sm:%s568]
        %592 = vst [vmem:[%s576 + $0xe] sm:%s568] %v591
      $region280: #{tpu_custom_call.1} parent=274 // loop_footer
        %s574 = sadd.s32 1, %s570
      $region281: #{tpu_custom_call.1} parent=274 // loop_footer_branch
        %569 = sbr.rel target = $region277
      $region282: #{tpu_custom_call.1} parent=274 // loop_exit
        _
    $region275: #{tpu_custom_call.1} parent=1 // pred_fallthru
      _
    // Predicated region
    $region301: #{tpu_custom_call.1} parent=1 // pred_check
      _
    $region302: #{tpu_custom_call.1} parent=1 // pred_check_branch
      %638 = sbr.rel (0) target = $region304
    $region303: #{tpu_custom_call.1} parent=1 // pred_region
      %639 = vsyncadd %s559, 128
    $region304: #{tpu_custom_call.1} parent=1 // pred_fallthru
      _
    %s640 = scalar_lea.vmem %s2, 2695
    %s641 = scalar_lea.vmem [#allocation2], 49
    %s642 = scalar_lea.sflag [#allocation3], 7
    %p644 = scmp.lt.u32.totalorder 1, 8
    %p645 = pneg %p644
    // Predicated region
    $region305: #{tpu_custom_call.1} parent=1 // pred_check
      _
    $region306: #{tpu_custom_call.1} parent=1 // pred_check_branch
      %647 = sbr.rel (%p644) target = $region308
    $region307: #{tpu_custom_call.1} parent=1 // pred_region
      %s676 = sand.u32 1, 7
      %p677 = scmp.eq.s32.totalorder %s676, 0
      %p678 = pneg %p677
      // Predicated region
      $region320: #{tpu_custom_call.1} parent=307 // pred_check
        _
      $region321: #{tpu_custom_call.1} parent=307 // pred_check_branch
        %680 = sbr.rel (%p677) target = $region323
      $region322: #{tpu_custom_call.1} parent=307 // pred_region
        %s681 = sand.u32 1, 7
        %s682 = ssub.s32 1, %s681
        %s683 = scalar_lea.vmem %s640, %s682
        %s684 = ssub.s32 1, %s681
        %s685 = scalar_lea.vmem %s641, %s684 [#allocation2]
        loop: start=0, step=1, limit=1
        $region324: #{tpu_custom_call.1} parent=322 // loop_pre_header
          _
        $region325: #{tpu_custom_call.1} parent=322 // loop_header
          %s687 = sphi 0, %s691
          %p688 = scmp.ge.s32.totalorder %s687, 1
          %s692 = sphi %s640, %s640
          %s693 = sphi %s641, %s641
        $region326: #{tpu_custom_call.1} parent=322 // loop_header_branch
          %690 = sbr.rel (%p688) target = $region330
        $region327: #{tpu_custom_call.1} parent=322 // loop_body
          _
        $region328: #{tpu_custom_call.1} parent=322 // loop_footer
          %s691 = sadd.s32 1, %s687
        $region329: #{tpu_custom_call.1} parent=322 // loop_footer_branch
          %686 = sbr.rel target = $region325
        $region330: #{tpu_custom_call.1} parent=322 // loop_exit
          _
        %s694 = sshllo.u32 0, %s681
        loop: start=0, step=1, limit=1
        $region331: #{tpu_custom_call.1} parent=322 // loop_pre_header
          _
        $region332: #{tpu_custom_call.1} parent=322 // loop_header
          %s696 = sphi 0, %s700
          %p697 = scmp.ge.s32.totalorder %s696, 1
          %s701 = sphi %s683, %s683
          %s702 = sphi %s685, %s685
        $region333: #{tpu_custom_call.1} parent=322 // loop_header_branch
          %699 = sbr.rel (%p697) target = $region337
        $region334: #{tpu_custom_call.1} parent=322 // loop_body
          %v703 = vld [vmem:[%s701] sm:%s694]
          %704 = vst [vmem:[%s702] sm:%s694] %v703
          %v705 = vld [vmem:[%s701 + $0x8] sm:%s694]
          %706 = vst [vmem:[%s702 + $0x2] sm:%s694] %v705
          %v707 = vld [vmem:[%s701 + $0x10] sm:%s694]
          %708 = vst [vmem:[%s702 + $0x4] sm:%s694] %v707
          %v709 = vld [vmem:[%s701 + $0x18] sm:%s694]
          %710 = vst [vmem:[%s702 + $0x6] sm:%s694] %v709
          %v711 = vld [vmem:[%s701 + $0x20] sm:%s694]
          %712 = vst [vmem:[%s702 + $0x8] sm:%s694] %v711
          %v713 = vld [vmem:[%s701 + $0x28] sm:%s694]
          %714 = vst [vmem:[%s702 + $0xa] sm:%s694] %v713
          %v715 = vld [vmem:[%s701 + $0x30] sm:%s694]
          %716 = vst [vmem:[%s702 + $0xc] sm:%s694] %v715
          %v717 = vld [vmem:[%s701 + $0x38] sm:%s694]
          %718 = vst [vmem:[%s702 + $0xe] sm:%s694] %v717
        $region335: #{tpu_custom_call.1} parent=322 // loop_footer
          %s700 = sadd.s32 1, %s696
        $region336: #{tpu_custom_call.1} parent=322 // loop_footer_branch
          %695 = sbr.rel target = $region332
        $region337: #{tpu_custom_call.1} parent=322 // loop_exit
          _
      $region323: #{tpu_custom_call.1} parent=307 // pred_fallthru
        _
    $region308: #{tpu_custom_call.1} parent=1 // pred_fallthru
      _
    // Predicated region
    $region309: #{tpu_custom_call.1} parent=1 // pred_check
      %p648 = pneg %p644
    $region310: #{tpu_custom_call.1} parent=1 // pred_check_branch
      %650 = sbr.rel (%p648) target = $region312
    $region311: #{tpu_custom_call.1} parent=1 // pred_region
      %s651 = sshllo.u32 0, 1
      loop: start=0, step=1, limit=1
      $region313: #{tpu_custom_call.1} parent=311 // loop_pre_header
        _
      $region314: #{tpu_custom_call.1} parent=311 // loop_header
        %s653 = sphi 0, %s657
        %p654 = scmp.ge.s32.totalorder %s653, 1
        %s658 = sphi %s640, %s640
        %s659 = sphi %s641, %s641
      $region315: #{tpu_custom_call.1} parent=311 // loop_header_branch
        %656 = sbr.rel (%p654) target = $region319
      $region316: #{tpu_custom_call.1} parent=311 // loop_body
        %v660 = vld [vmem:[%s658] sm:%s651]
        %661 = vst [vmem:[%s659] sm:%s651] %v660
        %v662 = vld [vmem:[%s658 + $0x8] sm:%s651]
        %663 = vst [vmem:[%s659 + $0x2] sm:%s651] %v662
        %v664 = vld [vmem:[%s658 + $0x10] sm:%s651]
        %665 = vst [vmem:[%s659 + $0x4] sm:%s651] %v664
        %v666 = vld [vmem:[%s658 + $0x18] sm:%s651]
        %667 = vst [vmem:[%s659 + $0x6] sm:%s651] %v666
        %v668 = vld [vmem:[%s658 + $0x20] sm:%s651]
        %669 = vst [vmem:[%s659 + $0x8] sm:%s651] %v668
        %v670 = vld [vmem:[%s658 + $0x28] sm:%s651]
        %671 = vst [vmem:[%s659 + $0xa] sm:%s651] %v670
        %v672 = vld [vmem:[%s658 + $0x30] sm:%s651]
        %673 = vst [vmem:[%s659 + $0xc] sm:%s651] %v672
        %v674 = vld [vmem:[%s658 + $0x38] sm:%s651]
        %675 = vst [vmem:[%s659 + $0xe] sm:%s651] %v674
      $region317: #{tpu_custom_call.1} parent=311 // loop_footer
        %s657 = sadd.s32 1, %s653
      $region318: #{tpu_custom_call.1} parent=311 // loop_footer_branch
        %652 = sbr.rel target = $region314
      $region319: #{tpu_custom_call.1} parent=311 // loop_exit
        _
    $region312: #{tpu_custom_call.1} parent=1 // pred_fallthru
      _
    // Predicated region
    $region338: #{tpu_custom_call.1} parent=1 // pred_check
      _
    $region339: #{tpu_custom_call.1} parent=1 // pred_check_branch
      %721 = sbr.rel (0) target = $region341
    $region340: #{tpu_custom_call.1} parent=1 // pred_region
      %722 = vsyncadd %s642, 128
    $region341: #{tpu_custom_call.1} parent=1 // pred_fallthru
      _
    %s723 = sld [smem:[#allocation4]]
    %s724 = scalar_lea.vmem %s3, %s723
    %v725 = vld [vmem:[%s724] sm:$0x1]
    %s726 = sld [smem:[#allocation4 + $0x80]]
    %s727 = scalar_lea.vmem %s3, %s726
    %v728 = vld [vmem:[%s727] sm:$0x1]
    %v730 = vlaneseq
    %v731 = vshrl.u32 %v730, 7
    %v732 = vsub.s32 0, %v731
    %v733 = vrot.slane %v728, %v732
    %vm735 = vcmask 1040384
    %v736 = vsel %vm735, %v725, %v733
    %s737 = sld [smem:[#allocation4 + $0x1]]
    %s738 = scalar_lea.vmem %s3, %s737
    %v739 = vld [vmem:[%s738] sm:$0x1]
    %s740 = sld [smem:[#allocation4 + $0x81]]
    %s741 = scalar_lea.vmem %s3, %s740
    %v742 = vld [vmem:[%s741] sm:$0x1]
    %v744 = vlaneseq
    %v745 = vshrl.u32 %v744, 7
    %v746 = vsub.s32 0, %v745
    %v747 = vrot.slane %v742, %v746
    %v749 = vsel %vm735, %v739, %v747
    %s750 = sld [smem:[#allocation4 + $0x2]]
    %s751 = scalar_lea.vmem %s3, %s750
    %v752 = vld [vmem:[%s751] sm:$0x1]
    %s753 = sld [smem:[#allocation4 + $0x82]]
    %s754 = scalar_lea.vmem %s3, %s753
    %v755 = vld [vmem:[%s754] sm:$0x1]
    %v757 = vlaneseq
    %v758 = vshrl.u32 %v757, 7
    %v759 = vsub.s32 0, %v758
    %v760 = vrot.slane %v755, %v759
    %v762 = vsel %vm735, %v752, %v760
    %s763 = sld [smem:[#allocation4 + $0x3]]
    %s764 = scalar_lea.vmem %s3, %s763
    %v765 = vld [vmem:[%s764] sm:$0x1]
    %s766 = sld [smem:[#allocation4 + $0x83]]
    %s767 = scalar_lea.vmem %s3, %s766
    %v768 = vld [vmem:[%s767] sm:$0x1]
    %v770 = vlaneseq
    %v771 = vshrl.u32 %v770, 7
    %v772 = vsub.s32 0, %v771
    %v773 = vrot.slane %v768, %v772
    %v775 = vsel %vm735, %v765, %v773
    %s776 = sld [smem:[#allocation4 + $0x4]]
    %s777 = scalar_lea.vmem %s3, %s776
    %v778 = vld [vmem:[%s777] sm:$0x1]
    %s779 = sld [smem:[#allocation4 + $0x84]]
    %s780 = scalar_lea.vmem %s3, %s779
    %v781 = vld [vmem:[%s780] sm:$0x1]
    %v783 = vlaneseq
    %v784 = vshrl.u32 %v783, 7
    %v785 = vsub.s32 0, %v784
    %v786 = vrot.slane %v781, %v785
    %v788 = vsel %vm735, %v778, %v786
    %s789 = sld [smem:[#allocation4 + $0x5]]
    %s790 = scalar_lea.vmem %s3, %s789
    %v791 = vld [vmem:[%s790] sm:$0x1]
    %s792 = sld [smem:[#allocation4 + $0x85]]
    %s793 = scalar_lea.vmem %s3, %s792
    %v794 = vld [vmem:[%s793] sm:$0x1]
    %v796 = vlaneseq
    %v797 = vshrl.u32 %v796, 7
    %v798 = vsub.s32 0, %v797
    %v799 = vrot.slane %v794, %v798
    %v801 = vsel %vm735, %v791, %v799
    %s802 = sld [smem:[#allocation4 + $0x6]]
    %s803 = scalar_lea.vmem %s3, %s802
    %v804 = vld [vmem:[%s803] sm:$0x1]
    %s805 = sld [smem:[#allocation4 + $0x86]]
    %s806 = scalar_lea.vmem %s3, %s805
    %v807 = vld [vmem:[%s806] sm:$0x1]
    %v809 = vlaneseq
    %v810 = vshrl.u32 %v809, 7
    %v811 = vsub.s32 0, %v810
    %v812 = vrot.slane %v807, %v811
    %v814 = vsel %vm735, %v804, %v812
    %s815 = sld [smem:[#allocation4 + $0x7]]
    %s816 = scalar_lea.vmem %s3, %s815
    %v817 = vld [vmem:[%s816] sm:$0x1]
    %s818 = sld [smem:[#allocation4 + $0x87]]
    %s819 = scalar_lea.vmem %s3, %s818
    %v820 = vld [vmem:[%s819] sm:$0x1]
    %v822 = vlaneseq
    %v823 = vshrl.u32 %v822, 7
    %v824 = vsub.s32 0, %v823
    %v825 = vrot.slane %v820, %v824
    %v827 = vsel %vm735, %v817, %v825
    %s828 = sld [smem:[#allocation7]]
    %v829 = vstv %s828
    %s830 = sld [smem:[#allocation7 + $0x1]]
    %v831 = vstv %s830
    %v832 = vsel %vm735, %v829, %v831
    %v833 = vld [vmem:[%s4] sm:$0xf]
    %v834 = vld [vmem:[%s4 + $0x4] sm:$0xf]
    %v835 = vld [vmem:[%s4 + $0x8] sm:$0xf]
    %v836 = vld [vmem:[%s4 + $0xc] sm:$0xf]
    %v841 = vunpack.c.l.b16 %v833
    %v842 = vunpack.c.l.b16 %v834
    %v843 = vunpack.c.l.b16 %v835
    %v844 = vunpack.c.l.b16 %v836
    %v845 = vpack.c.b16 %v842, %v841
    %v846 = vpack.c.b16 %v844, %v843
    %vm849 = vcmask 261120
    %v851 = vsel %vm849, 0, 0
    %853 = vmatprep.subr.bf16.mxu0 0
    %854 = vmatpush1.bf16.msra.mxu0 %v845
    %855 = vmatprep.subr.bf16.mxu0 0
    %856 = vmatpush1.bf16.msra.mxu0 %v846
    %857 = vmatprep.subr.bf16.mxu0 0
    %858 = vmatpush1.bf16.msra.mxu0 0
    %859 = vmatprep.subr.bf16.mxu0 0
    %860 = vmatpush1.bf16.msra.mxu0 0
    %861 = vmatprep.subr.bf16.mxu0 0
    %862 = vmatpush1.bf16.msra.mxu0 0
    %863 = vmatprep.subr.bf16.mxu0 0
    %864 = vmatpush1.bf16.msra.mxu0 0
    %865 = vmatprep.subr.bf16.mxu0 0
    %866 = vmatpush1.bf16.msra.mxu0 0
    %867 = vmatprep.subr.bf16.mxu0 0
    %868 = vmatpush1.bf16.msra.mxu0 0
    %869 = vmatprep.subr.bf16.mxu0 0
    %870 = vmatpush1.bf16.msra.mxu0 0
    %871 = vmatprep.subr.bf16.mxu0 0
    %872 = vmatpush1.bf16.msra.mxu0 0
    %873 = vmatprep.subr.bf16.mxu0 0
    %874 = vmatpush1.bf16.msra.mxu0 0
    %875 = vmatprep.subr.bf16.mxu0 0
    %876 = vmatpush1.bf16.msra.mxu0 0
    %877 = vmatprep.subr.bf16.mxu0 0
    %878 = vmatpush1.bf16.msra.mxu0 0
    %879 = vmatprep.subr.bf16.mxu0 0
    %880 = vmatpush1.bf16.msra.mxu0 0
    %881 = vmatprep.subr.bf16.mxu0 0
    %882 = vmatpush1.bf16.msra.mxu0 0
    %883 = vmatprep.subr.bf16.mxu0 0
    %884 = vmatpush1.bf16.msra.mxu0 0
    %885 = vmatprep.mubr.bf16.mxu0 0
    %886 = vmatmul.mubr.bf16.gmra.mrb[0].mxu0 %v851
    %v887 = vpop.f32.mrb[0].mxu0
    %v888 = vadd.f32 0.0, %v887
    %v889 = vpop.f32.mrb[0].mxu0
    %v890 = vpop.f32.mrb[0].mxu0
    %v891 = vpop.f32.mrb[0].mxu0
    %892 = vdwg.mxu0
    %v893 = vadd.f32 %v736, %v888
    %v894 = vxor.u32 %v893, 2147483648
    %v895 = vmul.f32 %v894, 1.442695
    %v896 = vpow.pop %v895
    %v897 = vadd.f32 %v896, 1.0
    %v898 = vrcp.pop %v897
    %v899 = vmul.f32 1.0, %v898
    %v900 = vtanh.pop %v893
    %v901 = vmul.f32 %v899, 0.0
    %903 = vrot.lane.b32.xlu0 %v900, 64
    %v904 = vpop.permute.xlu0 %903
    %v906 = vmul.f32 %v899, %v904
    %908 = vrot.lane.b32.xlu0 %v906, 32
    %v909 = vpop.permute.xlu0 %908
    %v911 = vadd.f32 %v901, %v909
    %v912 = vtanh.pop %v911
    %914 = vrot.lane.b32.xlu0 %v912, 64
    %v915 = vpop.permute.xlu0 %914
    %v917 = vmul.f32 %v899, %v915
    %vm918 = vcmp.gt.s32.totalorder %v832, 0
    %v919 = vsel %vm918, 1, 0
    %920 = vset.pattern.permute.xlu0 0
    %921 = vperm.xlu0 %920, %v919
    %v922 = vpop.permute.xlu0 %921
    %vm923 = vcmp.eq.s32.totalorder %v922, 1
    %v924 = vsel %vm923, %v917, 0.0
    %v925 = vsel %vm923, %v911, 0.0
    %v926 = vpack.c.bf16 %v924, %v924
    %928 = vrot.lane.b32.xlu0 %v926, 32
    %v929 = vpop.permute.xlu0 %928
    %v931 = vsel %vm849, %v929, 0
    %933 = vmatprep.subr.bf16.mxu0 0
    %934 = vmatpush1.bf16.msra.mxu0 %v845
    %935 = vmatprep.subr.bf16.mxu0 0
    %936 = vmatpush1.bf16.msra.mxu0 %v846
    %937 = vmatprep.subr.bf16.mxu0 0
    %938 = vmatpush1.bf16.msra.mxu0 0
    %939 = vmatprep.subr.bf16.mxu0 0
    %940 = vmatpush1.bf16.msra.mxu0 0
    %941 = vmatprep.subr.bf16.mxu0 0
    %942 = vmatpush1.bf16.msra.mxu0 0
    %943 = vmatprep.subr.bf16.mxu0 0
    %944 = vmatpush1.bf16.msra.mxu0 0
    %945 = vmatprep.subr.bf16.mxu0 0
    %946 = vmatpush1.bf16.msra.mxu0 0
    %947 = vmatprep.subr.bf16.mxu0 0
    %948 = vmatpush1.bf16.msra.mxu0 0
    %949 = vmatprep.subr.bf16.mxu0 0
    %950 = vmatpush1.bf16.msra.mxu0 0
    %951 = vmatprep.subr.bf16.mxu0 0
    %952 = vmatpush1.bf16.msra.mxu0 0
    %953 = vmatprep.subr.bf16.mxu0 0
    %954 = vmatpush1.bf16.msra.mxu0 0
    %955 = vmatprep.subr.bf16.mxu0 0
    %956 = vmatpush1.bf16.msra.mxu0 0
    %957 = vmatprep.subr.bf16.mxu0 0
    %958 = vmatpush1.bf16.msra.mxu0 0
    %959 = vmatprep.subr.bf16.mxu0 0
    %960 = vmatpush1.bf16.msra.mxu0 0
    %961 = vmatprep.subr.bf16.mxu0 0
    %962 = vmatpush1.bf16.msra.mxu0 0
    %963 = vmatprep.subr.bf16.mxu0 0
    %964 = vmatpush1.bf16.msra.mxu0 0
    %965 = vmatprep.mubr.bf16.mxu0 0
    %966 = vmatmul.mubr.bf16.gmra.mrb[0].mxu0 %v931
    %v967 = vpop.f32.mrb[0].mxu0
    %v968 = vadd.f32 0.0, %v967
    %v969 = vpop.f32.mrb[0].mxu0
    %v970 = vpop.f32.mrb[0].mxu0
    %v971 = vpop.f32.mrb[0].mxu0
    %972 = vdwg.mxu0
    %v973 = vadd.f32 %v749, %v968
    %v974 = vxor.u32 %v973, 2147483648
    %v975 = vmul.f32 %v974, 1.442695
    %v976 = vpow.pop %v975
    %v977 = vadd.f32 %v976, 1.0
    %v978 = vrcp.pop %v977
    %v979 = vmul.f32 1.0, %v978
    %v980 = vtanh.pop %v973
    %v981 = vmul.f32 %v979, %v925
    %983 = vrot.lane.b32.xlu0 %v980, 64
    %v984 = vpop.permute.xlu0 %983
    %v986 = vmul.f32 %v979, %v984
    %988 = vrot.lane.b32.xlu0 %v986, 32
    %v989 = vpop.permute.xlu0 %988
    %v991 = vadd.f32 %v981, %v989
    %v992 = vtanh.pop %v991
    %994 = vrot.lane.b32.xlu0 %v992, 64
    %v995 = vpop.permute.xlu0 %994
    %v997 = vmul.f32 %v979, %v995
    %vm998 = vcmp.gt.s32.totalorder %v832, 1
    %v999 = vsel %vm998, 1, 0
    %1000 = vset.pattern.permute.xlu0 0
    %1001 = vperm.xlu0 %1000, %v999
    %v1002 = vpop.permute.xlu0 %1001
    %vm1003 = vcmp.eq.s32.totalorder %v1002, 1
    %v1004 = vsel %vm1003, %v997, %v924
    %v1005 = vsel %vm1003, %v991, %v925
    %v1006 = vpack.c.bf16 %v1004, %v1004
    %1008 = vrot.lane.b32.xlu0 %v1006, 32
    %v1009 = vpop.permute.xlu0 %1008
    %v1011 = vsel %vm849, %v1009, 0
    %1013 = vmatprep.subr.bf16.mxu0 0
    %1014 = vmatpush1.bf16.msra.mxu0 %v845
    %1015 = vmatprep.subr.bf16.mxu0 0
    %1016 = vmatpush1.bf16.msra.mxu0 %v846
    %1017 = vmatprep.subr.bf16.mxu0 0
    %1018 = vmatpush1.bf16.msra.mxu0 0
    %1019 = vmatprep.subr.bf16.mxu0 0
    %1020 = vmatpush1.bf16.msra.mxu0 0
    %1021 = vmatprep.subr.bf16.mxu0 0
    %1022 = vmatpush1.bf16.msra.mxu0 0
    %1023 = vmatprep.subr.bf16.mxu0 0
    %1024 = vmatpush1.bf16.msra.mxu0 0
    %1025 = vmatprep.subr.bf16.mxu0 0
    %1026 = vmatpush1.bf16.msra.mxu0 0
    %1027 = vmatprep.subr.bf16.mxu0 0
    %1028 = vmatpush1.bf16.msra.mxu0 0
    %1029 = vmatprep.subr.bf16.mxu0 0
    %1030 = vmatpush1.bf16.msra.mxu0 0
    %1031 = vmatprep.subr.bf16.mxu0 0
    %1032 = vmatpush1.bf16.msra.mxu0 0
    %1033 = vmatprep.subr.bf16.mxu0 0
    %1034 = vmatpush1.bf16.msra.mxu0 0
    %1035 = vmatprep.subr.bf16.mxu0 0
    %1036 = vmatpush1.bf16.msra.mxu0 0
    %1037 = vmatprep.subr.bf16.mxu0 0
    %1038 = vmatpush1.bf16.msra.mxu0 0
    %1039 = vmatprep.subr.bf16.mxu0 0
    %1040 = vmatpush1.bf16.msra.mxu0 0
    %1041 = vmatprep.subr.bf16.mxu0 0
    %1042 = vmatpush1.bf16.msra.mxu0 0
    %1043 = vmatprep.subr.bf16.mxu0 0
    %1044 = vmatpush1.bf16.msra.mxu0 0
    %1045 = vmatprep.mubr.bf16.mxu0 0
    %1046 = vmatmul.mubr.bf16.gmra.mrb[0].mxu0 %v1011
    %v1047 = vpop.f32.mrb[0].mxu0
    %v1048 = vadd.f32 0.0, %v1047
    %v1049 = vpop.f32.mrb[0].mxu0
    %v1050 = vpop.f32.mrb[0].mxu0
    %v1051 = vpop.f32.mrb[0].mxu0
    %1052 = vdwg.mxu0
    %v1053 = vadd.f32 %v762, %v1048
    %v1054 = vxor.u32 %v1053, 2147483648
    %v1055 = vmul.f32 %v1054, 1.442695
    %v1056 = vpow.pop %v1055
    %v1057 = vadd.f32 %v1056, 1.0
    %v1058 = vrcp.pop %v1057
    %v1059 = vmul.f32 1.0, %v1058
    %v1060 = vtanh.pop %v1053
    %v1061 = vmul.f32 %v1059, %v1005
    %1063 = vrot.lane.b32.xlu0 %v1060, 64
    %v1064 = vpop.permute.xlu0 %1063
    %v1066 = vmul.f32 %v1059, %v1064
    %1068 = vrot.lane.b32.xlu0 %v1066, 32
    %v1069 = vpop.permute.xlu0 %1068
    %v1071 = vadd.f32 %v1061, %v1069
    %v1072 = vtanh.pop %v1071
    %1074 = vrot.lane.b32.xlu0 %v1072, 64
    %v1075 = vpop.permute.xlu0 %1074
    %v1077 = vmul.f32 %v1059, %v1075
    %vm1078 = vcmp.gt.s32.totalorder %v832, 2
    %v1079 = vsel %vm1078, 1, 0
    %1080 = vset.pattern.permute.xlu0 0
    %1081 = vperm.xlu0 %1080, %v1079
    %v1082 = vpop.permute.xlu0 %1081
    %vm1083 = vcmp.eq.s32.totalorder %v1082, 1
    %v1084 = vsel %vm1083, %v1077, %v1004
    %v1085 = vsel %vm1083, %v1071, %v1005
    %v1086 = vpack.c.bf16 %v1084, %v1084
    %1088 = vrot.lane.b32.xlu0 %v1086, 32
    %v1089 = vpop.permute.xlu0 %1088
    %v1091 = vsel %vm849, %v1089, 0
    %1093 = vmatprep.subr.bf16.mxu0 0
    %1094 = vmatpush1.bf16.msra.mxu0 %v845
    %1095 = vmatprep.subr.bf16.mxu0 0
    %1096 = vmatpush1.bf16.msra.mxu0 %v846
    %1097 = vmatprep.subr.bf16.mxu0 0
    %1098 = vmatpush1.bf16.msra.mxu0 0
    %1099 = vmatprep.subr.bf16.mxu0 0
    %1100 = vmatpush1.bf16.msra.mxu0 0
    %1101 = vmatprep.subr.bf16.mxu0 0
    %1102 = vmatpush1.bf16.msra.mxu0 0
    %1103 = vmatprep.subr.bf16.mxu0 0
    %1104 = vmatpush1.bf16.msra.mxu0 0
    %1105 = vmatprep.subr.bf16.mxu0 0
    %1106 = vmatpush1.bf16.msra.mxu0 0
    %1107 = vmatprep.subr.bf16.mxu0 0
    %1108 = vmatpush1.bf16.msra.mxu0 0
    %1109 = vmatprep.subr.bf16.mxu0 0
    %1110 = vmatpush1.bf16.msra.mxu0 0
    %1111 = vmatprep.subr.bf16.mxu0 0
    %1112 = vmatpush1.bf16.msra.mxu0 0
    %1113 = vmatprep.subr.bf16.mxu0 0
    %1114 = vmatpush1.bf16.msra.mxu0 0
    %1115 = vmatprep.subr.bf16.mxu0 0
    %1116 = vmatpush1.bf16.msra.mxu0 0
    %1117 = vmatprep.subr.bf16.mxu0 0
    %1118 = vmatpush1.bf16.msra.mxu0 0
    %1119 = vmatprep.subr.bf16.mxu0 0
    %1120 = vmatpush1.bf16.msra.mxu0 0
    %1121 = vmatprep.subr.bf16.mxu0 0
    %1122 = vmatpush1.bf16.msra.mxu0 0
    %1123 = vmatprep.subr.bf16.mxu0 0
    %1124 = vmatpush1.bf16.msra.mxu0 0
    %1125 = vmatprep.mubr.bf16.mxu0 0
    %1126 = vmatmul.mubr.bf16.gmra.mrb[0].mxu0 %v1091
    %v1127 = vpop.f32.mrb[0].mxu0
    %v1128 = vadd.f32 0.0, %v1127
    %v1129 = vpop.f32.mrb[0].mxu0
    %v1130 = vpop.f32.mrb[0].mxu0
    %v1131 = vpop.f32.mrb[0].mxu0
    %1132 = vdwg.mxu0
    %v1133 = vadd.f32 %v775, %v1128
    %v1134 = vxor.u32 %v1133, 2147483648
    %v1135 = vmul.f32 %v1134, 1.442695
    %v1136 = vpow.pop %v1135
    %v1137 = vadd.f32 %v1136, 1.0
    %v1138 = vrcp.pop %v1137
    %v1139 = vmul.f32 1.0, %v1138
    %v1140 = vtanh.pop %v1133
    %v1141 = vmul.f32 %v1139, %v1085
    %1143 = vrot.lane.b32.xlu0 %v1140, 64
    %v1144 = vpop.permute.xlu0 %1143
    %v1146 = vmul.f32 %v1139, %v1144
    %1148 = vrot.lane.b32.xlu0 %v1146, 32
    %v1149 = vpop.permute.xlu0 %1148
    %v1151 = vadd.f32 %v1141, %v1149
    %v1152 = vtanh.pop %v1151
    %1154 = vrot.lane.b32.xlu0 %v1152, 64
    %v1155 = vpop.permute.xlu0 %1154
    %v1157 = vmul.f32 %v1139, %v1155
    %vm1158 = vcmp.gt.s32.totalorder %v832, 3
    %v1159 = vsel %vm1158, 1, 0
    %1160 = vset.pattern.permute.xlu0 0
    %1161 = vperm.xlu0 %1160, %v1159
    %v1162 = vpop.permute.xlu0 %1161
    %vm1163 = vcmp.eq.s32.totalorder %v1162, 1
    %v1164 = vsel %vm1163, %v1157, %v1084
    %v1165 = vsel %vm1163, %v1151, %v1085
    %v1166 = vpack.c.bf16 %v1164, %v1164
    %1168 = vrot.lane.b32.xlu0 %v1166, 32
    %v1169 = vpop.permute.xlu0 %1168
    %v1171 = vsel %vm849, %v1169, 0
    %1173 = vmatprep.subr.bf16.mxu0 0
    %1174 = vmatpush1.bf16.msra.mxu0 %v845
    %1175 = vmatprep.subr.bf16.mxu0 0
    %1176 = vmatpush1.bf16.msra.mxu0 %v846
    %1177 = vmatprep.subr.bf16.mxu0 0
    %1178 = vmatpush1.bf16.msra.mxu0 0
    %1179 = vmatprep.subr.bf16.mxu0 0
    %1180 = vmatpush1.bf16.msra.mxu0 0
    %1181 = vmatprep.subr.bf16.mxu0 0
    %1182 = vmatpush1.bf16.msra.mxu0 0
    %1183 = vmatprep.subr.bf16.mxu0 0
    %1184 = vmatpush1.bf16.msra.mxu0 0
    %1185 = vmatprep.subr.bf16.mxu0 0
    %1186 = vmatpush1.bf16.msra.mxu0 0
    %1187 = vmatprep.subr.bf16.mxu0 0
    %1188 = vmatpush1.bf16.msra.mxu0 0
    %1189 = vmatprep.subr.bf16.mxu0 0
    %1190 = vmatpush1.bf16.msra.mxu0 0
    %1191 = vmatprep.subr.bf16.mxu0 0
    %1192 = vmatpush1.bf16.msra.mxu0 0
    %1193 = vmatprep.subr.bf16.mxu0 0
    %1194 = vmatpush1.bf16.msra.mxu0 0
    %1195 = vmatprep.subr.bf16.mxu0 0
    %1196 = vmatpush1.bf16.msra.mxu0 0
    %1197 = vmatprep.subr.bf16.mxu0 0
    %1198 = vmatpush1.bf16.msra.mxu0 0
    %1199 = vmatprep.subr.bf16.mxu0 0
    %1200 = vmatpush1.bf16.msra.mxu0 0
    %1201 = vmatprep.subr.bf16.mxu0 0
    %1202 = vmatpush1.bf16.msra.mxu0 0
    %1203 = vmatprep.subr.bf16.mxu0 0
    %1204 = vmatpush1.bf16.msra.mxu0 0
    %1205 = vmatprep.mubr.bf16.mxu0 0
    %1206 = vmatmul.mubr.bf16.gmra.mrb[0].mxu0 %v1171
    %v1207 = vpop.f32.mrb[0].mxu0
    %v1208 = vadd.f32 0.0, %v1207
    %v1209 = vpop.f32.mrb[0].mxu0
    %v1210 = vpop.f32.mrb[0].mxu0
    %v1211 = vpop.f32.mrb[0].mxu0
    %1212 = vdwg.mxu0
    %v1213 = vadd.f32 %v788, %v1208
    %v1214 = vxor.u32 %v1213, 2147483648
    %v1215 = vmul.f32 %v1214, 1.442695
    %v1216 = vpow.pop %v1215
    %v1217 = vadd.f32 %v1216, 1.0
    %v1218 = vrcp.pop %v1217
    %v1219 = vmul.f32 1.0, %v1218
    %v1220 = vtanh.pop %v1213
    %v1221 = vmul.f32 %v1219, %v1165
    %1223 = vrot.lane.b32.xlu0 %v1220, 64
    %v1224 = vpop.permute.xlu0 %1223
    %v1226 = vmul.f32 %v1219, %v1224
    %1228 = vrot.lane.b32.xlu0 %v1226, 32
    %v1229 = vpop.permute.xlu0 %1228
    %v1231 = vadd.f32 %v1221, %v1229
    %v1232 = vtanh.pop %v1231
    %1234 = vrot.lane.b32.xlu0 %v1232, 64
    %v1235 = vpop.permute.xlu0 %1234
    %v1237 = vmul.f32 %v1219, %v1235
    %vm1238 = vcmp.gt.s32.totalorder %v832, 4
    %v1239 = vsel %vm1238, 1, 0
    %1240 = vset.pattern.permute.xlu0 0
    %1241 = vperm.xlu0 %1240, %v1239
    %v1242 = vpop.permute.xlu0 %1241
    %vm1243 = vcmp.eq.s32.totalorder %v1242, 1
    %v1244 = vsel %vm1243, %v1237, %v1164
    %v1245 = vsel %vm1243, %v1231, %v1165
    %v1246 = vpack.c.bf16 %v1244, %v1244
    %1248 = vrot.lane.b32.xlu0 %v1246, 32
    %v1249 = vpop.permute.xlu0 %1248
    %v1251 = vsel %vm849, %v1249, 0
    %1253 = vmatprep.subr.bf16.mxu0 0
    %1254 = vmatpush1.bf16.msra.mxu0 %v845
    %1255 = vmatprep.subr.bf16.mxu0 0
    %1256 = vmatpush1.bf16.msra.mxu0 %v846
    %1257 = vmatprep.subr.bf16.mxu0 0
    %1258 = vmatpush1.bf16.msra.mxu0 0
    %1259 = vmatprep.subr.bf16.mxu0 0
    %1260 = vmatpush1.bf16.msra.mxu0 0
    %1261 = vmatprep.subr.bf16.mxu0 0
    %1262 = vmatpush1.bf16.msra.mxu0 0
    %1263 = vmatprep.subr.bf16.mxu0 0
    %1264 = vmatpush1.bf16.msra.mxu0 0
    %1265 = vmatprep.subr.bf16.mxu0 0
    %1266 = vmatpush1.bf16.msra.mxu0 0
    %1267 = vmatprep.subr.bf16.mxu0 0
    %1268 = vmatpush1.bf16.msra.mxu0 0
    %1269 = vmatprep.subr.bf16.mxu0 0
    %1270 = vmatpush1.bf16.msra.mxu0 0
    %1271 = vmatprep.subr.bf16.mxu0 0
    %1272 = vmatpush1.bf16.msra.mxu0 0
    %1273 = vmatprep.subr.bf16.mxu0 0
    %1274 = vmatpush1.bf16.msra.mxu0 0
    %1275 = vmatprep.subr.bf16.mxu0 0
    %1276 = vmatpush1.bf16.msra.mxu0 0
    %1277 = vmatprep.subr.bf16.mxu0 0
    %1278 = vmatpush1.bf16.msra.mxu0 0
    %1279 = vmatprep.subr.bf16.mxu0 0
    %1280 = vmatpush1.bf16.msra.mxu0 0
    %1281 = vmatprep.subr.bf16.mxu0 0
    %1282 = vmatpush1.bf16.msra.mxu0 0
    %1283 = vmatprep.subr.bf16.mxu0 0
    %1284 = vmatpush1.bf16.msra.mxu0 0
    %1285 = vmatprep.mubr.bf16.mxu0 0
    %1286 = vmatmul.mubr.bf16.gmra.mrb[0].mxu0 %v1251
    %v1287 = vpop.f32.mrb[0].mxu0
    %v1288 = vadd.f32 0.0, %v1287
    %v1289 = vpop.f32.mrb[0].mxu0
    %v1290 = vpop.f32.mrb[0].mxu0
    %v1291 = vpop.f32.mrb[0].mxu0
    %1292 = vdwg.mxu0
    %v1293 = vadd.f32 %v801, %v1288
    %v1294 = vxor.u32 %v1293, 2147483648
    %v1295 = vmul.f32 %v1294, 1.442695
    %v1296 = vpow.pop %v1295
    %v1297 = vadd.f32 %v1296, 1.0
    %v1298 = vrcp.pop %v1297
    %v1299 = vmul.f32 1.0, %v1298
    %v1300 = vtanh.pop %v1293
    %v1301 = vmul.f32 %v1299, %v1245
    %1303 = vrot.lane.b32.xlu0 %v1300, 64
    %v1304 = vpop.permute.xlu0 %1303
    %v1306 = vmul.f32 %v1299, %v1304
    %1308 = vrot.lane.b32.xlu0 %v1306, 32
    %v1309 = vpop.permute.xlu0 %1308
    %v1311 = vadd.f32 %v1301, %v1309
    %v1312 = vtanh.pop %v1311
    %1314 = vrot.lane.b32.xlu0 %v1312, 64
    %v1315 = vpop.permute.xlu0 %1314
    %v1317 = vmul.f32 %v1299, %v1315
    %vm1318 = vcmp.gt.s32.totalorder %v832, 5
    %v1319 = vsel %vm1318, 1, 0
    %1320 = vset.pattern.permute.xlu0 0
    %1321 = vperm.xlu0 %1320, %v1319
    %v1322 = vpop.permute.xlu0 %1321
    %vm1323 = vcmp.eq.s32.totalorder %v1322, 1
    %v1324 = vsel %vm1323, %v1317, %v1244
    %v1325 = vsel %vm1323, %v1311, %v1245
    %v1326 = vpack.c.bf16 %v1324, %v1324
    %1328 = vrot.lane.b32.xlu0 %v1326, 32
    %v1329 = vpop.permute.xlu0 %1328
    %v1331 = vsel %vm849, %v1329, 0
    %1333 = vmatprep.subr.bf16.mxu0 0
    %1334 = vmatpush1.bf16.msra.mxu0 %v845
    %1335 = vmatprep.subr.bf16.mxu0 0
    %1336 = vmatpush1.bf16.msra.mxu0 %v846
    %1337 = vmatprep.subr.bf16.mxu0 0
    %1338 = vmatpush1.bf16.msra.mxu0 0
    %1339 = vmatprep.subr.bf16.mxu0 0
    %1340 = vmatpush1.bf16.msra.mxu0 0
    %1341 = vmatprep.subr.bf16.mxu0 0
    %1342 = vmatpush1.bf16.msra.mxu0 0
    %1343 = vmatprep.subr.bf16.mxu0 0
    %1344 = vmatpush1.bf16.msra.mxu0 0
    %1345 = vmatprep.subr.bf16.mxu0 0
    %1346 = vmatpush1.bf16.msra.mxu0 0
    %1347 = vmatprep.subr.bf16.mxu0 0
    %1348 = vmatpush1.bf16.msra.mxu0 0
    %1349 = vmatprep.subr.bf16.mxu0 0
    %1350 = vmatpush1.bf16.msra.mxu0 0
    %1351 = vmatprep.subr.bf16.mxu0 0
    %1352 = vmatpush1.bf16.msra.mxu0 0
    %1353 = vmatprep.subr.bf16.mxu0 0
    %1354 = vmatpush1.bf16.msra.mxu0 0
    %1355 = vmatprep.subr.bf16.mxu0 0
    %1356 = vmatpush1.bf16.msra.mxu0 0
    %1357 = vmatprep.subr.bf16.mxu0 0
    %1358 = vmatpush1.bf16.msra.mxu0 0
    %1359 = vmatprep.subr.bf16.mxu0 0
    %1360 = vmatpush1.bf16.msra.mxu0 0
    %1361 = vmatprep.subr.bf16.mxu0 0
    %1362 = vmatpush1.bf16.msra.mxu0 0
    %1363 = vmatprep.subr.bf16.mxu0 0
    %1364 = vmatpush1.bf16.msra.mxu0 0
    %1365 = vmatprep.mubr.bf16.mxu0 0
    %1366 = vmatmul.mubr.bf16.gmra.mrb[0].mxu0 %v1331
    %v1367 = vpop.f32.mrb[0].mxu0
    %v1368 = vadd.f32 0.0, %v1367
    %v1369 = vpop.f32.mrb[0].mxu0
    %v1370 = vpop.f32.mrb[0].mxu0
    %v1371 = vpop.f32.mrb[0].mxu0
    %1372 = vdwg.mxu0
    %v1373 = vadd.f32 %v814, %v1368
    %v1374 = vxor.u32 %v1373, 2147483648
    %v1375 = vmul.f32 %v1374, 1.442695
    %v1376 = vpow.pop %v1375
    %v1377 = vadd.f32 %v1376, 1.0
    %v1378 = vrcp.pop %v1377
    %v1379 = vmul.f32 1.0, %v1378
    %v1380 = vtanh.pop %v1373
    %v1381 = vmul.f32 %v1379, %v1325
    %1383 = vrot.lane.b32.xlu0 %v1380, 64
    %v1384 = vpop.permute.xlu0 %1383
    %v1386 = vmul.f32 %v1379, %v1384
    %1388 = vrot.lane.b32.xlu0 %v1386, 32
    %v1389 = vpop.permute.xlu0 %1388
    %v1391 = vadd.f32 %v1381, %v1389
    %v1392 = vtanh.pop %v1391
    %1394 = vrot.lane.b32.xlu0 %v1392, 64
    %v1395 = vpop.permute.xlu0 %1394
    %v1397 = vmul.f32 %v1379, %v1395
    %vm1398 = vcmp.gt.s32.totalorder %v832, 6
    %v1399 = vsel %vm1398, 1, 0
    %1400 = vset.pattern.permute.xlu0 0
    %1401 = vperm.xlu0 %1400, %v1399
    %v1402 = vpop.permute.xlu0 %1401
    %vm1403 = vcmp.eq.s32.totalorder %v1402, 1
    %v1404 = vsel %vm1403, %v1397, %v1324
    %v1405 = vsel %vm1403, %v1391, %v1325
    %v1406 = vpack.c.bf16 %v1404, %v1404
    %1408 = vrot.lane.b32.xlu0 %v1406, 32
    %v1409 = vpop.permute.xlu0 %1408
    %v1411 = vsel %vm849, %v1409, 0
    %1413 = vmatprep.subr.bf16.mxu0 0
    %1414 = vmatpush1.bf16.msra.mxu0 %v845
    %1415 = vmatprep.subr.bf16.mxu0 0
    %1416 = vmatpush1.bf16.msra.mxu0 %v846
    %1417 = vmatprep.subr.bf16.mxu0 0
    %1418 = vmatpush1.bf16.msra.mxu0 0
    %1419 = vmatprep.subr.bf16.mxu0 0
    %1420 = vmatpush1.bf16.msra.mxu0 0
    %1421 = vmatprep.subr.bf16.mxu0 0
    %1422 = vmatpush1.bf16.msra.mxu0 0
    %1423 = vmatprep.subr.bf16.mxu0 0
    %1424 = vmatpush1.bf16.msra.mxu0 0
    %1425 = vmatprep.subr.bf16.mxu0 0
    %1426 = vmatpush1.bf16.msra.mxu0 0
    %1427 = vmatprep.subr.bf16.mxu0 0
    %1428 = vmatpush1.bf16.msra.mxu0 0
    %1429 = vmatprep.subr.bf16.mxu0 0
    %1430 = vmatpush1.bf16.msra.mxu0 0
    %1431 = vmatprep.subr.bf16.mxu0 0
    %1432 = vmatpush1.bf16.msra.mxu0 0
    %1433 = vmatprep.subr.bf16.mxu0 0
    %1434 = vmatpush1.bf16.msra.mxu0 0
    %1435 = vmatprep.subr.bf16.mxu0 0
    %1436 = vmatpush1.bf16.msra.mxu0 0
    %1437 = vmatprep.subr.bf16.mxu0 0
    %1438 = vmatpush1.bf16.msra.mxu0 0
    %1439 = vmatprep.subr.bf16.mxu0 0
    %1440 = vmatpush1.bf16.msra.mxu0 0
    %1441 = vmatprep.subr.bf16.mxu0 0
    %1442 = vmatpush1.bf16.msra.mxu0 0
    %1443 = vmatprep.subr.bf16.mxu0 0
    %1444 = vmatpush1.bf16.msra.mxu0 0
    %1445 = vmatprep.mubr.bf16.mxu0 0
    %1446 = vmatmul.mubr.bf16.gmra.mrb[0].mxu0 %v1411
    %v1447 = vpop.f32.mrb[0].mxu0
    %v1448 = vadd.f32 0.0, %v1447
    %v1449 = vpop.f32.mrb[0].mxu0
    %v1450 = vpop.f32.mrb[0].mxu0
    %v1451 = vpop.f32.mrb[0].mxu0
    %1452 = vdwg.mxu0
    %v1453 = vadd.f32 %v827, %v1448
    %v1454 = vxor.u32 %v1453, 2147483648
    %v1455 = vmul.f32 %v1454, 1.442695
    %v1456 = vpow.pop %v1455
    %v1457 = vadd.f32 %v1456, 1.0
    %v1458 = vrcp.pop %v1457
    %v1459 = vmul.f32 1.0, %v1458
    %v1460 = vtanh.pop %v1453
    %v1461 = vmul.f32 %v1459, %v1405
    %1463 = vrot.lane.b32.xlu0 %v1460, 64
    %v1464 = vpop.permute.xlu0 %1463
    %v1466 = vmul.f32 %v1459, %v1464
    %1468 = vrot.lane.b32.xlu0 %v1466, 32
    %v1469 = vpop.permute.xlu0 %1468
    %v1471 = vadd.f32 %v1461, %v1469
    %v1472 = vtanh.pop %v1471
    %1474 = vrot.lane.b32.xlu0 %v1472, 64
    %v1475 = vpop.permute.xlu0 %1474
    %v1477 = vmul.f32 %v1459, %v1475
    %vm1478 = vcmp.gt.s32.totalorder %v832, 7
    %v1479 = vsel %vm1478, 1, 0
    %1480 = vset.pattern.permute.xlu0 0
    %1481 = vperm.xlu0 %1480, %v1479
    %v1482 = vpop.permute.xlu0 %1481
    %vm1483 = vcmp.eq.s32.totalorder %v1482, 1
    %v1484 = vsel %vm1483, %v1477, %v1404
    %v1485 = vpack.c.bf16 %v1484, %v1484
    %v1486 = vld [vmem:[%s8] sm:$0xf]
    %v1487 = vld [vmem:[%s8 + $0x4] sm:$0xf]
    %v1488 = vld [vmem:[%s8 + $0x8] sm:$0xf]
    %v1489 = vld [vmem:[%s8 + $0xc] sm:$0xf]
    %v1490 = vld [vmem:[%s9] sm:$0x1]
    %v1492 = vlaneseq
    %v1493 = vshrl.u32 %v1492, 7
    %v1494 = vsub.s32 0, %v1493
    %v1495 = vrot.slane %v1490, %v1494
    %1498 = vrot.lane.b32.xlu0 %v1485, 32
    %v1499 = vpop.permute.xlu0 %1498
    %v1504 = vunpack.c.l.b16 %v1486
    %v1505 = vunpack.c.l.b16 %v1487
    %v1506 = vunpack.c.l.b16 %v1488
    %v1507 = vunpack.c.l.b16 %v1489
    %v1508 = vpack.c.b16 %v1505, %v1504
    %v1509 = vpack.c.b16 %v1507, %v1506
    %v1513 = vsel %vm849, %v1499, 0
    %1515 = vmatprep.subr.bf16.mxu0 0
    %1516 = vmatpush1.bf16.msra.mxu0 %v1508
    %1517 = vmatprep.subr.bf16.mxu0 0
    %1518 = vmatpush1.bf16.msra.mxu0 %v1509
    %1519 = vmatprep.subr.bf16.mxu0 0
    %1520 = vmatpush1.bf16.msra.mxu0 0
    %1521 = vmatprep.subr.bf16.mxu0 0
    %1522 = vmatpush1.bf16.msra.mxu0 0
    %1523 = vmatprep.subr.bf16.mxu0 0
    %1524 = vmatpush1.bf16.msra.mxu0 0
    %1525 = vmatprep.subr.bf16.mxu0 0
    %1526 = vmatpush1.bf16.msra.mxu0 0
    %1527 = vmatprep.subr.bf16.mxu0 0
    %1528 = vmatpush1.bf16.msra.mxu0 0
    %1529 = vmatprep.subr.bf16.mxu0 0
    %1530 = vmatpush1.bf16.msra.mxu0 0
    %1531 = vmatprep.subr.bf16.mxu0 0
    %1532 = vmatpush1.bf16.msra.mxu0 0
    %1533 = vmatprep.subr.bf16.mxu0 0
    %1534 = vmatpush1.bf16.msra.mxu0 0
    %1535 = vmatprep.subr.bf16.mxu0 0
    %1536 = vmatpush1.bf16.msra.mxu0 0
    %1537 = vmatprep.subr.bf16.mxu0 0
    %1538 = vmatpush1.bf16.msra.mxu0 0
    %1539 = vmatprep.subr.bf16.mxu0 0
    %1540 = vmatpush1.bf16.msra.mxu0 0
    %1541 = vmatprep.subr.bf16.mxu0 0
    %1542 = vmatpush1.bf16.msra.mxu0 0
    %1543 = vmatprep.subr.bf16.mxu0 0
    %1544 = vmatpush1.bf16.msra.mxu0 0
    %1545 = vmatprep.subr.bf16.mxu0 0
    %1546 = vmatpush1.bf16.msra.mxu0 0
    %1547 = vmatprep.mubr.bf16.mxu0 0
    %1548 = vmatmul.mubr.bf16.gmra.mrb[0].mxu0 %v1513
    %v1549 = vpop.f32.mrb[0].mxu0
    %v1550 = vadd.f32 %v1495, %v1549
    %v1551 = vpop.f32.mrb[0].mxu0
    %v1552 = vpop.f32.mrb[0].mxu0
    %v1553 = vpop.f32.mrb[0].mxu0
    %1554 = vdwg.mxu0
    %s1555 = smul.u32 1, 8
    %s1556 = sshll.u32 %s1555, 4
    %1557 = dma.done [#allocation3], %s1556
    %s1558 = sshll.u32 %s1555, 4
    %1559 = dma.done %s144, %s1558
    %s1560 = sshll.u32 %s1555, 4
    %1561 = dma.done %s227, %s1560
    %s1562 = sshll.u32 %s1555, 4
    %1563 = dma.done %s310, %s1562
    %s1564 = sshll.u32 %s1555, 4
    %1565 = dma.done %s393, %s1564
    %s1566 = sshll.u32 %s1555, 4
    %1567 = dma.done %s476, %s1566
    %s1568 = sshll.u32 %s1555, 4
    %1569 = dma.done %s559, %s1568
    %s1570 = sshll.u32 %s1555, 4
    %1571 = dma.done %s642, %s1570
    %v1572 = vld [vmem:[#allocation2] sm:$0xff]
    %v1573 = vld [vmem:[#allocation2 + $0x8] sm:$0xff]
    %v1574 = vld [vmem:[#allocation2 + $0x10] sm:$0xff]
    %v1575 = vld [vmem:[#allocation2 + $0x18] sm:$0xff]
    %v1576 = vld [vmem:[#allocation2 + $0x20] sm:$0xff]
    %v1577 = vld [vmem:[#allocation2 + $0x28] sm:$0xff]
    %v1578 = vld [vmem:[#allocation2 + $0x30] sm:$0xff]
    %v1579 = vld [vmem:[#allocation2 + $0x38] sm:$0xff]
    %v1588 = vcombine.high %v1572, %v1572
    %v1590 = vunpack.c.l.s4 1983009808
    %v1591 = vunpack.c.0.s8 %v1590
    %v1592 = vlaneseq
    %v1593 = vshrl.u32 %v1592, 7
    %v1594 = vsub.s32 %v1591, %v1593
    %v1595 = vrot.slane %v1572, %v1594
    %v1597 = vunpack.c.l.s4 1983009808
    %v1598 = vunpack.c.0.s8 %v1597
    %v1599 = vlaneseq
    %v1600 = vshrl.u32 %v1599, 7
    %v1601 = vsub.s32 %v1598, %v1600
    %v1602 = vrot.slane %v1588, %v1601
    %v1603 = vcombine.high %v1595, %v1595
    %v1604 = vcombine.high %v1602, %v1602
    %v1605 = vcombine.high %v1573, %v1573
    %v1607 = vunpack.c.l.s4 1983009808
    %v1608 = vunpack.c.0.s8 %v1607
    %v1609 = vlaneseq
    %v1610 = vshrl.u32 %v1609, 7
    %v1611 = vsub.s32 %v1608, %v1610
    %v1612 = vrot.slane %v1573, %v1611
    %v1614 = vunpack.c.l.s4 1983009808
    %v1615 = vunpack.c.0.s8 %v1614
    %v1616 = vlaneseq
    %v1617 = vshrl.u32 %v1616, 7
    %v1618 = vsub.s32 %v1615, %v1617
    %v1619 = vrot.slane %v1605, %v1618
    %v1620 = vcombine.high %v1612, %v1612
    %v1621 = vcombine.high %v1619, %v1619
    %v1622 = vcombine.high %v1574, %v1574
    %v1624 = vunpack.c.l.s4 1983009808
    %v1625 = vunpack.c.0.s8 %v1624
    %v1626 = vlaneseq
    %v1627 = vshrl.u32 %v1626, 7
    %v1628 = vsub.s32 %v1625, %v1627
    %v1629 = vrot.slane %v1574, %v1628
    %v1631 = vunpack.c.l.s4 1983009808
    %v1632 = vunpack.c.0.s8 %v1631
    %v1633 = vlaneseq
    %v1634 = vshrl.u32 %v1633, 7
    %v1635 = vsub.s32 %v1632, %v1634
    %v1636 = vrot.slane %v1622, %v1635
    %v1637 = vcombine.high %v1629, %v1629
    %v1638 = vcombine.high %v1636, %v1636
    %v1639 = vcombine.high %v1575, %v1575
    %v1641 = vunpack.c.l.s4 1983009808
    %v1642 = vunpack.c.0.s8 %v1641
    %v1643 = vlaneseq
    %v1644 = vshrl.u32 %v1643, 7
    %v1645 = vsub.s32 %v1642, %v1644
    %v1646 = vrot.slane %v1575, %v1645
    %v1648 = vunpack.c.l.s4 1983009808
    %v1649 = vunpack.c.0.s8 %v1648
    %v1650 = vlaneseq
    %v1651 = vshrl.u32 %v1650, 7
    %v1652 = vsub.s32 %v1649, %v1651
    %v1653 = vrot.slane %v1639, %v1652
    %v1654 = vcombine.high %v1646, %v1646
    %v1655 = vcombine.high %v1653, %v1653
    %v1656 = vcombine.high %v1576, %v1576
    %v1658 = vunpack.c.l.s4 1983009808
    %v1659 = vunpack.c.0.s8 %v1658
    %v1660 = vlaneseq
    %v1661 = vshrl.u32 %v1660, 7
    %v1662 = vsub.s32 %v1659, %v1661
    %v1663 = vrot.slane %v1576, %v1662
    %v1665 = vunpack.c.l.s4 1983009808
    %v1666 = vunpack.c.0.s8 %v1665
    %v1667 = vlaneseq
    %v1668 = vshrl.u32 %v1667, 7
    %v1669 = vsub.s32 %v1666, %v1668
    %v1670 = vrot.slane %v1656, %v1669
    %v1671 = vcombine.high %v1663, %v1663
    %v1672 = vcombine.high %v1670, %v1670
    %v1673 = vcombine.high %v1577, %v1577
    %v1675 = vunpack.c.l.s4 1983009808
    %v1676 = vunpack.c.0.s8 %v1675
    %v1677 = vlaneseq
    %v1678 = vshrl.u32 %v1677, 7
    %v1679 = vsub.s32 %v1676, %v1678
    %v1680 = vrot.slane %v1577, %v1679
    %v1682 = vunpack.c.l.s4 1983009808
    %v1683 = vunpack.c.0.s8 %v1682
    %v1684 = vlaneseq
    %v1685 = vshrl.u32 %v1684, 7
    %v1686 = vsub.s32 %v1683, %v1685
    %v1687 = vrot.slane %v1673, %v1686
    %v1688 = vcombine.high %v1680, %v1680
    %v1689 = vcombine.high %v1687, %v1687
    %v1690 = vcombine.high %v1578, %v1578
    %v1692 = vunpack.c.l.s4 1983009808
    %v1693 = vunpack.c.0.s8 %v1692
    %v1694 = vlaneseq
    %v1695 = vshrl.u32 %v1694, 7
    %v1696 = vsub.s32 %v1693, %v1695
    %v1697 = vrot.slane %v1578, %v1696
    %v1699 = vunpack.c.l.s4 1983009808
    %v1700 = vunpack.c.0.s8 %v1699
    %v1701 = vlaneseq
    %v1702 = vshrl.u32 %v1701, 7
    %v1703 = vsub.s32 %v1700, %v1702
    %v1704 = vrot.slane %v1690, %v1703
    %v1705 = vcombine.high %v1697, %v1697
    %v1706 = vcombine.high %v1704, %v1704
    %v1707 = vcombine.high %v1579, %v1579
    %v1709 = vunpack.c.l.s4 1983009808
    %v1710 = vunpack.c.0.s8 %v1709
    %v1711 = vlaneseq
    %v1712 = vshrl.u32 %v1711, 7
    %v1713 = vsub.s32 %v1710, %v1712
    %v1714 = vrot.slane %v1579, %v1713
    %v1716 = vunpack.c.l.s4 1983009808
    %v1717 = vunpack.c.0.s8 %v1716
    %v1718 = vlaneseq
    %v1719 = vshrl.u32 %v1718, 7
    %v1720 = vsub.s32 %v1717, %v1719
    %v1721 = vrot.slane %v1707, %v1720
    %v1722 = vcombine.high %v1714, %v1714
    %v1723 = vcombine.high %v1721, %v1721
    %v1756 = vpack.c.bf16 %v1595, %v1595
    %v1757 = vpack.c.bf16 %v1603, %v1603
    %v1758 = vpack.c.bf16 %v1602, %v1602
    %v1759 = vpack.c.bf16 %v1604, %v1604
    %v1760 = vpack.c.bf16 %v1612, %v1612
    %v1761 = vpack.c.bf16 %v1620, %v1620
    %v1762 = vpack.c.bf16 %v1619, %v1619
    %v1763 = vpack.c.bf16 %v1621, %v1621
    %v1764 = vpack.c.bf16 %v1629, %v1629
    %v1765 = vpack.c.bf16 %v1637, %v1637
    %v1766 = vpack.c.bf16 %v1636, %v1636
    %v1767 = vpack.c.bf16 %v1638, %v1638
    %v1768 = vpack.c.bf16 %v1646, %v1646
    %v1769 = vpack.c.bf16 %v1654, %v1654
    %v1770 = vpack.c.bf16 %v1653, %v1653
    %v1771 = vpack.c.bf16 %v1655, %v1655
    %v1772 = vpack.c.bf16 %v1663, %v1663
    %v1773 = vpack.c.bf16 %v1671, %v1671
    %v1774 = vpack.c.bf16 %v1670, %v1670
    %v1775 = vpack.c.bf16 %v1672, %v1672
    %v1776 = vpack.c.bf16 %v1680, %v1680
    %v1777 = vpack.c.bf16 %v1688, %v1688
    %v1778 = vpack.c.bf16 %v1687, %v1687
    %v1779 = vpack.c.bf16 %v1689, %v1689
    %v1780 = vpack.c.bf16 %v1697, %v1697
    %v1781 = vpack.c.bf16 %v1705, %v1705
    %v1782 = vpack.c.bf16 %v1704, %v1704
    %v1783 = vpack.c.bf16 %v1706, %v1706
    %v1784 = vpack.c.bf16 %v1714, %v1714
    %v1785 = vpack.c.bf16 %v1722, %v1722
    %v1786 = vpack.c.bf16 %v1721, %v1721
    %v1787 = vpack.c.bf16 %v1723, %v1723
    %v1788 = vld [vmem:[%s5] sm:$0xf]
    %v1789 = vld [vmem:[%s5 + $0x4] sm:$0xf]
    %v1790 = vld [vmem:[%s5 + $0x8] sm:$0xf]
    %v1791 = vld [vmem:[%s5 + $0xc] sm:$0xf]
    %v1792 = vld [vmem:[%s5 + $0x10] sm:$0xf]
    %v1793 = vld [vmem:[%s5 + $0x14] sm:$0xf]
    %v1794 = vld [vmem:[%s5 + $0x18] sm:$0xf]
    %v1795 = vld [vmem:[%s5 + $0x1c] sm:$0xf]
    %v1796 = vld [vmem:[%s5 + $0x20] sm:$0xf]
    %v1797 = vld [vmem:[%s5 + $0x24] sm:$0xf]
    %v1798 = vld [vmem:[%s5 + $0x28] sm:$0xf]
    %v1799 = vld [vmem:[%s5 + $0x2c] sm:$0xf]
    %v1800 = vld [vmem:[%s5 + $0x30] sm:$0xf]
    %v1801 = vld [vmem:[%s5 + $0x34] sm:$0xf]
    %v1802 = vld [vmem:[%s5 + $0x38] sm:$0xf]
    %v1803 = vld [vmem:[%s5 + $0x3c] sm:$0xf]
    %v1804 = vld [vmem:[%s5 + $0x40] sm:$0xf]
    %v1805 = vld [vmem:[%s5 + $0x44] sm:$0xf]
    %v1806 = vld [vmem:[%s5 + $0x48] sm:$0xf]
    %v1807 = vld [vmem:[%s5 + $0x4c] sm:$0xf]
    %v1808 = vld [vmem:[%s5 + $0x50] sm:$0xf]
    %v1809 = vld [vmem:[%s5 + $0x54] sm:$0xf]
    %v1810 = vld [vmem:[%s5 + $0x58] sm:$0xf]
    %v1811 = vld [vmem:[%s5 + $0x5c] sm:$0xf]
    %v1812 = vld [vmem:[%s5 + $0x60] sm:$0xf]
    %v1813 = vld [vmem:[%s5 + $0x64] sm:$0xf]
    %v1814 = vld [vmem:[%s5 + $0x68] sm:$0xf]
    %v1815 = vld [vmem:[%s5 + $0x6c] sm:$0xf]
    %v1816 = vld [vmem:[%s5 + $0x70] sm:$0xf]
    %v1817 = vld [vmem:[%s5 + $0x74] sm:$0xf]
    %v1818 = vld [vmem:[%s5 + $0x78] sm:$0xf]
    %v1819 = vld [vmem:[%s5 + $0x7c] sm:$0xf]
    %v1820 = vld [vmem:[%s5 + $0x80] sm:$0xf]
    %v1821 = vld [vmem:[%s5 + $0x84] sm:$0xf]
    %v1822 = vld [vmem:[%s5 + $0x88] sm:$0xf]
    %v1823 = vld [vmem:[%s5 + $0x8c] sm:$0xf]
    %v1824 = vld [vmem:[%s5 + $0x90] sm:$0xf]
    %v1825 = vld [vmem:[%s5 + $0x94] sm:$0xf]
    %v1826 = vld [vmem:[%s5 + $0x98] sm:$0xf]
    %v1827 = vld [vmem:[%s5 + $0x9c] sm:$0xf]
    %v1828 = vld [vmem:[%s5 + $0xa0] sm:$0xf]
    %v1829 = vld [vmem:[%s5 + $0xa4] sm:$0xf]
    %v1830 = vld [vmem:[%s5 + $0xa8] sm:$0xf]
    %v1831 = vld [vmem:[%s5 + $0xac] sm:$0xf]
    %v1832 = vld [vmem:[%s5 + $0xb0] sm:$0xf]
    %v1833 = vld [vmem:[%s5 + $0xb4] sm:$0xf]
    %v1834 = vld [vmem:[%s5 + $0xb8] sm:$0xf]
    %v1835 = vld [vmem:[%s5 + $0xbc] sm:$0xf]
    %v1836 = vld [vmem:[%s5 + $0xc0] sm:$0xf]
    %v1837 = vld [vmem:[%s5 + $0xc4] sm:$0xf]
    %v1838 = vld [vmem:[%s5 + $0xc8] sm:$0xf]
    %v1839 = vld [vmem:[%s5 + $0xcc] sm:$0xf]
    %v1840 = vld [vmem:[%s5 + $0xd0] sm:$0xf]
    %v1841 = vld [vmem:[%s5 + $0xd4] sm:$0xf]
    %v1842 = vld [vmem:[%s5 + $0xd8] sm:$0xf]
    %v1843 = vld [vmem:[%s5 + $0xdc] sm:$0xf]
    %v1844 = vld [vmem:[%s5 + $0xe0] sm:$0xf]
    %v1845 = vld [vmem:[%s5 + $0xe4] sm:$0xf]
    %v1846 = vld [vmem:[%s5 + $0xe8] sm:$0xf]
    %v1847 = vld [vmem:[%s5 + $0xec] sm:$0xf]
    %v1848 = vld [vmem:[%s5 + $0xf0] sm:$0xf]
    %v1849 = vld [vmem:[%s5 + $0xf4] sm:$0xf]
    %v1850 = vld [vmem:[%s5 + $0xf8] sm:$0xf]
    %v1851 = vld [vmem:[%s5 + $0xfc] sm:$0xf]
    %v1852 = vld [vmem:[%s5 + $0x100] sm:$0xf]
    %v1853 = vld [vmem:[%s5 + $0x104] sm:$0xf]
    %v1854 = vld [vmem:[%s5 + $0x108] sm:$0xf]
    %v1855 = vld [vmem:[%s5 + $0x10c] sm:$0xf]
    %v1856 = vld [vmem:[%s5 + $0x110] sm:$0xf]
    %v1857 = vld [vmem:[%s5 + $0x114] sm:$0xf]
    %v1858 = vld [vmem:[%s5 + $0x118] sm:$0xf]
    %v1859 = vld [vmem:[%s5 + $0x11c] sm:$0xf]
    %v1860 = vld [vmem:[%s5 + $0x120] sm:$0xf]
    %v1861 = vld [vmem:[%s5 + $0x124] sm:$0xf]
    %v1862 = vld [vmem:[%s5 + $0x128] sm:$0xf]
    %v1863 = vld [vmem:[%s5 + $0x12c] sm:$0xf]
    %v1864 = vld [vmem:[%s5 + $0x130] sm:$0xf]
    %v1865 = vld [vmem:[%s5 + $0x134] sm:$0xf]
    %v1866 = vld [vmem:[%s5 + $0x138] sm:$0xf]
    %v1867 = vld [vmem:[%s5 + $0x13c] sm:$0xf]
    %v1868 = vld [vmem:[%s5 + $0x140] sm:$0xf]
    %v1869 = vld [vmem:[%s5 + $0x144] sm:$0xf]
    %v1870 = vld [vmem:[%s5 + $0x148] sm:$0xf]
    %v1871 = vld [vmem:[%s5 + $0x14c] sm:$0xf]
    %v1872 = vld [vmem:[%s5 + $0x150] sm:$0xf]
    %v1873 = vld [vmem:[%s5 + $0x154] sm:$0xf]
    %v1874 = vld [vmem:[%s5 + $0x158] sm:$0xf]
    %v1875 = vld [vmem:[%s5 + $0x15c] sm:$0xf]
    %v1876 = vld [vmem:[%s5 + $0x160] sm:$0xf]
    %v1877 = vld [vmem:[%s5 + $0x164] sm:$0xf]
    %v1878 = vld [vmem:[%s5 + $0x168] sm:$0xf]
    %v1879 = vld [vmem:[%s5 + $0x16c] sm:$0xf]
    %v1880 = vld [vmem:[%s5 + $0x170] sm:$0xf]
    %v1881 = vld [vmem:[%s5 + $0x174] sm:$0xf]
    %v1882 = vld [vmem:[%s5 + $0x178] sm:$0xf]
    %v1883 = vld [vmem:[%s5 + $0x17c] sm:$0xf]
    %v1884 = vld [vmem:[%s5 + $0x180] sm:$0xf]
    %v1885 = vld [vmem:[%s5 + $0x184] sm:$0xf]
    %v1886 = vld [vmem:[%s5 + $0x188] sm:$0xf]
    %v1887 = vld [vmem:[%s5 + $0x18c] sm:$0xf]
    %v1888 = vld [vmem:[%s5 + $0x190] sm:$0xf]
    %v1889 = vld [vmem:[%s5 + $0x194] sm:$0xf]
    %v1890 = vld [vmem:[%s5 + $0x198] sm:$0xf]
    %v1891 = vld [vmem:[%s5 + $0x19c] sm:$0xf]
    %v1892 = vld [vmem:[%s5 + $0x1a0] sm:$0xf]
    %v1893 = vld [vmem:[%s5 + $0x1a4] sm:$0xf]
    %v1894 = vld [vmem:[%s5 + $0x1a8] sm:$0xf]
    %v1895 = vld [vmem:[%s5 + $0x1ac] sm:$0xf]
    %v1896 = vld [vmem:[%s5 + $0x1b0] sm:$0xf]
    %v1897 = vld [vmem:[%s5 + $0x1b4] sm:$0xf]
    %v1898 = vld [vmem:[%s5 + $0x1b8] sm:$0xf]
    %v1899 = vld [vmem:[%s5 + $0x1bc] sm:$0xf]
    %v1900 = vld [vmem:[%s5 + $0x1c0] sm:$0xf]
    %v1901 = vld [vmem:[%s5 + $0x1c4] sm:$0xf]
    %v1902 = vld [vmem:[%s5 + $0x1c8] sm:$0xf]
    %v1903 = vld [vmem:[%s5 + $0x1cc] sm:$0xf]
    %v1904 = vld [vmem:[%s5 + $0x1d0] sm:$0xf]
    %v1905 = vld [vmem:[%s5 + $0x1d4] sm:$0xf]
    %v1906 = vld [vmem:[%s5 + $0x1d8] sm:$0xf]
    %v1907 = vld [vmem:[%s5 + $0x1dc] sm:$0xf]
    %v1908 = vld [vmem:[%s5 + $0x1e0] sm:$0xf]
    %v1909 = vld [vmem:[%s5 + $0x1e4] sm:$0xf]
    %v1910 = vld [vmem:[%s5 + $0x1e8] sm:$0xf]
    %v1911 = vld [vmem:[%s5 + $0x1ec] sm:$0xf]
    %v1912 = vld [vmem:[%s5 + $0x1f0] sm:$0xf]
    %v1913 = vld [vmem:[%s5 + $0x1f4] sm:$0xf]
    %v1914 = vld [vmem:[%s5 + $0x1f8] sm:$0xf]
    %v1915 = vld [vmem:[%s5 + $0x1fc] sm:$0xf]
    %v1916 = vld [vmem:[%s5 + $0x200] sm:$0xf]
    %v1917 = vld [vmem:[%s5 + $0x204] sm:$0xf]
    %v1918 = vld [vmem:[%s5 + $0x208] sm:$0xf]
    %v1919 = vld [vmem:[%s5 + $0x20c] sm:$0xf]
    %v1920 = vld [vmem:[%s5 + $0x210] sm:$0xf]
    %v1921 = vld [vmem:[%s5 + $0x214] sm:$0xf]
    %v1922 = vld [vmem:[%s5 + $0x218] sm:$0xf]
    %v1923 = vld [vmem:[%s5 + $0x21c] sm:$0xf]
    %v1924 = vld [vmem:[%s5 + $0x220] sm:$0xf]
    %v1925 = vld [vmem:[%s5 + $0x224] sm:$0xf]
    %v1926 = vld [vmem:[%s5 + $0x228] sm:$0xf]
    %v1927 = vld [vmem:[%s5 + $0x22c] sm:$0xf]
    %v1928 = vld [vmem:[%s5 + $0x230] sm:$0xf]
    %v1929 = vld [vmem:[%s5 + $0x234] sm:$0xf]
    %v1930 = vld [vmem:[%s5 + $0x238] sm:$0xf]
    %v1931 = vld [vmem:[%s5 + $0x23c] sm:$0xf]
    %v1932 = vld [vmem:[%s5 + $0x240] sm:$0xf]
    %v1933 = vld [vmem:[%s5 + $0x244] sm:$0xf]
    %v1934 = vld [vmem:[%s5 + $0x248] sm:$0xf]
    %v1935 = vld [vmem:[%s5 + $0x24c] sm:$0xf]
    %v1936 = vld [vmem:[%s5 + $0x250] sm:$0xf]
    %v1937 = vld [vmem:[%s5 + $0x254] sm:$0xf]
    %v1938 = vld [vmem:[%s5 + $0x258] sm:$0xf]
    %v1939 = vld [vmem:[%s5 + $0x25c] sm:$0xf]
    %v1940 = vld [vmem:[%s5 + $0x260] sm:$0xf]
    %v1941 = vld [vmem:[%s5 + $0x264] sm:$0xf]
    %v1942 = vld [vmem:[%s5 + $0x268] sm:$0xf]
    %v1943 = vld [vmem:[%s5 + $0x26c] sm:$0xf]
    %v1944 = vld [vmem:[%s5 + $0x270] sm:$0xf]
    %v1945 = vld [vmem:[%s5 + $0x274] sm:$0xf]
    %v1946 = vld [vmem:[%s5 + $0x278] sm:$0xf]
    %v1947 = vld [vmem:[%s5 + $0x27c] sm:$0xf]
    %v1948 = vld [vmem:[%s5 + $0x280] sm:$0xf]
    %v1949 = vld [vmem:[%s5 + $0x284] sm:$0xf]
    %v1950 = vld [vmem:[%s5 + $0x288] sm:$0xf]
    %v1951 = vld [vmem:[%s5 + $0x28c] sm:$0xf]
    %v1952 = vld [vmem:[%s5 + $0x290] sm:$0xf]
    %v1953 = vld [vmem:[%s5 + $0x294] sm:$0xf]
    %v1954 = vld [vmem:[%s5 + $0x298] sm:$0xf]
    %v1955 = vld [vmem:[%s5 + $0x29c] sm:$0xf]
    %v1956 = vld [vmem:[%s5 + $0x2a0] sm:$0xf]
    %v1957 = vld [vmem:[%s5 + $0x2a4] sm:$0xf]
    %v1958 = vld [vmem:[%s5 + $0x2a8] sm:$0xf]
    %v1959 = vld [vmem:[%s5 + $0x2ac] sm:$0xf]
    %v1960 = vld [vmem:[%s5 + $0x2b0] sm:$0xf]
    %v1961 = vld [vmem:[%s5 + $0x2b4] sm:$0xf]
    %v1962 = vld [vmem:[%s5 + $0x2b8] sm:$0xf]
    %v1963 = vld [vmem:[%s5 + $0x2bc] sm:$0xf]
    %v1964 = vld [vmem:[%s5 + $0x2c0] sm:$0xf]
    %v1965 = vld [vmem:[%s5 + $0x2c4] sm:$0xf]
    %v1966 = vld [vmem:[%s5 + $0x2c8] sm:$0xf]
    %v1967 = vld [vmem:[%s5 + $0x2cc] sm:$0xf]
    %v1968 = vld [vmem:[%s5 + $0x2d0] sm:$0xf]
    %v1969 = vld [vmem:[%s5 + $0x2d4] sm:$0xf]
    %v1970 = vld [vmem:[%s5 + $0x2d8] sm:$0xf]
    %v1971 = vld [vmem:[%s5 + $0x2dc] sm:$0xf]
    %v1972 = vld [vmem:[%s5 + $0x2e0] sm:$0xf]
    %v1973 = vld [vmem:[%s5 + $0x2e4] sm:$0xf]
    %v1974 = vld [vmem:[%s5 + $0x2e8] sm:$0xf]
    %v1975 = vld [vmem:[%s5 + $0x2ec] sm:$0xf]
    %v1976 = vld [vmem:[%s5 + $0x2f0] sm:$0xf]
    %v1977 = vld [vmem:[%s5 + $0x2f4] sm:$0xf]
    %v1978 = vld [vmem:[%s5 + $0x2f8] sm:$0xf]
    %v1979 = vld [vmem:[%s5 + $0x2fc] sm:$0xf]
    %v1980 = vld [vmem:[%s5 + $0x300] sm:$0xf]
    %v1981 = vld [vmem:[%s5 + $0x304] sm:$0xf]
    %v1982 = vld [vmem:[%s5 + $0x308] sm:$0xf]
    %v1983 = vld [vmem:[%s5 + $0x30c] sm:$0xf]
    %v1984 = vld [vmem:[%s5 + $0x310] sm:$0xf]
    %v1985 = vld [vmem:[%s5 + $0x314] sm:$0xf]
    %v1986 = vld [vmem:[%s5 + $0x318] sm:$0xf]
    %v1987 = vld [vmem:[%s5 + $0x31c] sm:$0xf]
    %v1988 = vld [vmem:[%s5 + $0x320] sm:$0xf]
    %v1989 = vld [vmem:[%s5 + $0x324] sm:$0xf]
    %v1990 = vld [vmem:[%s5 + $0x328] sm:$0xf]
    %v1991 = vld [vmem:[%s5 + $0x32c] sm:$0xf]
    %v1992 = vld [vmem:[%s5 + $0x330] sm:$0xf]
    %v1993 = vld [vmem:[%s5 + $0x334] sm:$0xf]
    %v1994 = vld [vmem:[%s5 + $0x338] sm:$0xf]
    %v1995 = vld [vmem:[%s5 + $0x33c] sm:$0xf]
    %v1996 = vld [vmem:[%s5 + $0x340] sm:$0xf]
    %v1997 = vld [vmem:[%s5 + $0x344] sm:$0xf]
    %v1998 = vld [vmem:[%s5 + $0x348] sm:$0xf]
    %v1999 = vld [vmem:[%s5 + $0x34c] sm:$0xf]
    %v2000 = vld [vmem:[%s5 + $0x350] sm:$0xf]
    %v2001 = vld [vmem:[%s5 + $0x354] sm:$0xf]
    %v2002 = vld [vmem:[%s5 + $0x358] sm:$0xf]
    %v2003 = vld [vmem:[%s5 + $0x35c] sm:$0xf]
    %v2004 = vld [vmem:[%s5 + $0x360] sm:$0xf]
    %v2005 = vld [vmem:[%s5 + $0x364] sm:$0xf]
    %v2006 = vld [vmem:[%s5 + $0x368] sm:$0xf]
    %v2007 = vld [vmem:[%s5 + $0x36c] sm:$0xf]
    %v2008 = vld [vmem:[%s5 + $0x370] sm:$0xf]
    %v2009 = vld [vmem:[%s5 + $0x374] sm:$0xf]
    %v2010 = vld [vmem:[%s5 + $0x378] sm:$0xf]
    %v2011 = vld [vmem:[%s5 + $0x37c] sm:$0xf]
    %v2012 = vld [vmem:[%s5 + $0x380] sm:$0xf]
    %v2013 = vld [vmem:[%s5 + $0x384] sm:$0xf]
    %v2014 = vld [vmem:[%s5 + $0x388] sm:$0xf]
    %v2015 = vld [vmem:[%s5 + $0x38c] sm:$0xf]
    %v2016 = vld [vmem:[%s5 + $0x390] sm:$0xf]
    %v2017 = vld [vmem:[%s5 + $0x394] sm:$0xf]
    %v2018 = vld [vmem:[%s5 + $0x398] sm:$0xf]
    %v2019 = vld [vmem:[%s5 + $0x39c] sm:$0xf]
    %v2020 = vld [vmem:[%s5 + $0x3a0] sm:$0xf]
    %v2021 = vld [vmem:[%s5 + $0x3a4] sm:$0xf]
    %v2022 = vld [vmem:[%s5 + $0x3a8] sm:$0xf]
    %v2023 = vld [vmem:[%s5 + $0x3ac] sm:$0xf]
    %v2024 = vld [vmem:[%s5 + $0x3b0] sm:$0xf]
    %v2025 = vld [vmem:[%s5 + $0x3b4] sm:$0xf]
    %v2026 = vld [vmem:[%s5 + $0x3b8] sm:$0xf]
    %v2027 = vld [vmem:[%s5 + $0x3bc] sm:$0xf]
    %v2028 = vld [vmem:[%s5 + $0x3c0] sm:$0xf]
    %v2029 = vld [vmem:[%s5 + $0x3c4] sm:$0xf]
    %v2030 = vld [vmem:[%s5 + $0x3c8] sm:$0xf]
    %v2031 = vld [vmem:[%s5 + $0x3cc] sm:$0xf]
    %v2032 = vld [vmem:[%s5 + $0x3d0] sm:$0xf]
    %v2033 = vld [vmem:[%s5 + $0x3d4] sm:$0xf]
    %v2034 = vld [vmem:[%s5 + $0x3d8] sm:$0xf]
    %v2035 = vld [vmem:[%s5 + $0x3dc] sm:$0xf]
    %v2036 = vld [vmem:[%s5 + $0x3e0] sm:$0xf]
    %v2037 = vld [vmem:[%s5 + $0x3e4] sm:$0xf]
    %v2038 = vld [vmem:[%s5 + $0x3e8] sm:$0xf]
    %v2039 = vld [vmem:[%s5 + $0x3ec] sm:$0xf]
    %v2040 = vld [vmem:[%s5 + $0x3f0] sm:$0xf]
    %v2041 = vld [vmem:[%s5 + $0x3f4] sm:$0xf]
    %v2042 = vld [vmem:[%s5 + $0x3f8] sm:$0xf]
    %v2043 = vld [vmem:[%s5 + $0x3fc] sm:$0xf]
    %v2044 = vld [vmem:[%s5 + $0x400] sm:$0xf]
    %v2045 = vld [vmem:[%s5 + $0x404] sm:$0xf]
    %v2046 = vld [vmem:[%s5 + $0x408] sm:$0xf]
    %v2047 = vld [vmem:[%s5 + $0x40c] sm:$0xf]
    %v2048 = vld [vmem:[%s5 + $0x410] sm:$0xf]
    %v2049 = vld [vmem:[%s5 + $0x414] sm:$0xf]
    %v2050 = vld [vmem:[%s5 + $0x418] sm:$0xf]
    %v2051 = vld [vmem:[%s5 + $0x41c] sm:$0xf]
    %v2052 = vld [vmem:[%s5 + $0x420] sm:$0xf]
    %v2053 = vld [vmem:[%s5 + $0x424] sm:$0xf]
    %v2054 = vld [vmem:[%s5 + $0x428] sm:$0xf]
    %v2055 = vld [vmem:[%s5 + $0x42c] sm:$0xf]
    %v2056 = vld [vmem:[%s5 + $0x430] sm:$0xf]
    %v2057 = vld [vmem:[%s5 + $0x434] sm:$0xf]
    %v2058 = vld [vmem:[%s5 + $0x438] sm:$0xf]
    %v2059 = vld [vmem:[%s5 + $0x43c] sm:$0xf]
    %v2060 = vld [vmem:[%s5 + $0x440] sm:$0xf]
    %v2061 = vld [vmem:[%s5 + $0x444] sm:$0xf]
    %v2062 = vld [vmem:[%s5 + $0x448] sm:$0xf]
    %v2063 = vld [vmem:[%s5 + $0x44c] sm:$0xf]
    %v2064 = vld [vmem:[%s5 + $0x450] sm:$0xf]
    %v2065 = vld [vmem:[%s5 + $0x454] sm:$0xf]
    %v2066 = vld [vmem:[%s5 + $0x458] sm:$0xf]
    %v2067 = vld [vmem:[%s5 + $0x45c] sm:$0xf]
    %v2068 = vld [vmem:[%s5 + $0x460] sm:$0xf]
    %v2069 = vld [vmem:[%s5 + $0x464] sm:$0xf]
    %v2070 = vld [vmem:[%s5 + $0x468] sm:$0xf]
    %v2071 = vld [vmem:[%s5 + $0x46c] sm:$0xf]
    %v2072 = vld [vmem:[%s5 + $0x470] sm:$0xf]
    %v2073 = vld [vmem:[%s5 + $0x474] sm:$0xf]
    %v2074 = vld [vmem:[%s5 + $0x478] sm:$0xf]
    %v2075 = vld [vmem:[%s5 + $0x47c] sm:$0xf]
    %v2076 = vld [vmem:[%s5 + $0x480] sm:$0xf]
    %v2077 = vld [vmem:[%s5 + $0x484] sm:$0xf]
    %v2078 = vld [vmem:[%s5 + $0x488] sm:$0xf]
    %v2079 = vld [vmem:[%s5 + $0x48c] sm:$0xf]
    %v2080 = vld [vmem:[%s5 + $0x490] sm:$0xf]
    %v2081 = vld [vmem:[%s5 + $0x494] sm:$0xf]
    %v2082 = vld [vmem:[%s5 + $0x498] sm:$0xf]
    %v2083 = vld [vmem:[%s5 + $0x49c] sm:$0xf]
    %v2084 = vld [vmem:[%s5 + $0x4a0] sm:$0xf]
    %v2085 = vld [vmem:[%s5 + $0x4a4] sm:$0xf]
    %v2086 = vld [vmem:[%s5 + $0x4a8] sm:$0xf]
    %v2087 = vld [vmem:[%s5 + $0x4ac] sm:$0xf]
    %v2088 = vld [vmem:[%s5 + $0x4b0] sm:$0xf]
    %v2089 = vld [vmem:[%s5 + $0x4b4] sm:$0xf]
    %v2090 = vld [vmem:[%s5 + $0x4b8] sm:$0xf]
    %v2091 = vld [vmem:[%s5 + $0x4bc] sm:$0xf]
    %v2092 = vld [vmem:[%s5 + $0x4c0] sm:$0xf]
    %v2093 = vld [vmem:[%s5 + $0x4c4] sm:$0xf]
    %v2094 = vld [vmem:[%s5 + $0x4c8] sm:$0xf]
    %v2095 = vld [vmem:[%s5 + $0x4cc] sm:$0xf]
    %v2096 = vld [vmem:[%s5 + $0x4d0] sm:$0xf]
    %v2097 = vld [vmem:[%s5 + $0x4d4] sm:$0xf]
    %v2098 = vld [vmem:[%s5 + $0x4d8] sm:$0xf]
    %v2099 = vld [vmem:[%s5 + $0x4dc] sm:$0xf]
    %v2100 = vld [vmem:[%s5 + $0x4e0] sm:$0xf]
    %v2101 = vld [vmem:[%s5 + $0x4e4] sm:$0xf]
    %v2102 = vld [vmem:[%s5 + $0x4e8] sm:$0xf]
    %v2103 = vld [vmem:[%s5 + $0x4ec] sm:$0xf]
    %v2104 = vld [vmem:[%s5 + $0x4f0] sm:$0xf]
    %v2105 = vld [vmem:[%s5 + $0x4f4] sm:$0xf]
    %v2106 = vld [vmem:[%s5 + $0x4f8] sm:$0xf]
    %v2107 = vld [vmem:[%s5 + $0x4fc] sm:$0xf]
    %v2108 = vld [vmem:[%s5 + $0x500] sm:$0xf]
    %v2109 = vld [vmem:[%s5 + $0x504] sm:$0xf]
    %v2110 = vld [vmem:[%s5 + $0x508] sm:$0xf]
    %v2111 = vld [vmem:[%s5 + $0x50c] sm:$0xf]
    %v2112 = vld [vmem:[%s5 + $0x510] sm:$0xf]
    %v2113 = vld [vmem:[%s5 + $0x514] sm:$0xf]
    %v2114 = vld [vmem:[%s5 + $0x518] sm:$0xf]
    %v2115 = vld [vmem:[%s5 + $0x51c] sm:$0xf]
    %v2116 = vld [vmem:[%s5 + $0x520] sm:$0xf]
    %v2117 = vld [vmem:[%s5 + $0x524] sm:$0xf]
    %v2118 = vld [vmem:[%s5 + $0x528] sm:$0xf]
    %v2119 = vld [vmem:[%s5 + $0x52c] sm:$0xf]
    %v2120 = vld [vmem:[%s5 + $0x530] sm:$0xf]
    %v2121 = vld [vmem:[%s5 + $0x534] sm:$0xf]
    %v2122 = vld [vmem:[%s5 + $0x538] sm:$0xf]
    %v2123 = vld [vmem:[%s5 + $0x53c] sm:$0xf]
    %v2124 = vld [vmem:[%s5 + $0x540] sm:$0xf]
    %v2125 = vld [vmem:[%s5 + $0x544] sm:$0xf]
    %v2126 = vld [vmem:[%s5 + $0x548] sm:$0xf]
    %v2127 = vld [vmem:[%s5 + $0x54c] sm:$0xf]
    %v2128 = vld [vmem:[%s5 + $0x550] sm:$0xf]
    %v2129 = vld [vmem:[%s5 + $0x554] sm:$0xf]
    %v2130 = vld [vmem:[%s5 + $0x558] sm:$0xf]
    %v2131 = vld [vmem:[%s5 + $0x55c] sm:$0xf]
    %v2132 = vld [vmem:[%s5 + $0x560] sm:$0xf]
    %v2133 = vld [vmem:[%s5 + $0x564] sm:$0xf]
    %v2134 = vld [vmem:[%s5 + $0x568] sm:$0xf]
    %v2135 = vld [vmem:[%s5 + $0x56c] sm:$0xf]
    %v2136 = vld [vmem:[%s5 + $0x570] sm:$0xf]
    %v2137 = vld [vmem:[%s5 + $0x574] sm:$0xf]
    %v2138 = vld [vmem:[%s5 + $0x578] sm:$0xf]
    %v2139 = vld [vmem:[%s5 + $0x57c] sm:$0xf]
    %v2140 = vld [vmem:[%s5 + $0x580] sm:$0xf]
    %v2141 = vld [vmem:[%s5 + $0x584] sm:$0xf]
    %v2142 = vld [vmem:[%s5 + $0x588] sm:$0xf]
    %v2143 = vld [vmem:[%s5 + $0x58c] sm:$0xf]
    %v2144 = vld [vmem:[%s5 + $0x590] sm:$0xf]
    %v2145 = vld [vmem:[%s5 + $0x594] sm:$0xf]
    %v2146 = vld [vmem:[%s5 + $0x598] sm:$0xf]
    %v2147 = vld [vmem:[%s5 + $0x59c] sm:$0xf]
    %v2148 = vld [vmem:[%s5 + $0x5a0] sm:$0xf]
    %v2149 = vld [vmem:[%s5 + $0x5a4] sm:$0xf]
    %v2150 = vld [vmem:[%s5 + $0x5a8] sm:$0xf]
    %v2151 = vld [vmem:[%s5 + $0x5ac] sm:$0xf]
    %v2152 = vld [vmem:[%s5 + $0x5b0] sm:$0xf]
    %v2153 = vld [vmem:[%s5 + $0x5b4] sm:$0xf]
    %v2154 = vld [vmem:[%s5 + $0x5b8] sm:$0xf]
    %v2155 = vld [vmem:[%s5 + $0x5bc] sm:$0xf]
    %v2156 = vld [vmem:[%s5 + $0x5c0] sm:$0xf]
    %v2157 = vld [vmem:[%s5 + $0x5c4] sm:$0xf]
    %v2158 = vld [vmem:[%s5 + $0x5c8] sm:$0xf]
    %v2159 = vld [vmem:[%s5 + $0x5cc] sm:$0xf]
    %v2160 = vld [vmem:[%s5 + $0x5d0] sm:$0xf]
    %v2161 = vld [vmem:[%s5 + $0x5d4] sm:$0xf]
    %v2162 = vld [vmem:[%s5 + $0x5d8] sm:$0xf]
    %v2163 = vld [vmem:[%s5 + $0x5dc] sm:$0xf]
    %v2164 = vld [vmem:[%s5 + $0x5e0] sm:$0xf]
    %v2165 = vld [vmem:[%s5 + $0x5e4] sm:$0xf]
    %v2166 = vld [vmem:[%s5 + $0x5e8] sm:$0xf]
    %v2167 = vld [vmem:[%s5 + $0x5ec] sm:$0xf]
    %v2168 = vld [vmem:[%s5 + $0x5f0] sm:$0xf]
    %v2169 = vld [vmem:[%s5 + $0x5f4] sm:$0xf]
    %v2170 = vld [vmem:[%s5 + $0x5f8] sm:$0xf]
    %v2171 = vld [vmem:[%s5 + $0x5fc] sm:$0xf]
    %v2172 = vld [vmem:[%s5 + $0x600] sm:$0xf]
    %v2173 = vld [vmem:[%s5 + $0x604] sm:$0xf]
    %v2174 = vld [vmem:[%s5 + $0x608] sm:$0xf]
    %v2175 = vld [vmem:[%s5 + $0x60c] sm:$0xf]
    %v2176 = vld [vmem:[%s5 + $0x610] sm:$0xf]
    %v2177 = vld [vmem:[%s5 + $0x614] sm:$0xf]
    %v2178 = vld [vmem:[%s5 + $0x618] sm:$0xf]
    %v2179 = vld [vmem:[%s5 + $0x61c] sm:$0xf]
    %v2180 = vld [vmem:[%s5 + $0x620] sm:$0xf]
    %v2181 = vld [vmem:[%s5 + $0x624] sm:$0xf]
    %v2182 = vld [vmem:[%s5 + $0x628] sm:$0xf]
    %v2183 = vld [vmem:[%s5 + $0x62c] sm:$0xf]
    %v2184 = vld [vmem:[%s5 + $0x630] sm:$0xf]
    %v2185 = vld [vmem:[%s5 + $0x634] sm:$0xf]
    %v2186 = vld [vmem:[%s5 + $0x638] sm:$0xf]
    %v2187 = vld [vmem:[%s5 + $0x63c] sm:$0xf]
    %v2188 = vld [vmem:[%s5 + $0x640] sm:$0xf]
    %v2189 = vld [vmem:[%s5 + $0x644] sm:$0xf]
    %v2190 = vld [vmem:[%s5 + $0x648] sm:$0xf]
    %v2191 = vld [vmem:[%s5 + $0x64c] sm:$0xf]
    %v2192 = vld [vmem:[%s5 + $0x650] sm:$0xf]
    %v2193 = vld [vmem:[%s5 + $0x654] sm:$0xf]
    %v2194 = vld [vmem:[%s5 + $0x658] sm:$0xf]
    %v2195 = vld [vmem:[%s5 + $0x65c] sm:$0xf]
    %v2196 = vld [vmem:[%s5 + $0x660] sm:$0xf]
    %v2197 = vld [vmem:[%s5 + $0x664] sm:$0xf]
    %v2198 = vld [vmem:[%s5 + $0x668] sm:$0xf]
    %v2199 = vld [vmem:[%s5 + $0x66c] sm:$0xf]
    %v2200 = vld [vmem:[%s5 + $0x670] sm:$0xf]
    %v2201 = vld [vmem:[%s5 + $0x674] sm:$0xf]
    %v2202 = vld [vmem:[%s5 + $0x678] sm:$0xf]
    %v2203 = vld [vmem:[%s5 + $0x67c] sm:$0xf]
    %v2204 = vld [vmem:[%s5 + $0x680] sm:$0xf]
    %v2205 = vld [vmem:[%s5 + $0x684] sm:$0xf]
    %v2206 = vld [vmem:[%s5 + $0x688] sm:$0xf]
    %v2207 = vld [vmem:[%s5 + $0x68c] sm:$0xf]
    %v2208 = vld [vmem:[%s5 + $0x690] sm:$0xf]
    %v2209 = vld [vmem:[%s5 + $0x694] sm:$0xf]
    %v2210 = vld [vmem:[%s5 + $0x698] sm:$0xf]
    %v2211 = vld [vmem:[%s5 + $0x69c] sm:$0xf]
    %v2212 = vld [vmem:[%s5 + $0x6a0] sm:$0xf]
    %v2213 = vld [vmem:[%s5 + $0x6a4] sm:$0xf]
    %v2214 = vld [vmem:[%s5 + $0x6a8] sm:$0xf]
    %v2215 = vld [vmem:[%s5 + $0x6ac] sm:$0xf]
    %v2216 = vld [vmem:[%s5 + $0x6b0] sm:$0xf]
    %v2217 = vld [vmem:[%s5 + $0x6b4] sm:$0xf]
    %v2218 = vld [vmem:[%s5 + $0x6b8] sm:$0xf]
    %v2219 = vld [vmem:[%s5 + $0x6bc] sm:$0xf]
    %v2220 = vld [vmem:[%s5 + $0x6c0] sm:$0xf]
    %v2221 = vld [vmem:[%s5 + $0x6c4] sm:$0xf]
    %v2222 = vld [vmem:[%s5 + $0x6c8] sm:$0xf]
    %v2223 = vld [vmem:[%s5 + $0x6cc] sm:$0xf]
    %v2224 = vld [vmem:[%s5 + $0x6d0] sm:$0xf]
    %v2225 = vld [vmem:[%s5 + $0x6d4] sm:$0xf]
    %v2226 = vld [vmem:[%s5 + $0x6d8] sm:$0xf]
    %v2227 = vld [vmem:[%s5 + $0x6dc] sm:$0xf]
    %v2228 = vld [vmem:[%s5 + $0x6e0] sm:$0xf]
    %v2229 = vld [vmem:[%s5 + $0x6e4] sm:$0xf]
    %v2230 = vld [vmem:[%s5 + $0x6e8] sm:$0xf]
    %v2231 = vld [vmem:[%s5 + $0x6ec] sm:$0xf]
    %v2232 = vld [vmem:[%s5 + $0x6f0] sm:$0xf]
    %v2233 = vld [vmem:[%s5 + $0x6f4] sm:$0xf]
    %v2234 = vld [vmem:[%s5 + $0x6f8] sm:$0xf]
    %v2235 = vld [vmem:[%s5 + $0x6fc] sm:$0xf]
    %v2236 = vld [vmem:[%s5 + $0x700] sm:$0xf]
    %v2237 = vld [vmem:[%s5 + $0x704] sm:$0xf]
    %v2238 = vld [vmem:[%s5 + $0x708] sm:$0xf]
    %v2239 = vld [vmem:[%s5 + $0x70c] sm:$0xf]
    %v2240 = vld [vmem:[%s5 + $0x710] sm:$0xf]
    %v2241 = vld [vmem:[%s5 + $0x714] sm:$0xf]
    %v2242 = vld [vmem:[%s5 + $0x718] sm:$0xf]
    %v2243 = vld [vmem:[%s5 + $0x71c] sm:$0xf]
    %v2244 = vld [vmem:[%s5 + $0x720] sm:$0xf]
    %v2245 = vld [vmem:[%s5 + $0x724] sm:$0xf]
    %v2246 = vld [vmem:[%s5 + $0x728] sm:$0xf]
    %v2247 = vld [vmem:[%s5 + $0x72c] sm:$0xf]
    %v2248 = vld [vmem:[%s5 + $0x730] sm:$0xf]
    %v2249 = vld [vmem:[%s5 + $0x734] sm:$0xf]
    %v2250 = vld [vmem:[%s5 + $0x738] sm:$0xf]
    %v2251 = vld [vmem:[%s5 + $0x73c] sm:$0xf]
    %v2252 = vld [vmem:[%s5 + $0x740] sm:$0xf]
    %v2253 = vld [vmem:[%s5 + $0x744] sm:$0xf]
    %v2254 = vld [vmem:[%s5 + $0x748] sm:$0xf]
    %v2255 = vld [vmem:[%s5 + $0x74c] sm:$0xf]
    %v2256 = vld [vmem:[%s5 + $0x750] sm:$0xf]
    %v2257 = vld [vmem:[%s5 + $0x754] sm:$0xf]
    %v2258 = vld [vmem:[%s5 + $0x758] sm:$0xf]
    %v2259 = vld [vmem:[%s5 + $0x75c] sm:$0xf]
    %v2260 = vld [vmem:[%s5 + $0x760] sm:$0xf]
    %v2261 = vld [vmem:[%s5 + $0x764] sm:$0xf]
    %v2262 = vld [vmem:[%s5 + $0x768] sm:$0xf]
    %v2263 = vld [vmem:[%s5 + $0x76c] sm:$0xf]
    %v2264 = vld [vmem:[%s5 + $0x770] sm:$0xf]
    %v2265 = vld [vmem:[%s5 + $0x774] sm:$0xf]
    %v2266 = vld [vmem:[%s5 + $0x778] sm:$0xf]
    %v2267 = vld [vmem:[%s5 + $0x77c] sm:$0xf]
    %v2268 = vld [vmem:[%s5 + $0x780] sm:$0xf]
    %v2269 = vld [vmem:[%s5 + $0x784] sm:$0xf]
    %v2270 = vld [vmem:[%s5 + $0x788] sm:$0xf]
    %v2271 = vld [vmem:[%s5 + $0x78c] sm:$0xf]
    %v2272 = vld [vmem:[%s5 + $0x790] sm:$0xf]
    %v2273 = vld [vmem:[%s5 + $0x794] sm:$0xf]
    %v2274 = vld [vmem:[%s5 + $0x798] sm:$0xf]
    %v2275 = vld [vmem:[%s5 + $0x79c] sm:$0xf]
    %v2276 = vld [vmem:[%s5 + $0x7a0] sm:$0xf]
    %v2277 = vld [vmem:[%s5 + $0x7a4] sm:$0xf]
    %v2278 = vld [vmem:[%s5 + $0x7a8] sm:$0xf]
    %v2279 = vld [vmem:[%s5 + $0x7ac] sm:$0xf]
    %v2280 = vld [vmem:[%s5 + $0x7b0] sm:$0xf]
    %v2281 = vld [vmem:[%s5 + $0x7b4] sm:$0xf]
    %v2282 = vld [vmem:[%s5 + $0x7b8] sm:$0xf]
    %v2283 = vld [vmem:[%s5 + $0x7bc] sm:$0xf]
    %v2284 = vld [vmem:[%s5 + $0x7c0] sm:$0xf]
    %v2285 = vld [vmem:[%s5 + $0x7c4] sm:$0xf]
    %v2286 = vld [vmem:[%s5 + $0x7c8] sm:$0xf]
    %v2287 = vld [vmem:[%s5 + $0x7cc] sm:$0xf]
    %v2288 = vld [vmem:[%s5 + $0x7d0] sm:$0xf]
    %v2289 = vld [vmem:[%s5 + $0x7d4] sm:$0xf]
    %v2290 = vld [vmem:[%s5 + $0x7d8] sm:$0xf]
    %v2291 = vld [vmem:[%s5 + $0x7dc] sm:$0xf]
    %v2292 = vld [vmem:[%s5 + $0x7e0] sm:$0xf]
    %v2293 = vld [vmem:[%s5 + $0x7e4] sm:$0xf]
    %v2294 = vld [vmem:[%s5 + $0x7e8] sm:$0xf]
    %v2295 = vld [vmem:[%s5 + $0x7ec] sm:$0xf]
    %v2296 = vld [vmem:[%s5 + $0x7f0] sm:$0xf]
    %v2297 = vld [vmem:[%s5 + $0x7f4] sm:$0xf]
    %v2298 = vld [vmem:[%s5 + $0x7f8] sm:$0xf]
    %v2299 = vld [vmem:[%s5 + $0x7fc] sm:$0xf]
    %v2300 = vld [vmem:[%s6] sm:$0x1]
    %v2302 = vlaneseq
    %v2303 = vshrl.u32 %v2302, 7
    %v2304 = vsub.s32 0, %v2303
    %v2305 = vrot.slane %v2300, %v2304
    %v2819 = vunpack.c.l.b16 %v1788
    %v2820 = vunpack.c.l.b16 %v1789
    %v2821 = vunpack.c.l.b16 %v1790
    %v2822 = vunpack.c.l.b16 %v1791
    %v2823 = vunpack.c.l.b16 %v1792
    %v2824 = vunpack.c.l.b16 %v1793
    %v2825 = vunpack.c.l.b16 %v1794
    %v2826 = vunpack.c.l.b16 %v1795
    %v2827 = vunpack.c.l.b16 %v1796
    %v2828 = vunpack.c.l.b16 %v1797
    %v2829 = vunpack.c.l.b16 %v1798
    %v2830 = vunpack.c.l.b16 %v1799
    %v2831 = vunpack.c.l.b16 %v1800
    %v2832 = vunpack.c.l.b16 %v1801
    %v2833 = vunpack.c.l.b16 %v1802
    %v2834 = vunpack.c.l.b16 %v1803
    %v2835 = vunpack.c.l.b16 %v1804
    %v2836 = vunpack.c.l.b16 %v1805
    %v2837 = vunpack.c.l.b16 %v1806
    %v2838 = vunpack.c.l.b16 %v1807
    %v2839 = vunpack.c.l.b16 %v1808
    %v2840 = vunpack.c.l.b16 %v1809
    %v2841 = vunpack.c.l.b16 %v1810
    %v2842 = vunpack.c.l.b16 %v1811
    %v2843 = vunpack.c.l.b16 %v1812
    %v2844 = vunpack.c.l.b16 %v1813
    %v2845 = vunpack.c.l.b16 %v1814
    %v2846 = vunpack.c.l.b16 %v1815
    %v2847 = vunpack.c.l.b16 %v1816
    %v2848 = vunpack.c.l.b16 %v1817
    %v2849 = vunpack.c.l.b16 %v1818
    %v2850 = vunpack.c.l.b16 %v1819
    %v2851 = vunpack.c.l.b16 %v1820
    %v2852 = vunpack.c.l.b16 %v1821
    %v2853 = vunpack.c.l.b16 %v1822
    %v2854 = vunpack.c.l.b16 %v1823
    %v2855 = vunpack.c.l.b16 %v1824
    %v2856 = vunpack.c.l.b16 %v1825
    %v2857 = vunpack.c.l.b16 %v1826
    %v2858 = vunpack.c.l.b16 %v1827
    %v2859 = vunpack.c.l.b16 %v1828
    %v2860 = vunpack.c.l.b16 %v1829
    %v2861 = vunpack.c.l.b16 %v1830
    %v2862 = vunpack.c.l.b16 %v1831
    %v2863 = vunpack.c.l.b16 %v1832
    %v2864 = vunpack.c.l.b16 %v1833
    %v2865 = vunpack.c.l.b16 %v1834
    %v2866 = vunpack.c.l.b16 %v1835
    %v2867 = vunpack.c.l.b16 %v1836
    %v2868 = vunpack.c.l.b16 %v1837
    %v2869 = vunpack.c.l.b16 %v1838
    %v2870 = vunpack.c.l.b16 %v1839
    %v2871 = vunpack.c.l.b16 %v1840
    %v2872 = vunpack.c.l.b16 %v1841
    %v2873 = vunpack.c.l.b16 %v1842
    %v2874 = vunpack.c.l.b16 %v1843
    %v2875 = vunpack.c.l.b16 %v1844
    %v2876 = vunpack.c.l.b16 %v1845
    %v2877 = vunpack.c.l.b16 %v1846
    %v2878 = vunpack.c.l.b16 %v1847
    %v2879 = vunpack.c.l.b16 %v1848
    %v2880 = vunpack.c.l.b16 %v1849
    %v2881 = vunpack.c.l.b16 %v1850
    %v2882 = vunpack.c.l.b16 %v1851
    %v2883 = vunpack.c.l.b16 %v1852
    %v2884 = vunpack.c.l.b16 %v1853
    %v2885 = vunpack.c.l.b16 %v1854
    %v2886 = vunpack.c.l.b16 %v1855
    %v2887 = vunpack.c.l.b16 %v1856
    %v2888 = vunpack.c.l.b16 %v1857
    %v2889 = vunpack.c.l.b16 %v1858
    %v2890 = vunpack.c.l.b16 %v1859
    %v2891 = vunpack.c.l.b16 %v1860
    %v2892 = vunpack.c.l.b16 %v1861
    %v2893 = vunpack.c.l.b16 %v1862
    %v2894 = vunpack.c.l.b16 %v1863
    %v2895 = vunpack.c.l.b16 %v1864
    %v2896 = vunpack.c.l.b16 %v1865
    %v2897 = vunpack.c.l.b16 %v1866
    %v2898 = vunpack.c.l.b16 %v1867
    %v2899 = vunpack.c.l.b16 %v1868
    %v2900 = vunpack.c.l.b16 %v1869
    %v2901 = vunpack.c.l.b16 %v1870
    %v2902 = vunpack.c.l.b16 %v1871
    %v2903 = vunpack.c.l.b16 %v1872
    %v2904 = vunpack.c.l.b16 %v1873
    %v2905 = vunpack.c.l.b16 %v1874
    %v2906 = vunpack.c.l.b16 %v1875
    %v2907 = vunpack.c.l.b16 %v1876
    %v2908 = vunpack.c.l.b16 %v1877
    %v2909 = vunpack.c.l.b16 %v1878
    %v2910 = vunpack.c.l.b16 %v1879
    %v2911 = vunpack.c.l.b16 %v1880
    %v2912 = vunpack.c.l.b16 %v1881
    %v2913 = vunpack.c.l.b16 %v1882
    %v2914 = vunpack.c.l.b16 %v1883
    %v2915 = vunpack.c.l.b16 %v1884
    %v2916 = vunpack.c.l.b16 %v1885
    %v2917 = vunpack.c.l.b16 %v1886
    %v2918 = vunpack.c.l.b16 %v1887
    %v2919 = vunpack.c.l.b16 %v1888
    %v2920 = vunpack.c.l.b16 %v1889
    %v2921 = vunpack.c.l.b16 %v1890
    %v2922 = vunpack.c.l.b16 %v1891
    %v2923 = vunpack.c.l.b16 %v1892
    %v2924 = vunpack.c.l.b16 %v1893
    %v2925 = vunpack.c.l.b16 %v1894
    %v2926 = vunpack.c.l.b16 %v1895
    %v2927 = vunpack.c.l.b16 %v1896
    %v2928 = vunpack.c.l.b16 %v1897
    %v2929 = vunpack.c.l.b16 %v1898
    %v2930 = vunpack.c.l.b16 %v1899
    %v2931 = vunpack.c.l.b16 %v1900
    %v2932 = vunpack.c.l.b16 %v1901
    %v2933 = vunpack.c.l.b16 %v1902
    %v2934 = vunpack.c.l.b16 %v1903
    %v2935 = vunpack.c.l.b16 %v1904
    %v2936 = vunpack.c.l.b16 %v1905
    %v2937 = vunpack.c.l.b16 %v1906
    %v2938 = vunpack.c.l.b16 %v1907
    %v2939 = vunpack.c.l.b16 %v1908
    %v2940 = vunpack.c.l.b16 %v1909
    %v2941 = vunpack.c.l.b16 %v1910
    %v2942 = vunpack.c.l.b16 %v1911
    %v2943 = vunpack.c.l.b16 %v1912
    %v2944 = vunpack.c.l.b16 %v1913
    %v2945 = vunpack.c.l.b16 %v1914
    %v2946 = vunpack.c.l.b16 %v1915
    %v2947 = vunpack.c.l.b16 %v1916
    %v2948 = vunpack.c.l.b16 %v1917
    %v2949 = vunpack.c.l.b16 %v1918
    %v2950 = vunpack.c.l.b16 %v1919
    %v2951 = vunpack.c.l.b16 %v1920
    %v2952 = vunpack.c.l.b16 %v1921
    %v2953 = vunpack.c.l.b16 %v1922
    %v2954 = vunpack.c.l.b16 %v1923
    %v2955 = vunpack.c.l.b16 %v1924
    %v2956 = vunpack.c.l.b16 %v1925
    %v2957 = vunpack.c.l.b16 %v1926
    %v2958 = vunpack.c.l.b16 %v1927
    %v2959 = vunpack.c.l.b16 %v1928
    %v2960 = vunpack.c.l.b16 %v1929
    %v2961 = vunpack.c.l.b16 %v1930
    %v2962 = vunpack.c.l.b16 %v1931
    %v2963 = vunpack.c.l.b16 %v1932
    %v2964 = vunpack.c.l.b16 %v1933
    %v2965 = vunpack.c.l.b16 %v1934
    %v2966 = vunpack.c.l.b16 %v1935
    %v2967 = vunpack.c.l.b16 %v1936
    %v2968 = vunpack.c.l.b16 %v1937
    %v2969 = vunpack.c.l.b16 %v1938
    %v2970 = vunpack.c.l.b16 %v1939
    %v2971 = vunpack.c.l.b16 %v1940
    %v2972 = vunpack.c.l.b16 %v1941
    %v2973 = vunpack.c.l.b16 %v1942
    %v2974 = vunpack.c.l.b16 %v1943
    %v2975 = vunpack.c.l.b16 %v1944
    %v2976 = vunpack.c.l.b16 %v1945
    %v2977 = vunpack.c.l.b16 %v1946
    %v2978 = vunpack.c.l.b16 %v1947
    %v2979 = vunpack.c.l.b16 %v1948
    %v2980 = vunpack.c.l.b16 %v1949
    %v2981 = vunpack.c.l.b16 %v1950
    %v2982 = vunpack.c.l.b16 %v1951
    %v2983 = vunpack.c.l.b16 %v1952
    %v2984 = vunpack.c.l.b16 %v1953
    %v2985 = vunpack.c.l.b16 %v1954
    %v2986 = vunpack.c.l.b16 %v1955
    %v2987 = vunpack.c.l.b16 %v1956
    %v2988 = vunpack.c.l.b16 %v1957
    %v2989 = vunpack.c.l.b16 %v1958
    %v2990 = vunpack.c.l.b16 %v1959
    %v2991 = vunpack.c.l.b16 %v1960
    %v2992 = vunpack.c.l.b16 %v1961
    %v2993 = vunpack.c.l.b16 %v1962
    %v2994 = vunpack.c.l.b16 %v1963
    %v2995 = vunpack.c.l.b16 %v1964
    %v2996 = vunpack.c.l.b16 %v1965
    %v2997 = vunpack.c.l.b16 %v1966
    %v2998 = vunpack.c.l.b16 %v1967
    %v2999 = vunpack.c.l.b16 %v1968
    %v3000 = vunpack.c.l.b16 %v1969
    %v3001 = vunpack.c.l.b16 %v1970
    %v3002 = vunpack.c.l.b16 %v1971
    %v3003 = vunpack.c.l.b16 %v1972
    %v3004 = vunpack.c.l.b16 %v1973
    %v3005 = vunpack.c.l.b16 %v1974
    %v3006 = vunpack.c.l.b16 %v1975
    %v3007 = vunpack.c.l.b16 %v1976
    %v3008 = vunpack.c.l.b16 %v1977
    %v3009 = vunpack.c.l.b16 %v1978
    %v3010 = vunpack.c.l.b16 %v1979
    %v3011 = vunpack.c.l.b16 %v1980
    %v3012 = vunpack.c.l.b16 %v1981
    %v3013 = vunpack.c.l.b16 %v1982
    %v3014 = vunpack.c.l.b16 %v1983
    %v3015 = vunpack.c.l.b16 %v1984
    %v3016 = vunpack.c.l.b16 %v1985
    %v3017 = vunpack.c.l.b16 %v1986
    %v3018 = vunpack.c.l.b16 %v1987
    %v3019 = vunpack.c.l.b16 %v1988
    %v3020 = vunpack.c.l.b16 %v1989
    %v3021 = vunpack.c.l.b16 %v1990
    %v3022 = vunpack.c.l.b16 %v1991
    %v3023 = vunpack.c.l.b16 %v1992
    %v3024 = vunpack.c.l.b16 %v1993
    %v3025 = vunpack.c.l.b16 %v1994
    %v3026 = vunpack.c.l.b16 %v1995
    %v3027 = vunpack.c.l.b16 %v1996
    %v3028 = vunpack.c.l.b16 %v1997
    %v3029 = vunpack.c.l.b16 %v1998
    %v3030 = vunpack.c.l.b16 %v1999
    %v3031 = vunpack.c.l.b16 %v2000
    %v3032 = vunpack.c.l.b16 %v2001
    %v3033 = vunpack.c.l.b16 %v2002
    %v3034 = vunpack.c.l.b16 %v2003
    %v3035 = vunpack.c.l.b16 %v2004
    %v3036 = vunpack.c.l.b16 %v2005
    %v3037 = vunpack.c.l.b16 %v2006
    %v3038 = vunpack.c.l.b16 %v2007
    %v3039 = vunpack.c.l.b16 %v2008
    %v3040 = vunpack.c.l.b16 %v2009
    %v3041 = vunpack.c.l.b16 %v2010
    %v3042 = vunpack.c.l.b16 %v2011
    %v3043 = vunpack.c.l.b16 %v2012
    %v3044 = vunpack.c.l.b16 %v2013
    %v3045 = vunpack.c.l.b16 %v2014
    %v3046 = vunpack.c.l.b16 %v2015
    %v3047 = vunpack.c.l.b16 %v2016
    %v3048 = vunpack.c.l.b16 %v2017
    %v3049 = vunpack.c.l.b16 %v2018
    %v3050 = vunpack.c.l.b16 %v2019
    %v3051 = vunpack.c.l.b16 %v2020
    %v3052 = vunpack.c.l.b16 %v2021
    %v3053 = vunpack.c.l.b16 %v2022
    %v3054 = vunpack.c.l.b16 %v2023
    %v3055 = vunpack.c.l.b16 %v2024
    %v3056 = vunpack.c.l.b16 %v2025
    %v3057 = vunpack.c.l.b16 %v2026
    %v3058 = vunpack.c.l.b16 %v2027
    %v3059 = vunpack.c.l.b16 %v2028
    %v3060 = vunpack.c.l.b16 %v2029
    %v3061 = vunpack.c.l.b16 %v2030
    %v3062 = vunpack.c.l.b16 %v2031
    %v3063 = vunpack.c.l.b16 %v2032
    %v3064 = vunpack.c.l.b16 %v2033
    %v3065 = vunpack.c.l.b16 %v2034
    %v3066 = vunpack.c.l.b16 %v2035
    %v3067 = vunpack.c.l.b16 %v2036
    %v3068 = vunpack.c.l.b16 %v2037
    %v3069 = vunpack.c.l.b16 %v2038
    %v3070 = vunpack.c.l.b16 %v2039
    %v3071 = vunpack.c.l.b16 %v2040
    %v3072 = vunpack.c.l.b16 %v2041
    %v3073 = vunpack.c.l.b16 %v2042
    %v3074 = vunpack.c.l.b16 %v2043
    %v3075 = vunpack.c.l.b16 %v2044
    %v3076 = vunpack.c.l.b16 %v2045
    %v3077 = vunpack.c.l.b16 %v2046
    %v3078 = vunpack.c.l.b16 %v2047
    %v3079 = vunpack.c.l.b16 %v2048
    %v3080 = vunpack.c.l.b16 %v2049
    %v3081 = vunpack.c.l.b16 %v2050
    %v3082 = vunpack.c.l.b16 %v2051
    %v3083 = vunpack.c.l.b16 %v2052
    %v3084 = vunpack.c.l.b16 %v2053
    %v3085 = vunpack.c.l.b16 %v2054
    %v3086 = vunpack.c.l.b16 %v2055
    %v3087 = vunpack.c.l.b16 %v2056
    %v3088 = vunpack.c.l.b16 %v2057
    %v3089 = vunpack.c.l.b16 %v2058
    %v3090 = vunpack.c.l.b16 %v2059
    %v3091 = vunpack.c.l.b16 %v2060
    %v3092 = vunpack.c.l.b16 %v2061
    %v3093 = vunpack.c.l.b16 %v2062
    %v3094 = vunpack.c.l.b16 %v2063
    %v3095 = vunpack.c.l.b16 %v2064
    %v3096 = vunpack.c.l.b16 %v2065
    %v3097 = vunpack.c.l.b16 %v2066
    %v3098 = vunpack.c.l.b16 %v2067
    %v3099 = vunpack.c.l.b16 %v2068
    %v3100 = vunpack.c.l.b16 %v2069
    %v3101 = vunpack.c.l.b16 %v2070
    %v3102 = vunpack.c.l.b16 %v2071
    %v3103 = vunpack.c.l.b16 %v2072
    %v3104 = vunpack.c.l.b16 %v2073
    %v3105 = vunpack.c.l.b16 %v2074
    %v3106 = vunpack.c.l.b16 %v2075
    %v3107 = vunpack.c.l.b16 %v2076
    %v3108 = vunpack.c.l.b16 %v2077
    %v3109 = vunpack.c.l.b16 %v2078
    %v3110 = vunpack.c.l.b16 %v2079
    %v3111 = vunpack.c.l.b16 %v2080
    %v3112 = vunpack.c.l.b16 %v2081
    %v3113 = vunpack.c.l.b16 %v2082
    %v3114 = vunpack.c.l.b16 %v2083
    %v3115 = vunpack.c.l.b16 %v2084
    %v3116 = vunpack.c.l.b16 %v2085
    %v3117 = vunpack.c.l.b16 %v2086
    %v3118 = vunpack.c.l.b16 %v2087
    %v3119 = vunpack.c.l.b16 %v2088
    %v3120 = vunpack.c.l.b16 %v2089
    %v3121 = vunpack.c.l.b16 %v2090
    %v3122 = vunpack.c.l.b16 %v2091
    %v3123 = vunpack.c.l.b16 %v2092
    %v3124 = vunpack.c.l.b16 %v2093
    %v3125 = vunpack.c.l.b16 %v2094
    %v3126 = vunpack.c.l.b16 %v2095
    %v3127 = vunpack.c.l.b16 %v2096
    %v3128 = vunpack.c.l.b16 %v2097
    %v3129 = vunpack.c.l.b16 %v2098
    %v3130 = vunpack.c.l.b16 %v2099
    %v3131 = vunpack.c.l.b16 %v2100
    %v3132 = vunpack.c.l.b16 %v2101
    %v3133 = vunpack.c.l.b16 %v2102
    %v3134 = vunpack.c.l.b16 %v2103
    %v3135 = vunpack.c.l.b16 %v2104
    %v3136 = vunpack.c.l.b16 %v2105
    %v3137 = vunpack.c.l.b16 %v2106
    %v3138 = vunpack.c.l.b16 %v2107
    %v3139 = vunpack.c.l.b16 %v2108
    %v3140 = vunpack.c.l.b16 %v2109
    %v3141 = vunpack.c.l.b16 %v2110
    %v3142 = vunpack.c.l.b16 %v2111
    %v3143 = vunpack.c.l.b16 %v2112
    %v3144 = vunpack.c.l.b16 %v2113
    %v3145 = vunpack.c.l.b16 %v2114
    %v3146 = vunpack.c.l.b16 %v2115
    %v3147 = vunpack.c.l.b16 %v2116
    %v3148 = vunpack.c.l.b16 %v2117
    %v3149 = vunpack.c.l.b16 %v2118
    %v3150 = vunpack.c.l.b16 %v2119
    %v3151 = vunpack.c.l.b16 %v2120
    %v3152 = vunpack.c.l.b16 %v2121
    %v3153 = vunpack.c.l.b16 %v2122
    %v3154 = vunpack.c.l.b16 %v2123
    %v3155 = vunpack.c.l.b16 %v2124
    %v3156 = vunpack.c.l.b16 %v2125
    %v3157 = vunpack.c.l.b16 %v2126
    %v3158 = vunpack.c.l.b16 %v2127
    %v3159 = vunpack.c.l.b16 %v2128
    %v3160 = vunpack.c.l.b16 %v2129
    %v3161 = vunpack.c.l.b16 %v2130
    %v3162 = vunpack.c.l.b16 %v2131
    %v3163 = vunpack.c.l.b16 %v2132
    %v3164 = vunpack.c.l.b16 %v2133
    %v3165 = vunpack.c.l.b16 %v2134
    %v3166 = vunpack.c.l.b16 %v2135
    %v3167 = vunpack.c.l.b16 %v2136
    %v3168 = vunpack.c.l.b16 %v2137
    %v3169 = vunpack.c.l.b16 %v2138
    %v3170 = vunpack.c.l.b16 %v2139
    %v3171 = vunpack.c.l.b16 %v2140
    %v3172 = vunpack.c.l.b16 %v2141
    %v3173 = vunpack.c.l.b16 %v2142
    %v3174 = vunpack.c.l.b16 %v2143
    %v3175 = vunpack.c.l.b16 %v2144
    %v3176 = vunpack.c.l.b16 %v2145
    %v3177 = vunpack.c.l.b16 %v2146
    %v3178 = vunpack.c.l.b16 %v2147
    %v3179 = vunpack.c.l.b16 %v2148
    %v3180 = vunpack.c.l.b16 %v2149
    %v3181 = vunpack.c.l.b16 %v2150
    %v3182 = vunpack.c.l.b16 %v2151
    %v3183 = vunpack.c.l.b16 %v2152
    %v3184 = vunpack.c.l.b16 %v2153
    %v3185 = vunpack.c.l.b16 %v2154
    %v3186 = vunpack.c.l.b16 %v2155
    %v3187 = vunpack.c.l.b16 %v2156
    %v3188 = vunpack.c.l.b16 %v2157
    %v3189 = vunpack.c.l.b16 %v2158
    %v3190 = vunpack.c.l.b16 %v2159
    %v3191 = vunpack.c.l.b16 %v2160
    %v3192 = vunpack.c.l.b16 %v2161
    %v3193 = vunpack.c.l.b16 %v2162
    %v3194 = vunpack.c.l.b16 %v2163
    %v3195 = vunpack.c.l.b16 %v2164
    %v3196 = vunpack.c.l.b16 %v2165
    %v3197 = vunpack.c.l.b16 %v2166
    %v3198 = vunpack.c.l.b16 %v2167
    %v3199 = vunpack.c.l.b16 %v2168
    %v3200 = vunpack.c.l.b16 %v2169
    %v3201 = vunpack.c.l.b16 %v2170
    %v3202 = vunpack.c.l.b16 %v2171
    %v3203 = vunpack.c.l.b16 %v2172
    %v3204 = vunpack.c.l.b16 %v2173
    %v3205 = vunpack.c.l.b16 %v2174
    %v3206 = vunpack.c.l.b16 %v2175
    %v3207 = vunpack.c.l.b16 %v2176
    %v3208 = vunpack.c.l.b16 %v2177
    %v3209 = vunpack.c.l.b16 %v2178
    %v3210 = vunpack.c.l.b16 %v2179
    %v3211 = vunpack.c.l.b16 %v2180
    %v3212 = vunpack.c.l.b16 %v2181
    %v3213 = vunpack.c.l.b16 %v2182
    %v3214 = vunpack.c.l.b16 %v2183
    %v3215 = vunpack.c.l.b16 %v2184
    %v3216 = vunpack.c.l.b16 %v2185
    %v3217 = vunpack.c.l.b16 %v2186
    %v3218 = vunpack.c.l.b16 %v2187
    %v3219 = vunpack.c.l.b16 %v2188
    %v3220 = vunpack.c.l.b16 %v2189
    %v3221 = vunpack.c.l.b16 %v2190
    %v3222 = vunpack.c.l.b16 %v2191
    %v3223 = vunpack.c.l.b16 %v2192
    %v3224 = vunpack.c.l.b16 %v2193
    %v3225 = vunpack.c.l.b16 %v2194
    %v3226 = vunpack.c.l.b16 %v2195
    %v3227 = vunpack.c.l.b16 %v2196
    %v3228 = vunpack.c.l.b16 %v2197
    %v3229 = vunpack.c.l.b16 %v2198
    %v3230 = vunpack.c.l.b16 %v2199
    %v3231 = vunpack.c.l.b16 %v2200
    %v3232 = vunpack.c.l.b16 %v2201
    %v3233 = vunpack.c.l.b16 %v2202
    %v3234 = vunpack.c.l.b16 %v2203
    %v3235 = vunpack.c.l.b16 %v2204
    %v3236 = vunpack.c.l.b16 %v2205
    %v3237 = vunpack.c.l.b16 %v2206
    %v3238 = vunpack.c.l.b16 %v2207
    %v3239 = vunpack.c.l.b16 %v2208
    %v3240 = vunpack.c.l.b16 %v2209
    %v3241 = vunpack.c.l.b16 %v2210
    %v3242 = vunpack.c.l.b16 %v2211
    %v3243 = vunpack.c.l.b16 %v2212
    %v3244 = vunpack.c.l.b16 %v2213
    %v3245 = vunpack.c.l.b16 %v2214
    %v3246 = vunpack.c.l.b16 %v2215
    %v3247 = vunpack.c.l.b16 %v2216
    %v3248 = vunpack.c.l.b16 %v2217
    %v3249 = vunpack.c.l.b16 %v2218
    %v3250 = vunpack.c.l.b16 %v2219
    %v3251 = vunpack.c.l.b16 %v2220
    %v3252 = vunpack.c.l.b16 %v2221
    %v3253 = vunpack.c.l.b16 %v2222
    %v3254 = vunpack.c.l.b16 %v2223
    %v3255 = vunpack.c.l.b16 %v2224
    %v3256 = vunpack.c.l.b16 %v2225
    %v3257 = vunpack.c.l.b16 %v2226
    %v3258 = vunpack.c.l.b16 %v2227
    %v3259 = vunpack.c.l.b16 %v2228
    %v3260 = vunpack.c.l.b16 %v2229
    %v3261 = vunpack.c.l.b16 %v2230
    %v3262 = vunpack.c.l.b16 %v2231
    %v3263 = vunpack.c.l.b16 %v2232
    %v3264 = vunpack.c.l.b16 %v2233
    %v3265 = vunpack.c.l.b16 %v2234
    %v3266 = vunpack.c.l.b16 %v2235
    %v3267 = vunpack.c.l.b16 %v2236
    %v3268 = vunpack.c.l.b16 %v2237
    %v3269 = vunpack.c.l.b16 %v2238
    %v3270 = vunpack.c.l.b16 %v2239
    %v3271 = vunpack.c.l.b16 %v2240
    %v3272 = vunpack.c.l.b16 %v2241
    %v3273 = vunpack.c.l.b16 %v2242
    %v3274 = vunpack.c.l.b16 %v2243
    %v3275 = vunpack.c.l.b16 %v2244
    %v3276 = vunpack.c.l.b16 %v2245
    %v3277 = vunpack.c.l.b16 %v2246
    %v3278 = vunpack.c.l.b16 %v2247
    %v3279 = vunpack.c.l.b16 %v2248
    %v3280 = vunpack.c.l.b16 %v2249
    %v3281 = vunpack.c.l.b16 %v2250
    %v3282 = vunpack.c.l.b16 %v2251
    %v3283 = vunpack.c.l.b16 %v2252
    %v3284 = vunpack.c.l.b16 %v2253
    %v3285 = vunpack.c.l.b16 %v2254
    %v3286 = vunpack.c.l.b16 %v2255
    %v3287 = vunpack.c.l.b16 %v2256
    %v3288 = vunpack.c.l.b16 %v2257
    %v3289 = vunpack.c.l.b16 %v2258
    %v3290 = vunpack.c.l.b16 %v2259
    %v3291 = vunpack.c.l.b16 %v2260
    %v3292 = vunpack.c.l.b16 %v2261
    %v3293 = vunpack.c.l.b16 %v2262
    %v3294 = vunpack.c.l.b16 %v2263
    %v3295 = vunpack.c.l.b16 %v2264
    %v3296 = vunpack.c.l.b16 %v2265
    %v3297 = vunpack.c.l.b16 %v2266
    %v3298 = vunpack.c.l.b16 %v2267
    %v3299 = vunpack.c.l.b16 %v2268
    %v3300 = vunpack.c.l.b16 %v2269
    %v3301 = vunpack.c.l.b16 %v2270
    %v3302 = vunpack.c.l.b16 %v2271
    %v3303 = vunpack.c.l.b16 %v2272
    %v3304 = vunpack.c.l.b16 %v2273
    %v3305 = vunpack.c.l.b16 %v2274
    %v3306 = vunpack.c.l.b16 %v2275
    %v3307 = vunpack.c.l.b16 %v2276
    %v3308 = vunpack.c.l.b16 %v2277
    %v3309 = vunpack.c.l.b16 %v2278
    %v3310 = vunpack.c.l.b16 %v2279
    %v3311 = vunpack.c.l.b16 %v2280
    %v3312 = vunpack.c.l.b16 %v2281
    %v3313 = vunpack.c.l.b16 %v2282
    %v3314 = vunpack.c.l.b16 %v2283
    %v3315 = vunpack.c.l.b16 %v2284
    %v3316 = vunpack.c.l.b16 %v2285
    %v3317 = vunpack.c.l.b16 %v2286
    %v3318 = vunpack.c.l.b16 %v2287
    %v3319 = vunpack.c.l.b16 %v2288
    %v3320 = vunpack.c.l.b16 %v2289
    %v3321 = vunpack.c.l.b16 %v2290
    %v3322 = vunpack.c.l.b16 %v2291
    %v3323 = vunpack.c.l.b16 %v2292
    %v3324 = vunpack.c.l.b16 %v2293
    %v3325 = vunpack.c.l.b16 %v2294
    %v3326 = vunpack.c.l.b16 %v2295
    %v3327 = vunpack.c.l.b16 %v2296
    %v3328 = vunpack.c.l.b16 %v2297
    %v3329 = vunpack.c.l.b16 %v2298
    %v3330 = vunpack.c.l.b16 %v2299
    %v3331 = vpack.c.b16 %v2820, %v2819
    %v3332 = vpack.c.b16 %v2822, %v2821
    %v3333 = vpack.c.b16 %v2824, %v2823
    %v3334 = vpack.c.b16 %v2826, %v2825
    %v3335 = vpack.c.b16 %v2828, %v2827
    %v3336 = vpack.c.b16 %v2830, %v2829
    %v3337 = vpack.c.b16 %v2832, %v2831
    %v3338 = vpack.c.b16 %v2834, %v2833
    %v3339 = vpack.c.b16 %v2836, %v2835
    %v3340 = vpack.c.b16 %v2838, %v2837
    %v3341 = vpack.c.b16 %v2840, %v2839
    %v3342 = vpack.c.b16 %v2842, %v2841
    %v3343 = vpack.c.b16 %v2844, %v2843
    %v3344 = vpack.c.b16 %v2846, %v2845
    %v3345 = vpack.c.b16 %v2848, %v2847
    %v3346 = vpack.c.b16 %v2850, %v2849
    %v3347 = vpack.c.b16 %v2852, %v2851
    %v3348 = vpack.c.b16 %v2854, %v2853
    %v3349 = vpack.c.b16 %v2856, %v2855
    %v3350 = vpack.c.b16 %v2858, %v2857
    %v3351 = vpack.c.b16 %v2860, %v2859
    %v3352 = vpack.c.b16 %v2862, %v2861
    %v3353 = vpack.c.b16 %v2864, %v2863
    %v3354 = vpack.c.b16 %v2866, %v2865
    %v3355 = vpack.c.b16 %v2868, %v2867
    %v3356 = vpack.c.b16 %v2870, %v2869
    %v3357 = vpack.c.b16 %v2872, %v2871
    %v3358 = vpack.c.b16 %v2874, %v2873
    %v3359 = vpack.c.b16 %v2876, %v2875
    %v3360 = vpack.c.b16 %v2878, %v2877
    %v3361 = vpack.c.b16 %v2880, %v2879
    %v3362 = vpack.c.b16 %v2882, %v2881
    %v3363 = vpack.c.b16 %v2884, %v2883
    %v3364 = vpack.c.b16 %v2886, %v2885
    %v3365 = vpack.c.b16 %v2888, %v2887
    %v3366 = vpack.c.b16 %v2890, %v2889
    %v3367 = vpack.c.b16 %v2892, %v2891
    %v3368 = vpack.c.b16 %v2894, %v2893
    %v3369 = vpack.c.b16 %v2896, %v2895
    %v3370 = vpack.c.b16 %v2898, %v2897
    %v3371 = vpack.c.b16 %v2900, %v2899
    %v3372 = vpack.c.b16 %v2902, %v2901
    %v3373 = vpack.c.b16 %v2904, %v2903
    %v3374 = vpack.c.b16 %v2906, %v2905
    %v3375 = vpack.c.b16 %v2908, %v2907
    %v3376 = vpack.c.b16 %v2910, %v2909
    %v3377 = vpack.c.b16 %v2912, %v2911
    %v3378 = vpack.c.b16 %v2914, %v2913
    %v3379 = vpack.c.b16 %v2916, %v2915
    %v3380 = vpack.c.b16 %v2918, %v2917
    %v3381 = vpack.c.b16 %v2920, %v2919
    %v3382 = vpack.c.b16 %v2922, %v2921
    %v3383 = vpack.c.b16 %v2924, %v2923
    %v3384 = vpack.c.b16 %v2926, %v2925
    %v3385 = vpack.c.b16 %v2928, %v2927
    %v3386 = vpack.c.b16 %v2930, %v2929
    %v3387 = vpack.c.b16 %v2932, %v2931
    %v3388 = vpack.c.b16 %v2934, %v2933
    %v3389 = vpack.c.b16 %v2936, %v2935
    %v3390 = vpack.c.b16 %v2938, %v2937
    %v3391 = vpack.c.b16 %v2940, %v2939
    %v3392 = vpack.c.b16 %v2942, %v2941
    %v3393 = vpack.c.b16 %v2944, %v2943
    %v3394 = vpack.c.b16 %v2946, %v2945
    %v3395 = vpack.c.b16 %v2948, %v2947
    %v3396 = vpack.c.b16 %v2950, %v2949
    %v3397 = vpack.c.b16 %v2952, %v2951
    %v3398 = vpack.c.b16 %v2954, %v2953
    %v3399 = vpack.c.b16 %v2956, %v2955
    %v3400 = vpack.c.b16 %v2958, %v2957
    %v3401 = vpack.c.b16 %v2960, %v2959
    %v3402 = vpack.c.b16 %v2962, %v2961
    %v3403 = vpack.c.b16 %v2964, %v2963
    %v3404 = vpack.c.b16 %v2966, %v2965
    %v3405 = vpack.c.b16 %v2968, %v2967
    %v3406 = vpack.c.b16 %v2970, %v2969
    %v3407 = vpack.c.b16 %v2972, %v2971
    %v3408 = vpack.c.b16 %v2974, %v2973
    %v3409 = vpack.c.b16 %v2976, %v2975
    %v3410 = vpack.c.b16 %v2978, %v2977
    %v3411 = vpack.c.b16 %v2980, %v2979
    %v3412 = vpack.c.b16 %v2982, %v2981
    %v3413 = vpack.c.b16 %v2984, %v2983
    %v3414 = vpack.c.b16 %v2986, %v2985
    %v3415 = vpack.c.b16 %v2988, %v2987
    %v3416 = vpack.c.b16 %v2990, %v2989
    %v3417 = vpack.c.b16 %v2992, %v2991
    %v3418 = vpack.c.b16 %v2994, %v2993
    %v3419 = vpack.c.b16 %v2996, %v2995
    %v3420 = vpack.c.b16 %v2998, %v2997
    %v3421 = vpack.c.b16 %v3000, %v2999
    %v3422 = vpack.c.b16 %v3002, %v3001
    %v3423 = vpack.c.b16 %v3004, %v3003
    %v3424 = vpack.c.b16 %v3006, %v3005
    %v3425 = vpack.c.b16 %v3008, %v3007
    %v3426 = vpack.c.b16 %v3010, %v3009
    %v3427 = vpack.c.b16 %v3012, %v3011
    %v3428 = vpack.c.b16 %v3014, %v3013
    %v3429 = vpack.c.b16 %v3016, %v3015
    %v3430 = vpack.c.b16 %v3018, %v3017
    %v3431 = vpack.c.b16 %v3020, %v3019
    %v3432 = vpack.c.b16 %v3022, %v3021
    %v3433 = vpack.c.b16 %v3024, %v3023
    %v3434 = vpack.c.b16 %v3026, %v3025
    %v3435 = vpack.c.b16 %v3028, %v3027
    %v3436 = vpack.c.b16 %v3030, %v3029
    %v3437 = vpack.c.b16 %v3032, %v3031
    %v3438 = vpack.c.b16 %v3034, %v3033
    %v3439 = vpack.c.b16 %v3036, %v3035
    %v3440 = vpack.c.b16 %v3038, %v3037
    %v3441 = vpack.c.b16 %v3040, %v3039
    %v3442 = vpack.c.b16 %v3042, %v3041
    %v3443 = vpack.c.b16 %v3044, %v3043
    %v3444 = vpack.c.b16 %v3046, %v3045
    %v3445 = vpack.c.b16 %v3048, %v3047
    %v3446 = vpack.c.b16 %v3050, %v3049
    %v3447 = vpack.c.b16 %v3052, %v3051
    %v3448 = vpack.c.b16 %v3054, %v3053
    %v3449 = vpack.c.b16 %v3056, %v3055
    %v3450 = vpack.c.b16 %v3058, %v3057
    %v3451 = vpack.c.b16 %v3060, %v3059
    %v3452 = vpack.c.b16 %v3062, %v3061
    %v3453 = vpack.c.b16 %v3064, %v3063
    %v3454 = vpack.c.b16 %v3066, %v3065
    %v3455 = vpack.c.b16 %v3068, %v3067
    %v3456 = vpack.c.b16 %v3070, %v3069
    %v3457 = vpack.c.b16 %v3072, %v3071
    %v3458 = vpack.c.b16 %v3074, %v3073
    %v3459 = vpack.c.b16 %v3076, %v3075
    %v3460 = vpack.c.b16 %v3078, %v3077
    %v3461 = vpack.c.b16 %v3080, %v3079
    %v3462 = vpack.c.b16 %v3082, %v3081
    %v3463 = vpack.c.b16 %v3084, %v3083
    %v3464 = vpack.c.b16 %v3086, %v3085
    %v3465 = vpack.c.b16 %v3088, %v3087
    %v3466 = vpack.c.b16 %v3090, %v3089
    %v3467 = vpack.c.b16 %v3092, %v3091
    %v3468 = vpack.c.b16 %v3094, %v3093
    %v3469 = vpack.c.b16 %v3096, %v3095
    %v3470 = vpack.c.b16 %v3098, %v3097
    %v3471 = vpack.c.b16 %v3100, %v3099
    %v3472 = vpack.c.b16 %v3102, %v3101
    %v3473 = vpack.c.b16 %v3104, %v3103
    %v3474 = vpack.c.b16 %v3106, %v3105
    %v3475 = vpack.c.b16 %v3108, %v3107
    %v3476 = vpack.c.b16 %v3110, %v3109
    %v3477 = vpack.c.b16 %v3112, %v3111
    %v3478 = vpack.c.b16 %v3114, %v3113
    %v3479 = vpack.c.b16 %v3116, %v3115
    %v3480 = vpack.c.b16 %v3118, %v3117
    %v3481 = vpack.c.b16 %v3120, %v3119
    %v3482 = vpack.c.b16 %v3122, %v3121
    %v3483 = vpack.c.b16 %v3124, %v3123
    %v3484 = vpack.c.b16 %v3126, %v3125
    %v3485 = vpack.c.b16 %v3128, %v3127
    %v3486 = vpack.c.b16 %v3130, %v3129
    %v3487 = vpack.c.b16 %v3132, %v3131
    %v3488 = vpack.c.b16 %v3134, %v3133
    %v3489 = vpack.c.b16 %v3136, %v3135
    %v3490 = vpack.c.b16 %v3138, %v3137
    %v3491 = vpack.c.b16 %v3140, %v3139
    %v3492 = vpack.c.b16 %v3142, %v3141
    %v3493 = vpack.c.b16 %v3144, %v3143
    %v3494 = vpack.c.b16 %v3146, %v3145
    %v3495 = vpack.c.b16 %v3148, %v3147
    %v3496 = vpack.c.b16 %v3150, %v3149
    %v3497 = vpack.c.b16 %v3152, %v3151
    %v3498 = vpack.c.b16 %v3154, %v3153
    %v3499 = vpack.c.b16 %v3156, %v3155
    %v3500 = vpack.c.b16 %v3158, %v3157
    %v3501 = vpack.c.b16 %v3160, %v3159
    %v3502 = vpack.c.b16 %v3162, %v3161
    %v3503 = vpack.c.b16 %v3164, %v3163
    %v3504 = vpack.c.b16 %v3166, %v3165
    %v3505 = vpack.c.b16 %v3168, %v3167
    %v3506 = vpack.c.b16 %v3170, %v3169
    %v3507 = vpack.c.b16 %v3172, %v3171
    %v3508 = vpack.c.b16 %v3174, %v3173
    %v3509 = vpack.c.b16 %v3176, %v3175
    %v3510 = vpack.c.b16 %v3178, %v3177
    %v3511 = vpack.c.b16 %v3180, %v3179
    %v3512 = vpack.c.b16 %v3182, %v3181
    %v3513 = vpack.c.b16 %v3184, %v3183
    %v3514 = vpack.c.b16 %v3186, %v3185
    %v3515 = vpack.c.b16 %v3188, %v3187
    %v3516 = vpack.c.b16 %v3190, %v3189
    %v3517 = vpack.c.b16 %v3192, %v3191
    %v3518 = vpack.c.b16 %v3194, %v3193
    %v3519 = vpack.c.b16 %v3196, %v3195
    %v3520 = vpack.c.b16 %v3198, %v3197
    %v3521 = vpack.c.b16 %v3200, %v3199
    %v3522 = vpack.c.b16 %v3202, %v3201
    %v3523 = vpack.c.b16 %v3204, %v3203
    %v3524 = vpack.c.b16 %v3206, %v3205
    %v3525 = vpack.c.b16 %v3208, %v3207
    %v3526 = vpack.c.b16 %v3210, %v3209
    %v3527 = vpack.c.b16 %v3212, %v3211
    %v3528 = vpack.c.b16 %v3214, %v3213
    %v3529 = vpack.c.b16 %v3216, %v3215
    %v3530 = vpack.c.b16 %v3218, %v3217
    %v3531 = vpack.c.b16 %v3220, %v3219
    %v3532 = vpack.c.b16 %v3222, %v3221
    %v3533 = vpack.c.b16 %v3224, %v3223
    %v3534 = vpack.c.b16 %v3226, %v3225
    %v3535 = vpack.c.b16 %v3228, %v3227
    %v3536 = vpack.c.b16 %v3230, %v3229
    %v3537 = vpack.c.b16 %v3232, %v3231
    %v3538 = vpack.c.b16 %v3234, %v3233
    %v3539 = vpack.c.b16 %v3236, %v3235
    %v3540 = vpack.c.b16 %v3238, %v3237
    %v3541 = vpack.c.b16 %v3240, %v3239
    %v3542 = vpack.c.b16 %v3242, %v3241
    %v3543 = vpack.c.b16 %v3244, %v3243
    %v3544 = vpack.c.b16 %v3246, %v3245
    %v3545 = vpack.c.b16 %v3248, %v3247
    %v3546 = vpack.c.b16 %v3250, %v3249
    %v3547 = vpack.c.b16 %v3252, %v3251
    %v3548 = vpack.c.b16 %v3254, %v3253
    %v3549 = vpack.c.b16 %v3256, %v3255
    %v3550 = vpack.c.b16 %v3258, %v3257
    %v3551 = vpack.c.b16 %v3260, %v3259
    %v3552 = vpack.c.b16 %v3262, %v3261
    %v3553 = vpack.c.b16 %v3264, %v3263
    %v3554 = vpack.c.b16 %v3266, %v3265
    %v3555 = vpack.c.b16 %v3268, %v3267
    %v3556 = vpack.c.b16 %v3270, %v3269
    %v3557 = vpack.c.b16 %v3272, %v3271
    %v3558 = vpack.c.b16 %v3274, %v3273
    %v3559 = vpack.c.b16 %v3276, %v3275
    %v3560 = vpack.c.b16 %v3278, %v3277
    %v3561 = vpack.c.b16 %v3280, %v3279
    %v3562 = vpack.c.b16 %v3282, %v3281
    %v3563 = vpack.c.b16 %v3284, %v3283
    %v3564 = vpack.c.b16 %v3286, %v3285
    %v3565 = vpack.c.b16 %v3288, %v3287
    %v3566 = vpack.c.b16 %v3290, %v3289
    %v3567 = vpack.c.b16 %v3292, %v3291
    %v3568 = vpack.c.b16 %v3294, %v3293
    %v3569 = vpack.c.b16 %v3296, %v3295
    %v3570 = vpack.c.b16 %v3298, %v3297
    %v3571 = vpack.c.b16 %v3300, %v3299
    %v3572 = vpack.c.b16 %v3302, %v3301
    %v3573 = vpack.c.b16 %v3304, %v3303
    %v3574 = vpack.c.b16 %v3306, %v3305
    %v3575 = vpack.c.b16 %v3308, %v3307
    %v3576 = vpack.c.b16 %v3310, %v3309
    %v3577 = vpack.c.b16 %v3312, %v3311
    %v3578 = vpack.c.b16 %v3314, %v3313
    %v3579 = vpack.c.b16 %v3316, %v3315
    %v3580 = vpack.c.b16 %v3318, %v3317
    %v3581 = vpack.c.b16 %v3320, %v3319
    %v3582 = vpack.c.b16 %v3322, %v3321
    %v3583 = vpack.c.b16 %v3324, %v3323
    %v3584 = vpack.c.b16 %v3326, %v3325
    %v3585 = vpack.c.b16 %v3328, %v3327
    %v3586 = vpack.c.b16 %v3330, %v3329
    %3843 = vmatprep.subr.bf16.mxu0 0
    %3844 = vmatpush1.bf16.msra.mxu0 %v3331
    %3845 = vmatprep.subr.bf16.mxu0 0
    %3846 = vmatpush1.bf16.msra.mxu0 %v3332
    %3847 = vmatprep.subr.bf16.mxu0 0
    %3848 = vmatpush1.bf16.msra.mxu0 %v3333
    %3849 = vmatprep.subr.bf16.mxu0 0
    %3850 = vmatpush1.bf16.msra.mxu0 %v3334
    %3851 = vmatprep.subr.bf16.mxu0 0
    %3852 = vmatpush1.bf16.msra.mxu0 %v3335
    %3853 = vmatprep.subr.bf16.mxu0 0
    %3854 = vmatpush1.bf16.msra.mxu0 %v3336
    %3855 = vmatprep.subr.bf16.mxu0 0
    %3856 = vmatpush1.bf16.msra.mxu0 %v3337
    %3857 = vmatprep.subr.bf16.mxu0 0
    %3858 = vmatpush1.bf16.msra.mxu0 %v3338
    %3859 = vmatprep.subr.bf16.mxu0 0
    %3860 = vmatpush1.bf16.msra.mxu0 %v3339
    %3861 = vmatprep.subr.bf16.mxu0 0
    %3862 = vmatpush1.bf16.msra.mxu0 %v3340
    %3863 = vmatprep.subr.bf16.mxu0 0
    %3864 = vmatpush1.bf16.msra.mxu0 %v3341
    %3865 = vmatprep.subr.bf16.mxu0 0
    %3866 = vmatpush1.bf16.msra.mxu0 %v3342
    %3867 = vmatprep.subr.bf16.mxu0 0
    %3868 = vmatpush1.bf16.msra.mxu0 %v3343
    %3869 = vmatprep.subr.bf16.mxu0 0
    %3870 = vmatpush1.bf16.msra.mxu0 %v3344
    %3871 = vmatprep.subr.bf16.mxu0 0
    %3872 = vmatpush1.bf16.msra.mxu0 %v3345
    %3873 = vmatprep.subr.bf16.mxu0 0
    %3874 = vmatpush1.bf16.msra.mxu0 %v3346
    %3875 = vmatprep.mubr.bf16.mxu0 %v1757
    %3876 = vmatmul.mubr.bf16.gmra.mrb[0].mxu0 %v1756
    %v3877 = vpop.f32.mrb[0].mxu0
    %v3878 = vadd.f32 %v2305, %v3877
    %v3879 = vpop.f32.mrb[0].mxu0
    %v3880 = vpop.f32.mrb[0].mxu0
    %v3881 = vpop.f32.mrb[0].mxu0
    %3882 = vdwg.mxu0
    %3883 = vmatprep.subr.bf16.mxu0 0
    %3884 = vmatpush1.bf16.msra.mxu0 %v3347
    %3885 = vmatprep.subr.bf16.mxu0 0
    %3886 = vmatpush1.bf16.msra.mxu0 %v3348
    %3887 = vmatprep.subr.bf16.mxu0 0
    %3888 = vmatpush1.bf16.msra.mxu0 %v3349
    %3889 = vmatprep.subr.bf16.mxu0 0
    %3890 = vmatpush1.bf16.msra.mxu0 %v3350
    %3891 = vmatprep.subr.bf16.mxu0 0
    %3892 = vmatpush1.bf16.msra.mxu0 %v3351
    %3893 = vmatprep.subr.bf16.mxu0 0
    %3894 = vmatpush1.bf16.msra.mxu0 %v3352
    %3895 = vmatprep.subr.bf16.mxu0 0
    %3896 = vmatpush1.bf16.msra.mxu0 %v3353
    %3897 = vmatprep.subr.bf16.mxu0 0
    %3898 = vmatpush1.bf16.msra.mxu0 %v3354
    %3899 = vmatprep.subr.bf16.mxu0 0
    %3900 = vmatpush1.bf16.msra.mxu0 %v3355
    %3901 = vmatprep.subr.bf16.mxu0 0
    %3902 = vmatpush1.bf16.msra.mxu0 %v3356
    %3903 = vmatprep.subr.bf16.mxu0 0
    %3904 = vmatpush1.bf16.msra.mxu0 %v3357
    %3905 = vmatprep.subr.bf16.mxu0 0
    %3906 = vmatpush1.bf16.msra.mxu0 %v3358
    %3907 = vmatprep.subr.bf16.mxu0 0
    %3908 = vmatpush1.bf16.msra.mxu0 %v3359
    %3909 = vmatprep.subr.bf16.mxu0 0
    %3910 = vmatpush1.bf16.msra.mxu0 %v3360
    %3911 = vmatprep.subr.bf16.mxu0 0
    %3912 = vmatpush1.bf16.msra.mxu0 %v3361
    %3913 = vmatprep.subr.bf16.mxu0 0
    %3914 = vmatpush1.bf16.msra.mxu0 %v3362
    %3915 = vmatprep.mubr.bf16.mxu0 %v1759
    %3916 = vmatmul.mubr.bf16.gmra.mrb[0].mxu0 %v1758
    %v3917 = vpop.f32.mrb[0].mxu0
    %v3918 = vadd.f32 %v3878, %v3917
    %v3919 = vpop.f32.mrb[0].mxu0
    %v3920 = vpop.f32.mrb[0].mxu0
    %v3921 = vpop.f32.mrb[0].mxu0
    %3922 = vdwg.mxu0
    %3923 = vmatprep.subr.bf16.mxu0 0
    %3924 = vmatpush1.bf16.msra.mxu0 %v3363
    %3925 = vmatprep.subr.bf16.mxu0 0
    %3926 = vmatpush1.bf16.msra.mxu0 %v3364
    %3927 = vmatprep.subr.bf16.mxu0 0
    %3928 = vmatpush1.bf16.msra.mxu0 %v3365
    %3929 = vmatprep.subr.bf16.mxu0 0
    %3930 = vmatpush1.bf16.msra.mxu0 %v3366
    %3931 = vmatprep.subr.bf16.mxu0 0
    %3932 = vmatpush1.bf16.msra.mxu0 %v3367
    %3933 = vmatprep.subr.bf16.mxu0 0
    %3934 = vmatpush1.bf16.msra.mxu0 %v3368
    %3935 = vmatprep.subr.bf16.mxu0 0
    %3936 = vmatpush1.bf16.msra.mxu0 %v3369
    %3937 = vmatprep.subr.bf16.mxu0 0
    %3938 = vmatpush1.bf16.msra.mxu0 %v3370
    %3939 = vmatprep.subr.bf16.mxu0 0
    %3940 = vmatpush1.bf16.msra.mxu0 %v3371
    %3941 = vmatprep.subr.bf16.mxu0 0
    %3942 = vmatpush1.bf16.msra.mxu0 %v3372
    %3943 = vmatprep.subr.bf16.mxu0 0
    %3944 = vmatpush1.bf16.msra.mxu0 %v3373
    %3945 = vmatprep.subr.bf16.mxu0 0
    %3946 = vmatpush1.bf16.msra.mxu0 %v3374
    %3947 = vmatprep.subr.bf16.mxu0 0
    %3948 = vmatpush1.bf16.msra.mxu0 %v3375
    %3949 = vmatprep.subr.bf16.mxu0 0
    %3950 = vmatpush1.bf16.msra.mxu0 %v3376
    %3951 = vmatprep.subr.bf16.mxu0 0
    %3952 = vmatpush1.bf16.msra.mxu0 %v3377
    %3953 = vmatprep.subr.bf16.mxu0 0
    %3954 = vmatpush1.bf16.msra.mxu0 %v3378
    %3955 = vmatprep.mubr.bf16.mxu0 %v1761
    %3956 = vmatmul.mubr.bf16.gmra.mrb[0].mxu0 %v1760
    %v3957 = vpop.f32.mrb[0].mxu0
    %v3958 = vadd.f32 %v3918, %v3957
    %v3959 = vpop.f32.mrb[0].mxu0
    %v3960 = vpop.f32.mrb[0].mxu0
    %v3961 = vpop.f32.mrb[0].mxu0
    %3962 = vdwg.mxu0
    %3963 = vmatprep.subr.bf16.mxu0 0
    %3964 = vmatpush1.bf16.msra.mxu0 %v3379
    %3965 = vmatprep.subr.bf16.mxu0 0
    %3966 = vmatpush1.bf16.msra.mxu0 %v3380
    %3967 = vmatprep.subr.bf16.mxu0 0
    %3968 = vmatpush1.bf16.msra.mxu0 %v3381
    %3969 = vmatprep.subr.bf16.mxu0 0
    %3970 = vmatpush1.bf16.msra.mxu0 %v3382
    %3971 = vmatprep.subr.bf16.mxu0 0
    %3972 = vmatpush1.bf16.msra.mxu0 %v3383
    %3973 = vmatprep.subr.bf16.mxu0 0
    %3974 = vmatpush1.bf16.msra.mxu0 %v3384
    %3975 = vmatprep.subr.bf16.mxu0 0
    %3976 = vmatpush1.bf16.msra.mxu0 %v3385
    %3977 = vmatprep.subr.bf16.mxu0 0
    %3978 = vmatpush1.bf16.msra.mxu0 %v3386
    %3979 = vmatprep.subr.bf16.mxu0 0
    %3980 = vmatpush1.bf16.msra.mxu0 %v3387
    %3981 = vmatprep.subr.bf16.mxu0 0
    %3982 = vmatpush1.bf16.msra.mxu0 %v3388
    %3983 = vmatprep.subr.bf16.mxu0 0
    %3984 = vmatpush1.bf16.msra.mxu0 %v3389
    %3985 = vmatprep.subr.bf16.mxu0 0
    %3986 = vmatpush1.bf16.msra.mxu0 %v3390
    %3987 = vmatprep.subr.bf16.mxu0 0
    %3988 = vmatpush1.bf16.msra.mxu0 %v3391
    %3989 = vmatprep.subr.bf16.mxu0 0
    %3990 = vmatpush1.bf16.msra.mxu0 %v3392
    %3991 = vmatprep.subr.bf16.mxu0 0
    %3992 = vmatpush1.bf16.msra.mxu0 %v3393
    %3993 = vmatprep.subr.bf16.mxu0 0
    %3994 = vmatpush1.bf16.msra.mxu0 %v3394
    %3995 = vmatprep.mubr.bf16.mxu0 %v1763
    %3996 = vmatmul.mubr.bf16.gmra.mrb[0].mxu0 %v1762
    %v3997 = vpop.f32.mrb[0].mxu0
    %v3998 = vadd.f32 %v3958, %v3997
    %v3999 = vpop.f32.mrb[0].mxu0
    %v4000 = vpop.f32.mrb[0].mxu0
    %v4001 = vpop.f32.mrb[0].mxu0
    %4002 = vdwg.mxu0
    %4003 = vmatprep.subr.bf16.mxu0 0
    %4004 = vmatpush1.bf16.msra.mxu0 %v3395
    %4005 = vmatprep.subr.bf16.mxu0 0
    %4006 = vmatpush1.bf16.msra.mxu0 %v3396
    %4007 = vmatprep.subr.bf16.mxu0 0
    %4008 = vmatpush1.bf16.msra.mxu0 %v3397
    %4009 = vmatprep.subr.bf16.mxu0 0
    %4010 = vmatpush1.bf16.msra.mxu0 %v3398
    %4011 = vmatprep.subr.bf16.mxu0 0
    %4012 = vmatpush1.bf16.msra.mxu0 %v3399
    %4013 = vmatprep.subr.bf16.mxu0 0
    %4014 = vmatpush1.bf16.msra.mxu0 %v3400
    %4015 = vmatprep.subr.bf16.mxu0 0
    %4016 = vmatpush1.bf16.msra.mxu0 %v3401
    %4017 = vmatprep.subr.bf16.mxu0 0
    %4018 = vmatpush1.bf16.msra.mxu0 %v3402
    %4019 = vmatprep.subr.bf16.mxu0 0
    %4020 = vmatpush1.bf16.msra.mxu0 %v3403
    %4021 = vmatprep.subr.bf16.mxu0 0
    %4022 = vmatpush1.bf16.msra.mxu0 %v3404
    %4023 = vmatprep.subr.bf16.mxu0 0
    %4024 = vmatpush1.bf16.msra.mxu0 %v3405
    %4025 = vmatprep.subr.bf16.mxu0 0
    %4026 = vmatpush1.bf16.msra.mxu0 %v3406
    %4027 = vmatprep.subr.bf16.mxu0 0
    %4028 = vmatpush1.bf16.msra.mxu0 %v3407
    %4029 = vmatprep.subr.bf16.mxu0 0
    %4030 = vmatpush1.bf16.msra.mxu0 %v3408
    %4031 = vmatprep.subr.bf16.mxu0 0
    %4032 = vmatpush1.bf16.msra.mxu0 %v3409
    %4033 = vmatprep.subr.bf16.mxu0 0
    %4034 = vmatpush1.bf16.msra.mxu0 %v3410
    %4035 = vmatprep.mubr.bf16.mxu0 %v1765
    %4036 = vmatmul.mubr.bf16.gmra.mrb[0].mxu0 %v1764
    %v4037 = vpop.f32.mrb[0].mxu0
    %v4038 = vadd.f32 %v3998, %v4037
    %v4039 = vpop.f32.mrb[0].mxu0
    %v4040 = vpop.f32.mrb[0].mxu0
    %v4041 = vpop.f32.mrb[0].mxu0
    %4042 = vdwg.mxu0
    %4043 = vmatprep.subr.bf16.mxu0 0
    %4044 = vmatpush1.bf16.msra.mxu0 %v3411
    %4045 = vmatprep.subr.bf16.mxu0 0
    %4046 = vmatpush1.bf16.msra.mxu0 %v3412
    %4047 = vmatprep.subr.bf16.mxu0 0
    %4048 = vmatpush1.bf16.msra.mxu0 %v3413
    %4049 = vmatprep.subr.bf16.mxu0 0
    %4050 = vmatpush1.bf16.msra.mxu0 %v3414
    %4051 = vmatprep.subr.bf16.mxu0 0
    %4052 = vmatpush1.bf16.msra.mxu0 %v3415
    %4053 = vmatprep.subr.bf16.mxu0 0
    %4054 = vmatpush1.bf16.msra.mxu0 %v3416
    %4055 = vmatprep.subr.bf16.mxu0 0
    %4056 = vmatpush1.bf16.msra.mxu0 %v3417
    %4057 = vmatprep.subr.bf16.mxu0 0
    %4058 = vmatpush1.bf16.msra.mxu0 %v3418
    %4059 = vmatprep.subr.bf16.mxu0 0
    %4060 = vmatpush1.bf16.msra.mxu0 %v3419
    %4061 = vmatprep.subr.bf16.mxu0 0
    %4062 = vmatpush1.bf16.msra.mxu0 %v3420
    %4063 = vmatprep.subr.bf16.mxu0 0
    %4064 = vmatpush1.bf16.msra.mxu0 %v3421
    %4065 = vmatprep.subr.bf16.mxu0 0
    %4066 = vmatpush1.bf16.msra.mxu0 %v3422
    %4067 = vmatprep.subr.bf16.mxu0 0
    %4068 = vmatpush1.bf16.msra.mxu0 %v3423
    %4069 = vmatprep.subr.bf16.mxu0 0
    %4070 = vmatpush1.bf16.msra.mxu0 %v3424
    %4071 = vmatprep.subr.bf16.mxu0 0
    %4072 = vmatpush1.bf16.msra.mxu0 %v3425
    %4073 = vmatprep.subr.bf16.mxu0 0
    %4074 = vmatpush1.bf16.msra.mxu0 %v3426
    %4075 = vmatprep.mubr.bf16.mxu0 %v1767
    %4076 = vmatmul.mubr.bf16.gmra.mrb[0].mxu0 %v1766
    %v4077 = vpop.f32.mrb[0].mxu0
    %v4078 = vadd.f32 %v4038, %v4077
    %v4079 = vpop.f32.mrb[0].mxu0
    %v4080 = vpop.f32.mrb[0].mxu0
    %v4081 = vpop.f32.mrb[0].mxu0
    %4082 = vdwg.mxu0
    %4083 = vmatprep.subr.bf16.mxu0 0
    %4084 = vmatpush1.bf16.msra.mxu0 %v3427
    %4085 = vmatprep.subr.bf16.mxu0 0
    %4086 = vmatpush1.bf16.msra.mxu0 %v3428
    %4087 = vmatprep.subr.bf16.mxu0 0
    %4088 = vmatpush1.bf16.msra.mxu0 %v3429
    %4089 = vmatprep.subr.bf16.mxu0 0
    %4090 = vmatpush1.bf16.msra.mxu0 %v3430
    %4091 = vmatprep.subr.bf16.mxu0 0
    %4092 = vmatpush1.bf16.msra.mxu0 %v3431
    %4093 = vmatprep.subr.bf16.mxu0 0
    %4094 = vmatpush1.bf16.msra.mxu0 %v3432
    %4095 = vmatprep.subr.bf16.mxu0 0
    %4096 = vmatpush1.bf16.msra.mxu0 %v3433
    %4097 = vmatprep.subr.bf16.mxu0 0
    %4098 = vmatpush1.bf16.msra.mxu0 %v3434
    %4099 = vmatprep.subr.bf16.mxu0 0
    %4100 = vmatpush1.bf16.msra.mxu0 %v3435
    %4101 = vmatprep.subr.bf16.mxu0 0
    %4102 = vmatpush1.bf16.msra.mxu0 %v3436
    %4103 = vmatprep.subr.bf16.mxu0 0
    %4104 = vmatpush1.bf16.msra.mxu0 %v3437
    %4105 = vmatprep.subr.bf16.mxu0 0
    %4106 = vmatpush1.bf16.msra.mxu0 %v3438
    %4107 = vmatprep.subr.bf16.mxu0 0
    %4108 = vmatpush1.bf16.msra.mxu0 %v3439
    %4109 = vmatprep.subr.bf16.mxu0 0
    %4110 = vmatpush1.bf16.msra.mxu0 %v3440
    %4111 = vmatprep.subr.bf16.mxu0 0
    %4112 = vmatpush1.bf16.msra.mxu0 %v3441
    %4113 = vmatprep.subr.bf16.mxu0 0
    %4114 = vmatpush1.bf16.msra.mxu0 %v3442
    %4115 = vmatprep.mubr.bf16.mxu0 %v1769
    %4116 = vmatmul.mubr.bf16.gmra.mrb[0].mxu0 %v1768
    %v4117 = vpop.f32.mrb[0].mxu0
    %v4118 = vadd.f32 %v4078, %v4117
    %v4119 = vpop.f32.mrb[0].mxu0
    %v4120 = vpop.f32.mrb[0].mxu0
    %v4121 = vpop.f32.mrb[0].mxu0
    %4122 = vdwg.mxu0
    %4123 = vmatprep.subr.bf16.mxu0 0
    %4124 = vmatpush1.bf16.msra.mxu0 %v3443
    %4125 = vmatprep.subr.bf16.mxu0 0
    %4126 = vmatpush1.bf16.msra.mxu0 %v3444
    %4127 = vmatprep.subr.bf16.mxu0 0
    %4128 = vmatpush1.bf16.msra.mxu0 %v3445
    %4129 = vmatprep.subr.bf16.mxu0 0
    %4130 = vmatpush1.bf16.msra.mxu0 %v3446
    %4131 = vmatprep.subr.bf16.mxu0 0
    %4132 = vmatpush1.bf16.msra.mxu0 %v3447
    %4133 = vmatprep.subr.bf16.mxu0 0
    %4134 = vmatpush1.bf16.msra.mxu0 %v3448
    %4135 = vmatprep.subr.bf16.mxu0 0
    %4136 = vmatpush1.bf16.msra.mxu0 %v3449
    %4137 = vmatprep.subr.bf16.mxu0 0
    %4138 = vmatpush1.bf16.msra.mxu0 %v3450
    %4139 = vmatprep.subr.bf16.mxu0 0
    %4140 = vmatpush1.bf16.msra.mxu0 %v3451
    %4141 = vmatprep.subr.bf16.mxu0 0
    %4142 = vmatpush1.bf16.msra.mxu0 %v3452
    %4143 = vmatprep.subr.bf16.mxu0 0
    %4144 = vmatpush1.bf16.msra.mxu0 %v3453
    %4145 = vmatprep.subr.bf16.mxu0 0
    %4146 = vmatpush1.bf16.msra.mxu0 %v3454
    %4147 = vmatprep.subr.bf16.mxu0 0
    %4148 = vmatpush1.bf16.msra.mxu0 %v3455
    %4149 = vmatprep.subr.bf16.mxu0 0
    %4150 = vmatpush1.bf16.msra.mxu0 %v3456
    %4151 = vmatprep.subr.bf16.mxu0 0
    %4152 = vmatpush1.bf16.msra.mxu0 %v3457
    %4153 = vmatprep.subr.bf16.mxu0 0
    %4154 = vmatpush1.bf16.msra.mxu0 %v3458
    %4155 = vmatprep.mubr.bf16.mxu0 %v1771
    %4156 = vmatmul.mubr.bf16.gmra.mrb[0].mxu0 %v1770
    %v4157 = vpop.f32.mrb[0].mxu0
    %v4158 = vadd.f32 %v4118, %v4157
    %v4159 = vpop.f32.mrb[0].mxu0
    %v4160 = vpop.f32.mrb[0].mxu0
    %v4161 = vpop.f32.mrb[0].mxu0
    %4162 = vdwg.mxu0
    %4163 = vmatprep.subr.bf16.mxu0 0
    %4164 = vmatpush1.bf16.msra.mxu0 %v3459
    %4165 = vmatprep.subr.bf16.mxu0 0
    %4166 = vmatpush1.bf16.msra.mxu0 %v3460
    %4167 = vmatprep.subr.bf16.mxu0 0
    %4168 = vmatpush1.bf16.msra.mxu0 %v3461
    %4169 = vmatprep.subr.bf16.mxu0 0
    %4170 = vmatpush1.bf16.msra.mxu0 %v3462
    %4171 = vmatprep.subr.bf16.mxu0 0
    %4172 = vmatpush1.bf16.msra.mxu0 %v3463
    %4173 = vmatprep.subr.bf16.mxu0 0
    %4174 = vmatpush1.bf16.msra.mxu0 %v3464
    %4175 = vmatprep.subr.bf16.mxu0 0
    %4176 = vmatpush1.bf16.msra.mxu0 %v3465
    %4177 = vmatprep.subr.bf16.mxu0 0
    %4178 = vmatpush1.bf16.msra.mxu0 %v3466
    %4179 = vmatprep.subr.bf16.mxu0 0
    %4180 = vmatpush1.bf16.msra.mxu0 %v3467
    %4181 = vmatprep.subr.bf16.mxu0 0
    %4182 = vmatpush1.bf16.msra.mxu0 %v3468
    %4183 = vmatprep.subr.bf16.mxu0 0
    %4184 = vmatpush1.bf16.msra.mxu0 %v3469
    %4185 = vmatprep.subr.bf16.mxu0 0
    %4186 = vmatpush1.bf16.msra.mxu0 %v3470
    %4187 = vmatprep.subr.bf16.mxu0 0
    %4188 = vmatpush1.bf16.msra.mxu0 %v3471
    %4189 = vmatprep.subr.bf16.mxu0 0
    %4190 = vmatpush1.bf16.msra.mxu0 %v3472
    %4191 = vmatprep.subr.bf16.mxu0 0
    %4192 = vmatpush1.bf16.msra.mxu0 %v3473
    %4193 = vmatprep.subr.bf16.mxu0 0
    %4194 = vmatpush1.bf16.msra.mxu0 %v3474
    %4195 = vmatprep.mubr.bf16.mxu0 %v1773
    %4196 = vmatmul.mubr.bf16.gmra.mrb[0].mxu0 %v1772
    %v4197 = vpop.f32.mrb[0].mxu0
    %v4198 = vadd.f32 %v4158, %v4197
    %v4199 = vpop.f32.mrb[0].mxu0
    %v4200 = vpop.f32.mrb[0].mxu0
    %v4201 = vpop.f32.mrb[0].mxu0
    %4202 = vdwg.mxu0
    %4203 = vmatprep.subr.bf16.mxu0 0
    %4204 = vmatpush1.bf16.msra.mxu0 %v3475
    %4205 = vmatprep.subr.bf16.mxu0 0
    %4206 = vmatpush1.bf16.msra.mxu0 %v3476
    %4207 = vmatprep.subr.bf16.mxu0 0
    %4208 = vmatpush1.bf16.msra.mxu0 %v3477
    %4209 = vmatprep.subr.bf16.mxu0 0
    %4210 = vmatpush1.bf16.msra.mxu0 %v3478
    %4211 = vmatprep.subr.bf16.mxu0 0
    %4212 = vmatpush1.bf16.msra.mxu0 %v3479
    %4213 = vmatprep.subr.bf16.mxu0 0
    %4214 = vmatpush1.bf16.msra.mxu0 %v3480
    %4215 = vmatprep.subr.bf16.mxu0 0
    %4216 = vmatpush1.bf16.msra.mxu0 %v3481
    %4217 = vmatprep.subr.bf16.mxu0 0
    %4218 = vmatpush1.bf16.msra.mxu0 %v3482
    %4219 = vmatprep.subr.bf16.mxu0 0
    %4220 = vmatpush1.bf16.msra.mxu0 %v3483
    %4221 = vmatprep.subr.bf16.mxu0 0
    %4222 = vmatpush1.bf16.msra.mxu0 %v3484
    %4223 = vmatprep.subr.bf16.mxu0 0
    %4224 = vmatpush1.bf16.msra.mxu0 %v3485
    %4225 = vmatprep.subr.bf16.mxu0 0
    %4226 = vmatpush1.bf16.msra.mxu0 %v3486
    %4227 = vmatprep.subr.bf16.mxu0 0
    %4228 = vmatpush1.bf16.msra.mxu0 %v3487
    %4229 = vmatprep.subr.bf16.mxu0 0
    %4230 = vmatpush1.bf16.msra.mxu0 %v3488
    %4231 = vmatprep.subr.bf16.mxu0 0
    %4232 = vmatpush1.bf16.msra.mxu0 %v3489
    %4233 = vmatprep.subr.bf16.mxu0 0
    %4234 = vmatpush1.bf16.msra.mxu0 %v3490
    %4235 = vmatprep.mubr.bf16.mxu0 %v1775
    %4236 = vmatmul.mubr.bf16.gmra.mrb[0].mxu0 %v1774
    %v4237 = vpop.f32.mrb[0].mxu0
    %v4238 = vadd.f32 %v4198, %v4237
    %v4239 = vpop.f32.mrb[0].mxu0
    %v4240 = vpop.f32.mrb[0].mxu0
    %v4241 = vpop.f32.mrb[0].mxu0
    %4242 = vdwg.mxu0
    %4243 = vmatprep.subr.bf16.mxu0 0
    %4244 = vmatpush1.bf16.msra.mxu0 %v3491
    %4245 = vmatprep.subr.bf16.mxu0 0
    %4246 = vmatpush1.bf16.msra.mxu0 %v3492
    %4247 = vmatprep.subr.bf16.mxu0 0
    %4248 = vmatpush1.bf16.msra.mxu0 %v3493
    %4249 = vmatprep.subr.bf16.mxu0 0
    %4250 = vmatpush1.bf16.msra.mxu0 %v3494
    %4251 = vmatprep.subr.bf16.mxu0 0
    %4252 = vmatpush1.bf16.msra.mxu0 %v3495
    %4253 = vmatprep.subr.bf16.mxu0 0
    %4254 = vmatpush1.bf16.msra.mxu0 %v3496
    %4255 = vmatprep.subr.bf16.mxu0 0
    %4256 = vmatpush1.bf16.msra.mxu0 %v3497
    %4257 = vmatprep.subr.bf16.mxu0 0
    %4258 = vmatpush1.bf16.msra.mxu0 %v3498
    %4259 = vmatprep.subr.bf16.mxu0 0
    %4260 = vmatpush1.bf16.msra.mxu0 %v3499
    %4261 = vmatprep.subr.bf16.mxu0 0
    %4262 = vmatpush1.bf16.msra.mxu0 %v3500
    %4263 = vmatprep.subr.bf16.mxu0 0
    %4264 = vmatpush1.bf16.msra.mxu0 %v3501
    %4265 = vmatprep.subr.bf16.mxu0 0
    %4266 = vmatpush1.bf16.msra.mxu0 %v3502
    %4267 = vmatprep.subr.bf16.mxu0 0
    %4268 = vmatpush1.bf16.msra.mxu0 %v3503
    %4269 = vmatprep.subr.bf16.mxu0 0
    %4270 = vmatpush1.bf16.msra.mxu0 %v3504
    %4271 = vmatprep.subr.bf16.mxu0 0
    %4272 = vmatpush1.bf16.msra.mxu0 %v3505
    %4273 = vmatprep.subr.bf16.mxu0 0
    %4274 = vmatpush1.bf16.msra.mxu0 %v3506
    %4275 = vmatprep.mubr.bf16.mxu0 %v1777
    %4276 = vmatmul.mubr.bf16.gmra.mrb[0].mxu0 %v1776
    %v4277 = vpop.f32.mrb[0].mxu0
    %v4278 = vadd.f32 %v4238, %v4277
    %v4279 = vpop.f32.mrb[0].mxu0
    %v4280 = vpop.f32.mrb[0].mxu0
    %v4281 = vpop.f32.mrb[0].mxu0
    %4282 = vdwg.mxu0
    %4283 = vmatprep.subr.bf16.mxu0 0
    %4284 = vmatpush1.bf16.msra.mxu0 %v3507
    %4285 = vmatprep.subr.bf16.mxu0 0
    %4286 = vmatpush1.bf16.msra.mxu0 %v3508
    %4287 = vmatprep.subr.bf16.mxu0 0
    %4288 = vmatpush1.bf16.msra.mxu0 %v3509
    %4289 = vmatprep.subr.bf16.mxu0 0
    %4290 = vmatpush1.bf16.msra.mxu0 %v3510
    %4291 = vmatprep.subr.bf16.mxu0 0
    %4292 = vmatpush1.bf16.msra.mxu0 %v3511
    %4293 = vmatprep.subr.bf16.mxu0 0
    %4294 = vmatpush1.bf16.msra.mxu0 %v3512
    %4295 = vmatprep.subr.bf16.mxu0 0
    %4296 = vmatpush1.bf16.msra.mxu0 %v3513
    %4297 = vmatprep.subr.bf16.mxu0 0
    %4298 = vmatpush1.bf16.msra.mxu0 %v3514
    %4299 = vmatprep.subr.bf16.mxu0 0
    %4300 = vmatpush1.bf16.msra.mxu0 %v3515
    %4301 = vmatprep.subr.bf16.mxu0 0
    %4302 = vmatpush1.bf16.msra.mxu0 %v3516
    %4303 = vmatprep.subr.bf16.mxu0 0
    %4304 = vmatpush1.bf16.msra.mxu0 %v3517
    %4305 = vmatprep.subr.bf16.mxu0 0
    %4306 = vmatpush1.bf16.msra.mxu0 %v3518
    %4307 = vmatprep.subr.bf16.mxu0 0
    %4308 = vmatpush1.bf16.msra.mxu0 %v3519
    %4309 = vmatprep.subr.bf16.mxu0 0
    %4310 = vmatpush1.bf16.msra.mxu0 %v3520
    %4311 = vmatprep.subr.bf16.mxu0 0
    %4312 = vmatpush1.bf16.msra.mxu0 %v3521
    %4313 = vmatprep.subr.bf16.mxu0 0
    %4314 = vmatpush1.bf16.msra.mxu0 %v3522
    %4315 = vmatprep.mubr.bf16.mxu0 %v1779
    %4316 = vmatmul.mubr.bf16.gmra.mrb[0].mxu0 %v1778
    %v4317 = vpop.f32.mrb[0].mxu0
    %v4318 = vadd.f32 %v4278, %v4317
    %v4319 = vpop.f32.mrb[0].mxu0
    %v4320 = vpop.f32.mrb[0].mxu0
    %v4321 = vpop.f32.mrb[0].mxu0
    %4322 = vdwg.mxu0
    %4323 = vmatprep.subr.bf16.mxu0 0
    %4324 = vmatpush1.bf16.msra.mxu0 %v3523
    %4325 = vmatprep.subr.bf16.mxu0 0
    %4326 = vmatpush1.bf16.msra.mxu0 %v3524
    %4327 = vmatprep.subr.bf16.mxu0 0
    %4328 = vmatpush1.bf16.msra.mxu0 %v3525
    %4329 = vmatprep.subr.bf16.mxu0 0
    %4330 = vmatpush1.bf16.msra.mxu0 %v3526
    %4331 = vmatprep.subr.bf16.mxu0 0
    %4332 = vmatpush1.bf16.msra.mxu0 %v3527
    %4333 = vmatprep.subr.bf16.mxu0 0
    %4334 = vmatpush1.bf16.msra.mxu0 %v3528
    %4335 = vmatprep.subr.bf16.mxu0 0
    %4336 = vmatpush1.bf16.msra.mxu0 %v3529
    %4337 = vmatprep.subr.bf16.mxu0 0
    %4338 = vmatpush1.bf16.msra.mxu0 %v3530
    %4339 = vmatprep.subr.bf16.mxu0 0
    %4340 = vmatpush1.bf16.msra.mxu0 %v3531
    %4341 = vmatprep.subr.bf16.mxu0 0
    %4342 = vmatpush1.bf16.msra.mxu0 %v3532
    %4343 = vmatprep.subr.bf16.mxu0 0
    %4344 = vmatpush1.bf16.msra.mxu0 %v3533
    %4345 = vmatprep.subr.bf16.mxu0 0
    %4346 = vmatpush1.bf16.msra.mxu0 %v3534
    %4347 = vmatprep.subr.bf16.mxu0 0
    %4348 = vmatpush1.bf16.msra.mxu0 %v3535
    %4349 = vmatprep.subr.bf16.mxu0 0
    %4350 = vmatpush1.bf16.msra.mxu0 %v3536
    %4351 = vmatprep.subr.bf16.mxu0 0
    %4352 = vmatpush1.bf16.msra.mxu0 %v3537
    %4353 = vmatprep.subr.bf16.mxu0 0
    %4354 = vmatpush1.bf16.msra.mxu0 %v3538
    %4355 = vmatprep.mubr.bf16.mxu0 %v1781
    %4356 = vmatmul.mubr.bf16.gmra.mrb[0].mxu0 %v1780
    %v4357 = vpop.f32.mrb[0].mxu0
    %v4358 = vadd.f32 %v4318, %v4357
    %v4359 = vpop.f32.mrb[0].mxu0
    %v4360 = vpop.f32.mrb[0].mxu0
    %v4361 = vpop.f32.mrb[0].mxu0
    %4362 = vdwg.mxu0
    %4363 = vmatprep.subr.bf16.mxu0 0
    %4364 = vmatpush1.bf16.msra.mxu0 %v3539
    %4365 = vmatprep.subr.bf16.mxu0 0
    %4366 = vmatpush1.bf16.msra.mxu0 %v3540
    %4367 = vmatprep.subr.bf16.mxu0 0
    %4368 = vmatpush1.bf16.msra.mxu0 %v3541
    %4369 = vmatprep.subr.bf16.mxu0 0
    %4370 = vmatpush1.bf16.msra.mxu0 %v3542
    %4371 = vmatprep.subr.bf16.mxu0 0
    %4372 = vmatpush1.bf16.msra.mxu0 %v3543
    %4373 = vmatprep.subr.bf16.mxu0 0
    %4374 = vmatpush1.bf16.msra.mxu0 %v3544
    %4375 = vmatprep.subr.bf16.mxu0 0
    %4376 = vmatpush1.bf16.msra.mxu0 %v3545
    %4377 = vmatprep.subr.bf16.mxu0 0
    %4378 = vmatpush1.bf16.msra.mxu0 %v3546
    %4379 = vmatprep.subr.bf16.mxu0 0
    %4380 = vmatpush1.bf16.msra.mxu0 %v3547
    %4381 = vmatprep.subr.bf16.mxu0 0
    %4382 = vmatpush1.bf16.msra.mxu0 %v3548
    %4383 = vmatprep.subr.bf16.mxu0 0
    %4384 = vmatpush1.bf16.msra.mxu0 %v3549
    %4385 = vmatprep.subr.bf16.mxu0 0
    %4386 = vmatpush1.bf16.msra.mxu0 %v3550
    %4387 = vmatprep.subr.bf16.mxu0 0
    %4388 = vmatpush1.bf16.msra.mxu0 %v3551
    %4389 = vmatprep.subr.bf16.mxu0 0
    %4390 = vmatpush1.bf16.msra.mxu0 %v3552
    %4391 = vmatprep.subr.bf16.mxu0 0
    %4392 = vmatpush1.bf16.msra.mxu0 %v3553
    %4393 = vmatprep.subr.bf16.mxu0 0
    %4394 = vmatpush1.bf16.msra.mxu0 %v3554
    %4395 = vmatprep.mubr.bf16.mxu0 %v1783
    %4396 = vmatmul.mubr.bf16.gmra.mrb[0].mxu0 %v1782
    %v4397 = vpop.f32.mrb[0].mxu0
    %v4398 = vadd.f32 %v4358, %v4397
    %v4399 = vpop.f32.mrb[0].mxu0
    %v4400 = vpop.f32.mrb[0].mxu0
    %v4401 = vpop.f32.mrb[0].mxu0
    %4402 = vdwg.mxu0
    %4403 = vmatprep.subr.bf16.mxu0 0
    %4404 = vmatpush1.bf16.msra.mxu0 %v3555
    %4405 = vmatprep.subr.bf16.mxu0 0
    %4406 = vmatpush1.bf16.msra.mxu0 %v3556
    %4407 = vmatprep.subr.bf16.mxu0 0
    %4408 = vmatpush1.bf16.msra.mxu0 %v3557
    %4409 = vmatprep.subr.bf16.mxu0 0
    %4410 = vmatpush1.bf16.msra.mxu0 %v3558
    %4411 = vmatprep.subr.bf16.mxu0 0
    %4412 = vmatpush1.bf16.msra.mxu0 %v3559
    %4413 = vmatprep.subr.bf16.mxu0 0
    %4414 = vmatpush1.bf16.msra.mxu0 %v3560
    %4415 = vmatprep.subr.bf16.mxu0 0
    %4416 = vmatpush1.bf16.msra.mxu0 %v3561
    %4417 = vmatprep.subr.bf16.mxu0 0
    %4418 = vmatpush1.bf16.msra.mxu0 %v3562
    %4419 = vmatprep.subr.bf16.mxu0 0
    %4420 = vmatpush1.bf16.msra.mxu0 %v3563
    %4421 = vmatprep.subr.bf16.mxu0 0
    %4422 = vmatpush1.bf16.msra.mxu0 %v3564
    %4423 = vmatprep.subr.bf16.mxu0 0
    %4424 = vmatpush1.bf16.msra.mxu0 %v3565
    %4425 = vmatprep.subr.bf16.mxu0 0
    %4426 = vmatpush1.bf16.msra.mxu0 %v3566
    %4427 = vmatprep.subr.bf16.mxu0 0
    %4428 = vmatpush1.bf16.msra.mxu0 %v3567
    %4429 = vmatprep.subr.bf16.mxu0 0
    %4430 = vmatpush1.bf16.msra.mxu0 %v3568
    %4431 = vmatprep.subr.bf16.mxu0 0
    %4432 = vmatpush1.bf16.msra.mxu0 %v3569
    %4433 = vmatprep.subr.bf16.mxu0 0
    %4434 = vmatpush1.bf16.msra.mxu0 %v3570
    %4435 = vmatprep.mubr.bf16.mxu0 %v1785
    %4436 = vmatmul.mubr.bf16.gmra.mrb[0].mxu0 %v1784
    %v4437 = vpop.f32.mrb[0].mxu0
    %v4438 = vadd.f32 %v4398, %v4437
    %v4439 = vpop.f32.mrb[0].mxu0
    %v4440 = vpop.f32.mrb[0].mxu0
    %v4441 = vpop.f32.mrb[0].mxu0
    %4442 = vdwg.mxu0
    %4443 = vmatprep.subr.bf16.mxu0 0
    %4444 = vmatpush1.bf16.msra.mxu0 %v3571
    %4445 = vmatprep.subr.bf16.mxu0 0
    %4446 = vmatpush1.bf16.msra.mxu0 %v3572
    %4447 = vmatprep.subr.bf16.mxu0 0
    %4448 = vmatpush1.bf16.msra.mxu0 %v3573
    %4449 = vmatprep.subr.bf16.mxu0 0
    %4450 = vmatpush1.bf16.msra.mxu0 %v3574
    %4451 = vmatprep.subr.bf16.mxu0 0
    %4452 = vmatpush1.bf16.msra.mxu0 %v3575
    %4453 = vmatprep.subr.bf16.mxu0 0
    %4454 = vmatpush1.bf16.msra.mxu0 %v3576
    %4455 = vmatprep.subr.bf16.mxu0 0
    %4456 = vmatpush1.bf16.msra.mxu0 %v3577
    %4457 = vmatprep.subr.bf16.mxu0 0
    %4458 = vmatpush1.bf16.msra.mxu0 %v3578
    %4459 = vmatprep.subr.bf16.mxu0 0
    %4460 = vmatpush1.bf16.msra.mxu0 %v3579
    %4461 = vmatprep.subr.bf16.mxu0 0
    %4462 = vmatpush1.bf16.msra.mxu0 %v3580
    %4463 = vmatprep.subr.bf16.mxu0 0
    %4464 = vmatpush1.bf16.msra.mxu0 %v3581
    %4465 = vmatprep.subr.bf16.mxu0 0
    %4466 = vmatpush1.bf16.msra.mxu0 %v3582
    %4467 = vmatprep.subr.bf16.mxu0 0
    %4468 = vmatpush1.bf16.msra.mxu0 %v3583
    %4469 = vmatprep.subr.bf16.mxu0 0
    %4470 = vmatpush1.bf16.msra.mxu0 %v3584
    %4471 = vmatprep.subr.bf16.mxu0 0
    %4472 = vmatpush1.bf16.msra.mxu0 %v3585
    %4473 = vmatprep.subr.bf16.mxu0 0
    %4474 = vmatpush1.bf16.msra.mxu0 %v3586
    %4475 = vmatprep.mubr.bf16.mxu0 %v1787
    %4476 = vmatmul.mubr.bf16.gmra.mrb[0].mxu0 %v1786
    %v4477 = vpop.f32.mrb[0].mxu0
    %v4478 = vadd.f32 %v4438, %v4477
    %v4479 = vpop.f32.mrb[0].mxu0
    %v4480 = vpop.f32.mrb[0].mxu0
    %v4481 = vpop.f32.mrb[0].mxu0
    %4482 = vdwg.mxu0
    %v4483 = vmax.f32 %v4478, 0.0
    %v4484 = vpack.c.bf16 %v4483, %v4483
    %v4485 = vld [vmem:[%s7] sm:$0xf]
    %v4486 = vld [vmem:[%s7 + $0x4] sm:$0x3]
    %v4489 = vunpack.c.l.b16 %v4485
    %v4490 = vunpack.c.l.b16 %v4486
    %v4491 = vpack.c.b16 %v4490, %v4489
    %vm4492 = vcmask 97280
    %v4494 = vsel %vm4492, %v4484, 0
    %vm4496 = vcmask 1045504
    %v4498 = vsel %vm4496, %v4491, 0
    %4500 = vmatprep.subr.bf16.mxu0 0
    %4501 = vmatpush1.bf16.msra.mxu0 %v4498
    %4502 = vmatprep.subr.bf16.mxu0 0
    %4503 = vmatpush1.bf16.msra.mxu0 0
    %4504 = vmatprep.subr.bf16.mxu0 0
    %4505 = vmatpush1.bf16.msra.mxu0 0
    %4506 = vmatprep.subr.bf16.mxu0 0
    %4507 = vmatpush1.bf16.msra.mxu0 0
    %4508 = vmatprep.subr.bf16.mxu0 0
    %4509 = vmatpush1.bf16.msra.mxu0 0
    %4510 = vmatprep.subr.bf16.mxu0 0
    %4511 = vmatpush1.bf16.msra.mxu0 0
    %4512 = vmatprep.subr.bf16.mxu0 0
    %4513 = vmatpush1.bf16.msra.mxu0 0
    %4514 = vmatprep.subr.bf16.mxu0 0
    %4515 = vmatpush1.bf16.msra.mxu0 0
    %4516 = vmatprep.subr.bf16.mxu0 0
    %4517 = vmatpush1.bf16.msra.mxu0 0
    %4518 = vmatprep.subr.bf16.mxu0 0
    %4519 = vmatpush1.bf16.msra.mxu0 0
    %4520 = vmatprep.subr.bf16.mxu0 0
    %4521 = vmatpush1.bf16.msra.mxu0 0
    %4522 = vmatprep.subr.bf16.mxu0 0
    %4523 = vmatpush1.bf16.msra.mxu0 0
    %4524 = vmatprep.subr.bf16.mxu0 0
    %4525 = vmatpush1.bf16.msra.mxu0 0
    %4526 = vmatprep.subr.bf16.mxu0 0
    %4527 = vmatpush1.bf16.msra.mxu0 0
    %4528 = vmatprep.subr.bf16.mxu0 0
    %4529 = vmatpush1.bf16.msra.mxu0 0
    %4530 = vmatprep.subr.bf16.mxu0 0
    %4531 = vmatpush1.bf16.msra.mxu0 0
    %4532 = vmatprep.mubr.bf16.mxu0 0
    %4533 = vmatmul.mubr.bf16.gmra.mrb[0].mxu0 %v4494
    %v4534 = vpop.f32.mrb[0].mxu0
    %v4535 = vadd.f32 0.0, %v4534
    %v4536 = vpop.f32.mrb[0].mxu0
    %v4537 = vpop.f32.mrb[0].mxu0
    %v4538 = vpop.f32.mrb[0].mxu0
    %4539 = vdwg.mxu0
    %v4540 = vadd.f32 %v1550, %v4535
    %4542 = vrot.lane.b32.xlu0 %v4540, 112
    %v4543 = vpop.permute.xlu0 %4542
    %vm4545 = vcmask 1024
    %4546 = vst.msk [vmem:[%s11] sm:$0x3] %vm4545, %v4543
    %vm4547 = vcmask 123904
    %v4548 = vsel %vm4547, %v4540, -inf
    %4549 = vmax.xlane.f32.xlu0 %v4548
    %v4550 = vpop.xlane.xlu0 %4549
    %v4551 = vsub.f32 %v4540, %v4550
    %v4552 = vmul.f32 %v4551, 1.442695
    %v4553 = vpow.pop %v4552
    %v4554 = vsel %vm4547, %v4553, 0.0
    %4555 = vadd.xlane.f32.xlu0 %v4554
    %v4556 = vpop.xlane.xlu0 %4555
    %v4557 = vrcp.pop %v4556
    %v4558 = vmul.f32 %v4553, %v4557
    %4559 = vst.msk [vmem:[#allocation9] sm:$0x3] %vm4547, %v4558
    // Predicated region
    $region342: #{tpu_custom_call.1} parent=1 // pred_check
      _
    $region343: #{tpu_custom_call.1} parent=1 // pred_check_branch
      %4561 = sbr.rel (0) target = $region345
    $region344: #{tpu_custom_call.1} parent=1 // pred_region
      %s4563 = ssub.s32 32, 32
      %4564 = vsyncadd [#allocation5], %s4563
      %s4566 = sshll.u32 [#allocation9], 4
      %s4567 = int_to_ptr.vmem [resolvable:$true] %s4566
      %4569 = dma.vmem_to_hbm [thread:$0]  %s4567, 32, %s10, [#allocation5]
    $region345: #{tpu_custom_call.1} parent=1 // pred_fallthru
      _
    // Predicated region
    $region346: #{tpu_custom_call.1} parent=1 // pred_check
      _
    $region347: #{tpu_custom_call.1} parent=1 // pred_check_branch
      %4571 = sbr.rel (0) target = $region349
    $region348: #{tpu_custom_call.1} parent=1 // pred_region
      _
    $region349: #{tpu_custom_call.1} parent=1 // pred_fallthru
      _
    // Predicated region
    $region350: #{tpu_custom_call.1} parent=1 // pred_check
      _
    $region351: #{tpu_custom_call.1} parent=1 // pred_check_branch
      %4573 = sbr.rel (0) target = $region353
    $region352: #{tpu_custom_call.1} parent=1 // pred_region
      %4574 = dma.done [#allocation5], 32
    $region353: #{tpu_custom_call.1} parent=1 // pred_fallthru
      _
    // Predicated region
    $region354: #{tpu_custom_call.1} parent=1 // pred_check
      _
    $region355: #{tpu_custom_call.1} parent=1 // pred_check_branch
      %4576 = sbr.rel (0) target = $region357
    $region356: #{tpu_custom_call.1} parent=1 // pred_region
      _
    $region357: #{tpu_custom_call.1} parent=1 // pred_fallthru
      _
    %4577 = vsyncpa [#allocation5], 1
    %4578 = vsyncpa [#allocation6], 1
    %4579 = vsyncpa [#allocation8], 1
  %4580 = vsyncmov [#allocation3]
  %s4581 = vpop.sfrf %4580
  %p4582 = scmp.eq.s32.totalorder %s4581, 0
  %p4583 = pneg %p4582
  %4585 = shalt.err (%p4583)
  %s4586 = scalar_lea.sflag [#allocation3], 1
  %4587 = vsyncmov %s4586
  %s4588 = vpop.sfrf %4587
  %p4589 = scmp.eq.s32.totalorder %s4588, 0
  %p4590 = pneg %p4589
  %4592 = shalt.err (%p4590)
  %s4593 = scalar_lea.sflag [#allocation3], 2
  %4594 = vsyncmov %s4593
  %s4595 = vpop.sfrf %4594
  %p4596 = scmp.eq.s32.totalorder %s4595, 0
  %p4597 = pneg %p4596
  %4599 = shalt.err (%p4597)
  %s4600 = scalar_lea.sflag [#allocation3], 3
  %4601 = vsyncmov %s4600
  %s4602 = vpop.sfrf %4601
  %p4603 = scmp.eq.s32.totalorder %s4602, 0
  %p4604 = pneg %p4603
  %4606 = shalt.err (%p4604)
  %s4607 = scalar_lea.sflag [#allocation3], 4
  %4608 = vsyncmov %s4607
  %s4609 = vpop.sfrf %4608
  %p4610 = scmp.eq.s32.totalorder %s4609, 0
  %p4611 = pneg %p4610
  %4613 = shalt.err (%p4611)
  %s4614 = scalar_lea.sflag [#allocation3], 5
  %4615 = vsyncmov %s4614
  %s4616 = vpop.sfrf %4615
  %p4617 = scmp.eq.s32.totalorder %s4616, 0
  %p4618 = pneg %p4617
  %4620 = shalt.err (%p4618)
  %s4621 = scalar_lea.sflag [#allocation3], 6
  %4622 = vsyncmov %s4621
  %s4623 = vpop.sfrf %4622
  %p4624 = scmp.eq.s32.totalorder %s4623, 0
  %p4625 = pneg %p4624
  %4627 = shalt.err (%p4625)
  %s4628 = scalar_lea.sflag [#allocation3], 7
  %4629 = vsyncmov %s4628
  %s4630 = vpop.sfrf %4629
  %p4631 = scmp.eq.s32.totalorder %s4630, 0
  %p4632 = pneg %p4631
  %4634 = shalt.err (%p4632)

</llo_original>
